<compile_context>
chip_gen: v7x
topology: tpu7x:2x2x1
jax: 0.10.0
libtpu: 0.0.40
codegen_flags: <defaults>
</compile_context>

<pallas_src>
import math

import jax
import jax.numpy as jnp
from jax import lax
from jax.experimental import pallas as pl
from jax.experimental.pallas import tpu as pltpu  # noqa: F401  (TPU backend)

# ----------------------------- configuration ------------------------------
SEQ = 8          # sequence length
BATCH = 2        # batch size
D_MODEL = 32     # words_dim
NHEAD = 4
HEAD_DIM = D_MODEL // NHEAD
DIM_FF = 64      # dim_feedforward
NUM_LAYERS = 2   # num_encoder_layers
REL_LABEL = 8    # target_size
WORDS_NUM = 100
LN_EPS = 1e-5
BN_EPS = 1e-5
LANE = 128

# --------------------- packed parameter slab layout ------------------------
# One f32 slab of shape (TOTAL_ROWS, 128); everything lane-padded to 128.
QKVO_OFF = 0                         # (D_MODEL, 128) = [WqT | WkT | WvT | WoT]
FF1_OFF = QKVO_OFF + D_MODEL         # (D_MODEL, 128), first DIM_FF lanes used
FF2_OFF = FF1_OFF + D_MODEL          # (DIM_FF, 128), first D_MODEL lanes used
VEC_OFF = FF2_OFF + DIM_FF           # (8, 128) per-layer bias / LN rows
LAYER_ROWS = VEC_OFF + 8             # 136 rows per encoder layer
HEAD_OFF = NUM_LAYERS * LAYER_ROWS   # 272
HEAD_W1_OFF = HEAD_OFF               # (D_MODEL, 128), hidden2tag W1^T
HEAD_W2_OFF = HEAD_W1_OFF + D_MODEL  # (D_MODEL, 128), hidden2tag W2^T
HEAD_VEC_OFF = HEAD_W2_OFF + D_MODEL  # (8, 128) head vector rows
TOTAL_ROWS = HEAD_VEC_OFF + 8        # 344


# ------------------------------- kernel -----------------------------------
def _layer_norm(h, g, b):
    # fused reductions: sum(x) and sum(x^2) are independent -> one reduce depth
    inv_n = 1.0 / D_MODEL
    s1 = jnp.sum(h, axis=-1, keepdims=True)
    s2 = jnp.sum(h * h, axis=-1, keepdims=True)
    mu = s1 * inv_n
    var = s2 * inv_n - mu * mu
    return (h - mu) * lax.rsqrt(var + LN_EPS) * g + b


def transformer_kernel(x_ref, p_ref, out_ref):
    x = x_ref[...]                                     # (BATCH*SEQ, D) f32
    scale = 1.0 / math.sqrt(HEAD_DIM)

    # ---- TransformerEncoder: NUM_LAYERS x TransformerEncoderLayer --------
    for l in range(NUM_LAYERS):
        base = l * LAYER_ROWS
        # static ref slices (lane offset 0) -> load exactly what's needed
        W = p_ref[base + QKVO_OFF:base + QKVO_OFF + D_MODEL, :]        # (32,128)
        w1 = p_ref[base + FF1_OFF:base + FF1_OFF + D_MODEL, :DIM_FF]   # (32,64)
        w2 = p_ref[base + FF2_OFF:base + FF2_OFF + DIM_FF, :D_MODEL]   # (64,32)
        vb = base + VEC_OFF
        b_qkv = p_ref[vb + 0:vb + 1, :3 * D_MODEL]
        b_o = p_ref[vb + 1:vb + 2, :D_MODEL]
        ln1g = p_ref[vb + 2:vb + 3, :D_MODEL]
        ln1b = p_ref[vb + 3:vb + 4, :D_MODEL]
        b_1 = p_ref[vb + 4:vb + 5, :DIM_FF]
        b_2 = p_ref[vb + 5:vb + 6, :D_MODEL]
        ln2g = p_ref[vb + 6:vb + 7, :D_MODEL]
        ln2b = p_ref[vb + 7:vb + 8, :D_MODEL]

        # fused QKV projection on the stacked (BATCH*SEQ, 32) rows
        qkv = jnp.dot(x, W[:, :3 * D_MODEL],
                      preferred_element_type=jnp.float32) + b_qkv      # (16,96)

        # per (batch, head) attention on row slices; outputs assembled
        # lane/sublane-dense in registers (no VMEM scratch)
        batch_outs = []
        for b in range(BATCH):
            r0 = b * SEQ
            head_outs = []
            for h in range(NHEAD):
                c = h * HEAD_DIM
                qh = qkv[r0:r0 + SEQ, c:c + HEAD_DIM]                  # (S,hd)
                kh = qkv[r0:r0 + SEQ, D_MODEL + c:D_MODEL + c + HEAD_DIM]
                vh = qkv[r0:r0 + SEQ, 2 * D_MODEL + c:2 * D_MODEL + c + HEAD_DIM]
                s = lax.dot_general(qh, kh, (((1,), (1,)), ((), ())),
                                    preferred_element_type=jnp.float32) * scale
                s = s - jnp.max(s, axis=-1, keepdims=True)
                e = jnp.exp(s)
                p = e * pl.reciprocal(jnp.sum(e, axis=-1, keepdims=True),
                                      approx=True)
                head_outs.append(
                    jnp.dot(p, vh, preferred_element_type=jnp.float32))
            batch_outs.append(jnp.concatenate(head_outs, axis=-1))     # (S,D)
        ao = jnp.concatenate(batch_outs, axis=0)                       # (16,D)

        # attention out-proj + residual + LayerNorm (post-norm layer)
        ao = jnp.dot(ao, W[:, 3 * D_MODEL:],
                     preferred_element_type=jnp.float32) + b_o
        x = _layer_norm(x + ao, ln1g, ln1b)

        # feed-forward (relu; dropout = identity)
        ff = jnp.maximum(
            jnp.dot(x, w1, preferred_element_type=jnp.float32) + b_1, 0.0)
        ff = jnp.dot(ff, w2, preferred_element_type=jnp.float32) + b_2
        x = _layer_norm(x + ff, ln2g, ln2b)

    # ---- final encoder LayerNorm + pooling + hidden2tag -------------------
    hw1t = p_ref[HEAD_W1_OFF:HEAD_W1_OFF + D_MODEL, :D_MODEL]          # (32,32)
    hw2t = p_ref[HEAD_W2_OFF:HEAD_W2_OFF + D_MODEL, :REL_LABEL]        # (32,8)
    lnfg = p_ref[HEAD_VEC_OFF + 0:HEAD_VEC_OFF + 1, :D_MODEL]
    lnfb = p_ref[HEAD_VEC_OFF + 1:HEAD_VEC_OFF + 2, :D_MODEL]
    hb1 = p_ref[HEAD_VEC_OFF + 2:HEAD_VEC_OFF + 3, :D_MODEL]
    bn_s = p_ref[HEAD_VEC_OFF + 3:HEAD_VEC_OFF + 4, :D_MODEL]          # folded BN
    bn_t = p_ref[HEAD_VEC_OFF + 4:HEAD_VEC_OFF + 5, :D_MODEL]
    hb2 = p_ref[HEAD_VEC_OFF + 5:HEAD_VEC_OFF + 6, :REL_LABEL]

    x = _layer_norm(x, lnfg, lnfb)

    # with_tag == 'none' -> mean pooling over the sequence, per batch element
    pooled = jnp.concatenate(
        [jnp.mean(x[b * SEQ:(b + 1) * SEQ, :], axis=0, keepdims=True)
         for b in range(BATCH)], axis=0)                               # (B,D)

    # hidden2tag: Linear -> BatchNorm1d(eval, folded) -> ReLU -> Linear
    h1 = jnp.dot(pooled, hw1t, preferred_element_type=jnp.float32) + hb1
    h1 = jnp.maximum(h1 * bn_s + bn_t, 0.0)
    logits = jnp.dot(h1, hw2t, preferred_element_type=jnp.float32) + hb2

    # log_softmax over classes
    m = jnp.max(logits, axis=-1, keepdims=True)
    z = logits - m
    lse = jnp.log(jnp.sum(jnp.exp(z), axis=-1, keepdims=True))
    logp = z - lse                                                     # (B,C)

    # lane-dense output block: one sublane row per batch element
    out_ref[...] = jnp.zeros_like(out_ref)
    out_ref[0:BATCH, 0:REL_LABEL] = logp


# --------------------------- parameter setup ------------------------------
def _xavier(key, shape):
    fan_out, fan_in = shape[-2], shape[-1]
    a = math.sqrt(6.0 / (fan_in + fan_out))
    return jax.random.uniform(key, shape, jnp.float32, -a, a)


def init_params(key):
    """Parameters kept in PyTorch (out, in) layout; packed/transposed later."""
    ks = iter(jax.random.split(key, 64))
    p = {}
    p['embed'] = _xavier(next(ks), (WORDS_NUM, D_MODEL))

    def stack(fn):
        return jnp.stack([fn(next(ks)) for _ in range(NUM_LAYERS)])

    unif = lambda k, shape: jax.random.uniform(k, shape, jnp.float32, -0.05, 0.05)
    p['wq'] = stack(lambda k: _xavier(k, (D_MODEL, D_MODEL)))
    p['wk'] = stack(lambda k: _xavier(k, (D_MODEL, D_MODEL)))
    p['wv'] = stack(lambda k: _xavier(k, (D_MODEL, D_MODEL)))
    p['bq'] = stack(lambda k: unif(k, (1, D_MODEL)))
    p['bk'] = stack(lambda k: unif(k, (1, D_MODEL)))
    p['bv'] = stack(lambda k: unif(k, (1, D_MODEL)))
    p['wo'] = stack(lambda k: _xavier(k, (D_MODEL, D_MODEL)))
    p['bo'] = stack(lambda k: unif(k, (1, D_MODEL)))
    p['ln1g'] = jnp.ones((NUM_LAYERS, 1, D_MODEL), jnp.float32)
    p['ln1b'] = jnp.zeros((NUM_LAYERS, 1, D_MODEL), jnp.float32)
    p['w1'] = stack(lambda k: _xavier(k, (DIM_FF, D_MODEL)))
    p['b1'] = stack(lambda k: unif(k, (1, DIM_FF)))
    p['w2'] = stack(lambda k: _xavier(k, (D_MODEL, DIM_FF)))
    p['b2'] = stack(lambda k: unif(k, (1, D_MODEL)))
    p['ln2g'] = jnp.ones((NUM_LAYERS, 1, D_MODEL), jnp.float32)
    p['ln2b'] = jnp.zeros((NUM_LAYERS, 1, D_MODEL), jnp.float32)
    p['lnfg'] = jnp.ones((1, D_MODEL), jnp.float32)
    p['lnfb'] = jnp.zeros((1, D_MODEL), jnp.float32)
    p['hw1'] = _xavier(next(ks), (D_MODEL, D_MODEL))
    p['hb1'] = unif(next(ks), (1, D_MODEL))
    # BatchNorm1d eval-mode statistics / affine params (defaults)
    p['bng'] = jnp.ones((1, D_MODEL), jnp.float32)
    p['bnb'] = jnp.zeros((1, D_MODEL), jnp.float32)
    p['bnm'] = jnp.zeros((1, D_MODEL), jnp.float32)
    p['bnv'] = jnp.ones((1, D_MODEL), jnp.float32)
    p['hw2'] = _xavier(next(ks), (REL_LABEL, D_MODEL))
    p['hb2'] = unif(next(ks), (1, REL_LABEL))
    return p


def pack_params(p):
    """Host-side packing: pre-transpose every weight to (in, out) and collapse
    ALL parameters into one lane-dense (TOTAL_ROWS, 128) f32 slab (single DMA,
    static row-offset sections)."""
    def padlane(a):                                     # (r, n) -> (r, 128)
        return jnp.pad(a, ((0, 0), (0, LANE - a.shape[-1])))

    layer_blocks = []
    for l in range(NUM_LAYERS):
        w_qkvo = jnp.concatenate(
            [p['wq'][l].T, p['wk'][l].T, p['wv'][l].T, p['wo'][l].T], axis=-1)  # (32,128)
        w1 = padlane(p['w1'][l].T)                       # (32,64) -> (32,128)
        w2 = padlane(p['w2'][l].T)                       # (64,32) -> (64,128)
        vrows = jnp.concatenate([
            padlane(jnp.concatenate([p['bq'][l], p['bk'][l], p['bv'][l]], axis=-1)),
            padlane(p['bo'][l]),
            padlane(p['ln1g'][l]), padlane(p['ln1b'][l]),
            padlane(p['b1'][l]), padlane(p['b2'][l]),
            padlane(p['ln2g'][l]), padlane(p['ln2b'][l]),
        ], axis=0)                                       # (8,128)
        layer_blocks.append(jnp.concatenate([w_qkvo, w1, w2, vrows], axis=0))

    bn_scale = p['bng'] / jnp.sqrt(p['bnv'] + BN_EPS)    # fold BN (eval mode)
    bn_shift = p['bnb'] - p['bnm'] * bn_scale
    head_block = jnp.concatenate([
        padlane(p['hw1'].T),                             # (32,128)
        padlane(p['hw2'].T),                             # (32,128)
        padlane(p['lnfg']), padlane(p['lnfb']),
        padlane(p['hb1']), padlane(bn_scale), padlane(bn_shift),
        padlane(p['hb2']),
        jnp.zeros((2, LANE), jnp.float32),               # pad to 8 rows
    ], axis=0)                                           # (72,128)

    slab = jnp.concatenate(layer_blocks + [head_block], axis=0)   # (344,128)
    assert slab.shape == (TOTAL_ROWS, LANE)
    return {'embed': p['embed'], 'slab': slab}


def positional_encoding(seq_len, d_model):
    position = jnp.arange(seq_len, dtype=jnp.float32)[:, None]
    div_term = jnp.exp(jnp.arange(0, d_model, 2, dtype=jnp.float32)
                       * (-math.log(10000.0) / d_model))
    pe = jnp.zeros((seq_len, d_model), jnp.float32)
    pe = pe.at[:, 0::2].set(jnp.sin(position * div_term))
    pe = pe.at[:, 1::2].set(jnp.cos(position * div_term))
    return pe[:, None, :]                                # (S, 1, D)


# ------------------------------ wrapper ------------------------------------
@jax.jit
def transformer_forward(src_tokens, packed):
    """src_tokens: (SEQ, BATCH) int32, matching PyTorch's src.text layout."""
    # glue: embedding lookup + positional encoding (dropout = identity)
    emb = packed['embed'][src_tokens]                    # (S, B, D)
    x = emb + positional_encoding(SEQ, D_MODEL)          # broadcast over batch
    x = jnp.transpose(x, (1, 0, 2)).reshape(BATCH * SEQ, D_MODEL)   # stacked rows

    out = pl.pallas_call(
        transformer_kernel,
        out_shape=jax.ShapeDtypeStruct((8, LANE), jnp.float32),  # lane-dense
        grid=(1,),                                        # single step: no per-step
        in_specs=[                                        # overhead, one TC
            pl.BlockSpec((BATCH * SEQ, D_MODEL), lambda i: (0, 0)),
            pl.BlockSpec((TOTAL_ROWS, LANE), lambda i: (0, 0)),
        ],
        out_specs=pl.BlockSpec((8, LANE), lambda i: (0, 0)),
    )(x, packed['slab'])
    return out[:BATCH, :REL_LABEL]                        # (BATCH, REL_LABEL) log-probs


# -------------------------------- main -------------------------------------
if __name__ == "__main__":
    key = jax.random.PRNGKey(0)
    k_tok, k_par = jax.random.split(key)
    params = init_params(k_par)
    packed = pack_params(params)                          # one-time host-side packing
    src_tokens = jax.random.randint(k_tok, (SEQ, BATCH), 0, WORDS_NUM,
                                    dtype=jnp.int32)

    scores = transformer_forward(src_tokens, packed)
    scores = jax.block_until_ready(scores)

    # sanity: log_softmax rows must exponentiate-and-sum to 1
    row_sums = jnp.exp(scores).sum(axis=1)
    assert scores.shape == (BATCH, REL_LABEL)
    assert bool(jnp.all(jnp.abs(row_sums - 1.0) < 1e-4))
    assert bool(jnp.all(jnp.isfinite(scores)))
    print("KERNEL_OK")
</pallas_src>

<mosaic_0001>
module attributes {stable_mosaic.version = 11 : i64} {
  func.func @transformer_kernel(%arg0: i32, %arg1: memref<16x32xf32, #tpu.memory_space<vmem>>, %arg2: memref<344x128xf32, #tpu.memory_space<vmem>>, %arg3: memref<8x128xf32, #tpu.memory_space<vmem>>) attributes {dimension_semantics = [#tpu.dimension_semantics<arbitrary>], iteration_bounds = array<i64: 1>, scalar_prefetch = 0 : i64, scratch_operands = 0 : i64, tpu.core_type = #tpu.core_type<tc>, window_params = [{pipeline_mode = #tpu.pipeline_mode<synchronous>, transform_indices = @transform_0, window_bounds = array<i64: 16, 32>}, {pipeline_mode = #tpu.pipeline_mode<synchronous>, transform_indices = @transform_1, window_bounds = array<i64: 344, 128>}, {pipeline_mode = #tpu.pipeline_mode<synchronous>, transform_indices = @transform_2, window_bounds = array<i64: 8, 128>}]} {
    %c0 = arith.constant 0 : index
    %c0_0 = arith.constant 0 : index
    %0 = vector.load %arg1[%c0, %c0_0] : memref<16x32xf32, #tpu.memory_space<vmem>>, vector<16x32xf32>
    %c0_1 = arith.constant 0 : index
    %c0_2 = arith.constant 0 : index
    %1 = vector.load %arg2[%c0_1, %c0_2] : memref<344x128xf32, #tpu.memory_space<vmem>>, vector<32x128xf32>
    %c32 = arith.constant 32 : index
    %c0_3 = arith.constant 0 : index
    %2 = vector.load %arg2[%c32, %c0_3] : memref<344x128xf32, #tpu.memory_space<vmem>>, vector<32x64xf32>
    %c64 = arith.constant 64 : index
    %c0_4 = arith.constant 0 : index
    %3 = vector.load %arg2[%c64, %c0_4] : memref<344x128xf32, #tpu.memory_space<vmem>>, vector<64x32xf32>
    %c128 = arith.constant 128 : index
    %c0_5 = arith.constant 0 : index
    %4 = vector.load %arg2[%c128, %c0_5] : memref<344x128xf32, #tpu.memory_space<vmem>>, vector<1x96xf32>
    %c129 = arith.constant 129 : index
    %c0_6 = arith.constant 0 : index
    %5 = vector.load %arg2[%c129, %c0_6] : memref<344x128xf32, #tpu.memory_space<vmem>>, vector<1x32xf32>
    %c130 = arith.constant 130 : index
    %c0_7 = arith.constant 0 : index
    %6 = vector.load %arg2[%c130, %c0_7] : memref<344x128xf32, #tpu.memory_space<vmem>>, vector<1x32xf32>
    %c131 = arith.constant 131 : index
    %c0_8 = arith.constant 0 : index
    %7 = vector.load %arg2[%c131, %c0_8] : memref<344x128xf32, #tpu.memory_space<vmem>>, vector<1x32xf32>
    %c132 = arith.constant 132 : index
    %c0_9 = arith.constant 0 : index
    %8 = vector.load %arg2[%c132, %c0_9] : memref<344x128xf32, #tpu.memory_space<vmem>>, vector<1x64xf32>
    %c133 = arith.constant 133 : index
    %c0_10 = arith.constant 0 : index
    %9 = vector.load %arg2[%c133, %c0_10] : memref<344x128xf32, #tpu.memory_space<vmem>>, vector<1x32xf32>
    %c134 = arith.constant 134 : index
    %c0_11 = arith.constant 0 : index
    %10 = vector.load %arg2[%c134, %c0_11] : memref<344x128xf32, #tpu.memory_space<vmem>>, vector<1x32xf32>
    %c135 = arith.constant 135 : index
    %c0_12 = arith.constant 0 : index
    %11 = vector.load %arg2[%c135, %c0_12] : memref<344x128xf32, #tpu.memory_space<vmem>>, vector<1x32xf32>
    %12 = vector.extract_strided_slice %1 {offsets = [0, 0], sizes = [32, 96], strides = [1, 1]} : vector<32x128xf32> to vector<32x96xf32>
    %cst = arith.constant dense<0.000000e+00> : vector<16x96xf32>
    %13 = tpu.matmul %0, %12, %cst {dimension_numbers = #tpu.dot_dimension_numbers<[1], [0], [0], [1], [0, 0, 1, 1], [], []>} : vector<16x32xf32>, vector<32x96xf32>, vector<16x96xf32> -> vector<16x96xf32>
    %14 = vector.broadcast %4 : vector<1x96xf32> to vector<16x96xf32>
    %15 = arith.addf %13, %14 : vector<16x96xf32>
    %16 = vector.extract_strided_slice %15 {offsets = [0, 0], sizes = [8, 8], strides = [1, 1]} : vector<16x96xf32> to vector<8x8xf32>
    %17 = vector.extract_strided_slice %15 {offsets = [0, 32], sizes = [8, 8], strides = [1, 1]} : vector<16x96xf32> to vector<8x8xf32>
    %18 = vector.extract_strided_slice %15 {offsets = [0, 64], sizes = [8, 8], strides = [1, 1]} : vector<16x96xf32> to vector<8x8xf32>
    %cst_13 = arith.constant dense<0.000000e+00> : vector<8x8xf32>
    %19 = tpu.matmul %16, %17, %cst_13 {dimension_numbers = #tpu.dot_dimension_numbers<[1], [1], [0], [0], [0, 0, 1, 0], [], []>} : vector<8x8xf32>, vector<8x8xf32>, vector<8x8xf32> -> vector<8x8xf32>
    %cst_14 = arith.constant 0.353553385 : f32
    %20 = vector.broadcast %cst_14 : f32 to vector<8x8xf32>
    %21 = arith.mulf %19, %20 : vector<8x8xf32>
    %cst_15 = arith.constant dense<0xFF800000> : vector<8xf32>
    %22 = vector.multi_reduction <maximumf>, %21, %cst_15 [1] : vector<8x8xf32> to vector<8xf32>
    %23 = vector.shape_cast %22 : vector<8xf32> to vector<8x1xf32>
    %24 = vector.broadcast %23 : vector<8x1xf32> to vector<8x8xf32>
    %25 = arith.subf %21, %24 : vector<8x8xf32>
    %26 = math.exp %25 : vector<8x8xf32>
    %cst_16 = arith.constant dense<0.000000e+00> : vector<8xf32>
    %27 = vector.multi_reduction <add>, %26, %cst_16 [1] : vector<8x8xf32> to vector<8xf32>
    %28 = vector.shape_cast %27 : vector<8xf32> to vector<8x1xf32>
    %29 = tpu.reciprocal %28 {approx = true} : vector<8x1xf32> -> vector<8x1xf32>
    %30 = vector.broadcast %29 : vector<8x1xf32> to vector<8x8xf32>
    %31 = arith.mulf %26, %30 : vector<8x8xf32>
    %cst_17 = arith.constant dense<0.000000e+00> : vector<8x8xf32>
    %32 = tpu.matmul %31, %18, %cst_17 {dimension_numbers = #tpu.dot_dimension_numbers<[1], [0], [0], [1], [0, 0, 1, 1], [], []>} : vector<8x8xf32>, vector<8x8xf32>, vector<8x8xf32> -> vector<8x8xf32>
    %33 = vector.extract_strided_slice %15 {offsets = [0, 8], sizes = [8, 8], strides = [1, 1]} : vector<16x96xf32> to vector<8x8xf32>
    %34 = vector.extract_strided_slice %15 {offsets = [0, 40], sizes = [8, 8], strides = [1, 1]} : vector<16x96xf32> to vector<8x8xf32>
    %35 = vector.extract_strided_slice %15 {offsets = [0, 72], sizes = [8, 8], strides = [1, 1]} : vector<16x96xf32> to vector<8x8xf32>
    %cst_18 = arith.constant dense<0.000000e+00> : vector<8x8xf32>
    %36 = tpu.matmul %33, %34, %cst_18 {dimension_numbers = #tpu.dot_dimension_numbers<[1], [1], [0], [0], [0, 0, 1, 0], [], []>} : vector<8x8xf32>, vector<8x8xf32>, vector<8x8xf32> -> vector<8x8xf32>
    %cst_19 = arith.constant 0.353553385 : f32
    %37 = vector.broadcast %cst_19 : f32 to vector<8x8xf32>
    %38 = arith.mulf %36, %37 : vector<8x8xf32>
    %cst_20 = arith.constant dense<0xFF800000> : vector<8xf32>
    %39 = vector.multi_reduction <maximumf>, %38, %cst_20 [1] : vector<8x8xf32> to vector<8xf32>
    %40 = vector.shape_cast %39 : vector<8xf32> to vector<8x1xf32>
    %41 = vector.broadcast %40 : vector<8x1xf32> to vector<8x8xf32>
    %42 = arith.subf %38, %41 : vector<8x8xf32>
    %43 = math.exp %42 : vector<8x8xf32>
    %cst_21 = arith.constant dense<0.000000e+00> : vector<8xf32>
    %44 = vector.multi_reduction <add>, %43, %cst_21 [1] : vector<8x8xf32> to vector<8xf32>
    %45 = vector.shape_cast %44 : vector<8xf32> to vector<8x1xf32>
    %46 = tpu.reciprocal %45 {approx = true} : vector<8x1xf32> -> vector<8x1xf32>
    %47 = vector.broadcast %46 : vector<8x1xf32> to vector<8x8xf32>
    %48 = arith.mulf %43, %47 : vector<8x8xf32>
    %cst_22 = arith.constant dense<0.000000e+00> : vector<8x8xf32>
    %49 = tpu.matmul %48, %35, %cst_22 {dimension_numbers = #tpu.dot_dimension_numbers<[1], [0], [0], [1], [0, 0, 1, 1], [], []>} : vector<8x8xf32>, vector<8x8xf32>, vector<8x8xf32> -> vector<8x8xf32>
    %50 = vector.extract_strided_slice %15 {offsets = [0, 16], sizes = [8, 8], strides = [1, 1]} : vector<16x96xf32> to vector<8x8xf32>
    %51 = vector.extract_strided_slice %15 {offsets = [0, 48], sizes = [8, 8], strides = [1, 1]} : vector<16x96xf32> to vector<8x8xf32>
    %52 = vector.extract_strided_slice %15 {offsets = [0, 80], sizes = [8, 8], strides = [1, 1]} : vector<16x96xf32> to vector<8x8xf32>
    %cst_23 = arith.constant dense<0.000000e+00> : vector<8x8xf32>
    %53 = tpu.matmul %50, %51, %cst_23 {dimension_numbers = #tpu.dot_dimension_numbers<[1], [1], [0], [0], [0, 0, 1, 0], [], []>} : vector<8x8xf32>, vector<8x8xf32>, vector<8x8xf32> -> vector<8x8xf32>
    %cst_24 = arith.constant 0.353553385 : f32
    %54 = vector.broadcast %cst_24 : f32 to vector<8x8xf32>
    %55 = arith.mulf %53, %54 : vector<8x8xf32>
    %cst_25 = arith.constant dense<0xFF800000> : vector<8xf32>
    %56 = vector.multi_reduction <maximumf>, %55, %cst_25 [1] : vector<8x8xf32> to vector<8xf32>
    %57 = vector.shape_cast %56 : vector<8xf32> to vector<8x1xf32>
    %58 = vector.broadcast %57 : vector<8x1xf32> to vector<8x8xf32>
    %59 = arith.subf %55, %58 : vector<8x8xf32>
    %60 = math.exp %59 : vector<8x8xf32>
    %cst_26 = arith.constant dense<0.000000e+00> : vector<8xf32>
    %61 = vector.multi_reduction <add>, %60, %cst_26 [1] : vector<8x8xf32> to vector<8xf32>
    %62 = vector.shape_cast %61 : vector<8xf32> to vector<8x1xf32>
    %63 = tpu.reciprocal %62 {approx = true} : vector<8x1xf32> -> vector<8x1xf32>
    %64 = vector.broadcast %63 : vector<8x1xf32> to vector<8x8xf32>
    %65 = arith.mulf %60, %64 : vector<8x8xf32>
    %cst_27 = arith.constant dense<0.000000e+00> : vector<8x8xf32>
    %66 = tpu.matmul %65, %52, %cst_27 {dimension_numbers = #tpu.dot_dimension_numbers<[1], [0], [0], [1], [0, 0, 1, 1], [], []>} : vector<8x8xf32>, vector<8x8xf32>, vector<8x8xf32> -> vector<8x8xf32>
    %67 = vector.extract_strided_slice %15 {offsets = [0, 24], sizes = [8, 8], strides = [1, 1]} : vector<16x96xf32> to vector<8x8xf32>
    %68 = vector.extract_strided_slice %15 {offsets = [0, 56], sizes = [8, 8], strides = [1, 1]} : vector<16x96xf32> to vector<8x8xf32>
    %69 = vector.extract_strided_slice %15 {offsets = [0, 88], sizes = [8, 8], strides = [1, 1]} : vector<16x96xf32> to vector<8x8xf32>
    %cst_28 = arith.constant dense<0.000000e+00> : vector<8x8xf32>
    %70 = tpu.matmul %67, %68, %cst_28 {dimension_numbers = #tpu.dot_dimension_numbers<[1], [1], [0], [0], [0, 0, 1, 0], [], []>} : vector<8x8xf32>, vector<8x8xf32>, vector<8x8xf32> -> vector<8x8xf32>
    %cst_29 = arith.constant 0.353553385 : f32
    %71 = vector.broadcast %cst_29 : f32 to vector<8x8xf32>
    %72 = arith.mulf %70, %71 : vector<8x8xf32>
    %cst_30 = arith.constant dense<0xFF800000> : vector<8xf32>
    %73 = vector.multi_reduction <maximumf>, %72, %cst_30 [1] : vector<8x8xf32> to vector<8xf32>
    %74 = vector.shape_cast %73 : vector<8xf32> to vector<8x1xf32>
    %75 = vector.broadcast %74 : vector<8x1xf32> to vector<8x8xf32>
    %76 = arith.subf %72, %75 : vector<8x8xf32>
    %77 = math.exp %76 : vector<8x8xf32>
    %cst_31 = arith.constant dense<0.000000e+00> : vector<8xf32>
    %78 = vector.multi_reduction <add>, %77, %cst_31 [1] : vector<8x8xf32> to vector<8xf32>
    %79 = vector.shape_cast %78 : vector<8xf32> to vector<8x1xf32>
    %80 = tpu.reciprocal %79 {approx = true} : vector<8x1xf32> -> vector<8x1xf32>
    %81 = vector.broadcast %80 : vector<8x1xf32> to vector<8x8xf32>
    %82 = arith.mulf %77, %81 : vector<8x8xf32>
    %cst_32 = arith.constant dense<0.000000e+00> : vector<8x8xf32>
    %83 = tpu.matmul %82, %69, %cst_32 {dimension_numbers = #tpu.dot_dimension_numbers<[1], [0], [0], [1], [0, 0, 1, 1], [], []>} : vector<8x8xf32>, vector<8x8xf32>, vector<8x8xf32> -> vector<8x8xf32>
    %84 = tpu.concatenate %32, %49, %66, %83 in 1 : vector<8x8xf32>, vector<8x8xf32>, vector<8x8xf32>, vector<8x8xf32> -> vector<8x32xf32>
    %85 = vector.extract_strided_slice %15 {offsets = [8, 0], sizes = [8, 8], strides = [1, 1]} : vector<16x96xf32> to vector<8x8xf32>
    %86 = vector.extract_strided_slice %15 {offsets = [8, 32], sizes = [8, 8], strides = [1, 1]} : vector<16x96xf32> to vector<8x8xf32>
    %87 = vector.extract_strided_slice %15 {offsets = [8, 64], sizes = [8, 8], strides = [1, 1]} : vector<16x96xf32> to vector<8x8xf32>
    %cst_33 = arith.constant dense<0.000000e+00> : vector<8x8xf32>
    %88 = tpu.matmul %85, %86, %cst_33 {dimension_numbers = #tpu.dot_dimension_numbers<[1], [1], [0], [0], [0, 0, 1, 0], [], []>} : vector<8x8xf32>, vector<8x8xf32>, vector<8x8xf32> -> vector<8x8xf32>
    %cst_34 = arith.constant 0.353553385 : f32
    %89 = vector.broadcast %cst_34 : f32 to vector<8x8xf32>
    %90 = arith.mulf %88, %89 : vector<8x8xf32>
    %cst_35 = arith.constant dense<0xFF800000> : vector<8xf32>
    %91 = vector.multi_reduction <maximumf>, %90, %cst_35 [1] : vector<8x8xf32> to vector<8xf32>
    %92 = vector.shape_cast %91 : vector<8xf32> to vector<8x1xf32>
    %93 = vector.broadcast %92 : vector<8x1xf32> to vector<8x8xf32>
    %94 = arith.subf %90, %93 : vector<8x8xf32>
    %95 = math.exp %94 : vector<8x8xf32>
    %cst_36 = arith.constant dense<0.000000e+00> : vector<8xf32>
    %96 = vector.multi_reduction <add>, %95, %cst_36 [1] : vector<8x8xf32> to vector<8xf32>
    %97 = vector.shape_cast %96 : vector<8xf32> to vector<8x1xf32>
    %98 = tpu.reciprocal %97 {approx = true} : vector<8x1xf32> -> vector<8x1xf32>
    %99 = vector.broadcast %98 : vector<8x1xf32> to vector<8x8xf32>
    %100 = arith.mulf %95, %99 : vector<8x8xf32>
    %cst_37 = arith.constant dense<0.000000e+00> : vector<8x8xf32>
    %101 = tpu.matmul %100, %87, %cst_37 {dimension_numbers = #tpu.dot_dimension_numbers<[1], [0], [0], [1], [0, 0, 1, 1], [], []>} : vector<8x8xf32>, vector<8x8xf32>, vector<8x8xf32> -> vector<8x8xf32>
    %102 = vector.extract_strided_slice %15 {offsets = [8, 8], sizes = [8, 8], strides = [1, 1]} : vector<16x96xf32> to vector<8x8xf32>
    %103 = vector.extract_strided_slice %15 {offsets = [8, 40], sizes = [8, 8], strides = [1, 1]} : vector<16x96xf32> to vector<8x8xf32>
    %104 = vector.extract_strided_slice %15 {offsets = [8, 72], sizes = [8, 8], strides = [1, 1]} : vector<16x96xf32> to vector<8x8xf32>
    %cst_38 = arith.constant dense<0.000000e+00> : vector<8x8xf32>
    %105 = tpu.matmul %102, %103, %cst_38 {dimension_numbers = #tpu.dot_dimension_numbers<[1], [1], [0], [0], [0, 0, 1, 0], [], []>} : vector<8x8xf32>, vector<8x8xf32>, vector<8x8xf32> -> vector<8x8xf32>
    %cst_39 = arith.constant 0.353553385 : f32
    %106 = vector.broadcast %cst_39 : f32 to vector<8x8xf32>
    %107 = arith.mulf %105, %106 : vector<8x8xf32>
    %cst_40 = arith.constant dense<0xFF800000> : vector<8xf32>
    %108 = vector.multi_reduction <maximumf>, %107, %cst_40 [1] : vector<8x8xf32> to vector<8xf32>
    %109 = vector.shape_cast %108 : vector<8xf32> to vector<8x1xf32>
    %110 = vector.broadcast %109 : vector<8x1xf32> to vector<8x8xf32>
    %111 = arith.subf %107, %110 : vector<8x8xf32>
    %112 = math.exp %111 : vector<8x8xf32>
    %cst_41 = arith.constant dense<0.000000e+00> : vector<8xf32>
    %113 = vector.multi_reduction <add>, %112, %cst_41 [1] : vector<8x8xf32> to vector<8xf32>
    %114 = vector.shape_cast %113 : vector<8xf32> to vector<8x1xf32>
    %115 = tpu.reciprocal %114 {approx = true} : vector<8x1xf32> -> vector<8x1xf32>
    %116 = vector.broadcast %115 : vector<8x1xf32> to vector<8x8xf32>
    %117 = arith.mulf %112, %116 : vector<8x8xf32>
    %cst_42 = arith.constant dense<0.000000e+00> : vector<8x8xf32>
    %118 = tpu.matmul %117, %104, %cst_42 {dimension_numbers = #tpu.dot_dimension_numbers<[1], [0], [0], [1], [0, 0, 1, 1], [], []>} : vector<8x8xf32>, vector<8x8xf32>, vector<8x8xf32> -> vector<8x8xf32>
    %119 = vector.extract_strided_slice %15 {offsets = [8, 16], sizes = [8, 8], strides = [1, 1]} : vector<16x96xf32> to vector<8x8xf32>
    %120 = vector.extract_strided_slice %15 {offsets = [8, 48], sizes = [8, 8], strides = [1, 1]} : vector<16x96xf32> to vector<8x8xf32>
    %121 = vector.extract_strided_slice %15 {offsets = [8, 80], sizes = [8, 8], strides = [1, 1]} : vector<16x96xf32> to vector<8x8xf32>
    %cst_43 = arith.constant dense<0.000000e+00> : vector<8x8xf32>
    %122 = tpu.matmul %119, %120, %cst_43 {dimension_numbers = #tpu.dot_dimension_numbers<[1], [1], [0], [0], [0, 0, 1, 0], [], []>} : vector<8x8xf32>, vector<8x8xf32>, vector<8x8xf32> -> vector<8x8xf32>
    %cst_44 = arith.constant 0.353553385 : f32
    %123 = vector.broadcast %cst_44 : f32 to vector<8x8xf32>
    %124 = arith.mulf %122, %123 : vector<8x8xf32>
    %cst_45 = arith.constant dense<0xFF800000> : vector<8xf32>
    %125 = vector.multi_reduction <maximumf>, %124, %cst_45 [1] : vector<8x8xf32> to vector<8xf32>
    %126 = vector.shape_cast %125 : vector<8xf32> to vector<8x1xf32>
    %127 = vector.broadcast %126 : vector<8x1xf32> to vector<8x8xf32>
    %128 = arith.subf %124, %127 : vector<8x8xf32>
    %129 = math.exp %128 : vector<8x8xf32>
    %cst_46 = arith.constant dense<0.000000e+00> : vector<8xf32>
    %130 = vector.multi_reduction <add>, %129, %cst_46 [1] : vector<8x8xf32> to vector<8xf32>
    %131 = vector.shape_cast %130 : vector<8xf32> to vector<8x1xf32>
    %132 = tpu.reciprocal %131 {approx = true} : vector<8x1xf32> -> vector<8x1xf32>
    %133 = vector.broadcast %132 : vector<8x1xf32> to vector<8x8xf32>
    %134 = arith.mulf %129, %133 : vector<8x8xf32>
    %cst_47 = arith.constant dense<0.000000e+00> : vector<8x8xf32>
    %135 = tpu.matmul %134, %121, %cst_47 {dimension_numbers = #tpu.dot_dimension_numbers<[1], [0], [0], [1], [0, 0, 1, 1], [], []>} : vector<8x8xf32>, vector<8x8xf32>, vector<8x8xf32> -> vector<8x8xf32>
    %136 = vector.extract_strided_slice %15 {offsets = [8, 24], sizes = [8, 8], strides = [1, 1]} : vector<16x96xf32> to vector<8x8xf32>
    %137 = vector.extract_strided_slice %15 {offsets = [8, 56], sizes = [8, 8], strides = [1, 1]} : vector<16x96xf32> to vector<8x8xf32>
    %138 = vector.extract_strided_slice %15 {offsets = [8, 88], sizes = [8, 8], strides = [1, 1]} : vector<16x96xf32> to vector<8x8xf32>
    %cst_48 = arith.constant dense<0.000000e+00> : vector<8x8xf32>
    %139 = tpu.matmul %136, %137, %cst_48 {dimension_numbers = #tpu.dot_dimension_numbers<[1], [1], [0], [0], [0, 0, 1, 0], [], []>} : vector<8x8xf32>, vector<8x8xf32>, vector<8x8xf32> -> vector<8x8xf32>
    %cst_49 = arith.constant 0.353553385 : f32
    %140 = vector.broadcast %cst_49 : f32 to vector<8x8xf32>
    %141 = arith.mulf %139, %140 : vector<8x8xf32>
    %cst_50 = arith.constant dense<0xFF800000> : vector<8xf32>
    %142 = vector.multi_reduction <maximumf>, %141, %cst_50 [1] : vector<8x8xf32> to vector<8xf32>
    %143 = vector.shape_cast %142 : vector<8xf32> to vector<8x1xf32>
    %144 = vector.broadcast %143 : vector<8x1xf32> to vector<8x8xf32>
    %145 = arith.subf %141, %144 : vector<8x8xf32>
    %146 = math.exp %145 : vector<8x8xf32>
    %cst_51 = arith.constant dense<0.000000e+00> : vector<8xf32>
    %147 = vector.multi_reduction <add>, %146, %cst_51 [1] : vector<8x8xf32> to vector<8xf32>
    %148 = vector.shape_cast %147 : vector<8xf32> to vector<8x1xf32>
    %149 = tpu.reciprocal %148 {approx = true} : vector<8x1xf32> -> vector<8x1xf32>
    %150 = vector.broadcast %149 : vector<8x1xf32> to vector<8x8xf32>
    %151 = arith.mulf %146, %150 : vector<8x8xf32>
    %cst_52 = arith.constant dense<0.000000e+00> : vector<8x8xf32>
    %152 = tpu.matmul %151, %138, %cst_52 {dimension_numbers = #tpu.dot_dimension_numbers<[1], [0], [0], [1], [0, 0, 1, 1], [], []>} : vector<8x8xf32>, vector<8x8xf32>, vector<8x8xf32> -> vector<8x8xf32>
    %153 = tpu.concatenate %101, %118, %135, %152 in 1 : vector<8x8xf32>, vector<8x8xf32>, vector<8x8xf32>, vector<8x8xf32> -> vector<8x32xf32>
    %154 = tpu.concatenate %84, %153 in 0 : vector<8x32xf32>, vector<8x32xf32> -> vector<16x32xf32>
    %155 = vector.extract_strided_slice %1 {offsets = [0, 96], sizes = [32, 32], strides = [1, 1]} : vector<32x128xf32> to vector<32x32xf32>
    %cst_53 = arith.constant dense<0.000000e+00> : vector<16x32xf32>
    %156 = tpu.matmul %154, %155, %cst_53 {dimension_numbers = #tpu.dot_dimension_numbers<[1], [0], [0], [1], [0, 0, 1, 1], [], []>} : vector<16x32xf32>, vector<32x32xf32>, vector<16x32xf32> -> vector<16x32xf32>
    %157 = vector.broadcast %5 : vector<1x32xf32> to vector<16x32xf32>
    %158 = arith.addf %156, %157 : vector<16x32xf32>
    %159 = arith.addf %0, %158 : vector<16x32xf32>
    %cst_54 = arith.constant dense<0.000000e+00> : vector<16xf32>
    %160 = vector.multi_reduction <add>, %159, %cst_54 [1] : vector<16x32xf32> to vector<16xf32>
    %161 = vector.shape_cast %160 : vector<16xf32> to vector<16x1xf32>
    %162 = arith.mulf %159, %159 : vector<16x32xf32>
    %cst_55 = arith.constant dense<0.000000e+00> : vector<16xf32>
    %163 = vector.multi_reduction <add>, %162, %cst_55 [1] : vector<16x32xf32> to vector<16xf32>
    %164 = vector.shape_cast %163 : vector<16xf32> to vector<16x1xf32>
    %cst_56 = arith.constant 3.125000e-02 : f32
    %165 = vector.broadcast %cst_56 : f32 to vector<16x1xf32>
    %166 = arith.mulf %161, %165 : vector<16x1xf32>
    %cst_57 = arith.constant 3.125000e-02 : f32
    %167 = vector.broadcast %cst_57 : f32 to vector<16x1xf32>
    %168 = arith.mulf %164, %167 : vector<16x1xf32>
    %169 = arith.mulf %166, %166 : vector<16x1xf32>
    %170 = arith.subf %168, %169 : vector<16x1xf32>
    %171 = vector.broadcast %166 : vector<16x1xf32> to vector<16x32xf32>
    %172 = arith.subf %159, %171 : vector<16x32xf32>
    %cst_58 = arith.constant 9.99999974E-6 : f32
    %173 = vector.broadcast %cst_58 : f32 to vector<16x1xf32>
    %174 = arith.addf %170, %173 : vector<16x1xf32>
    %175 = math.rsqrt %174 : vector<16x1xf32>
    %176 = vector.broadcast %175 : vector<16x1xf32> to vector<16x32xf32>
    %177 = arith.mulf %172, %176 : vector<16x32xf32>
    %178 = vector.broadcast %6 : vector<1x32xf32> to vector<16x32xf32>
    %179 = arith.mulf %177, %178 : vector<16x32xf32>
    %180 = vector.broadcast %7 : vector<1x32xf32> to vector<16x32xf32>
    %181 = arith.addf %179, %180 : vector<16x32xf32>
    %cst_59 = arith.constant dense<0.000000e+00> : vector<16x64xf32>
    %182 = tpu.matmul %181, %2, %cst_59 {dimension_numbers = #tpu.dot_dimension_numbers<[1], [0], [0], [1], [0, 0, 1, 1], [], []>} : vector<16x32xf32>, vector<32x64xf32>, vector<16x64xf32> -> vector<16x64xf32>
    %183 = vector.broadcast %8 : vector<1x64xf32> to vector<16x64xf32>
    %184 = arith.addf %182, %183 : vector<16x64xf32>
    %cst_60 = arith.constant 0.000000e+00 : f32
    %185 = vector.broadcast %cst_60 : f32 to vector<16x64xf32>
    %186 = arith.maximumf %184, %185 : vector<16x64xf32>
    %cst_61 = arith.constant dense<0.000000e+00> : vector<16x32xf32>
    %187 = tpu.matmul %186, %3, %cst_61 {dimension_numbers = #tpu.dot_dimension_numbers<[1], [0], [0], [1], [0, 0, 1, 1], [], []>} : vector<16x64xf32>, vector<64x32xf32>, vector<16x32xf32> -> vector<16x32xf32>
    %188 = vector.broadcast %9 : vector<1x32xf32> to vector<16x32xf32>
    %189 = arith.addf %187, %188 : vector<16x32xf32>
    %190 = arith.addf %181, %189 : vector<16x32xf32>
    %cst_62 = arith.constant dense<0.000000e+00> : vector<16xf32>
    %191 = vector.multi_reduction <add>, %190, %cst_62 [1] : vector<16x32xf32> to vector<16xf32>
    %192 = vector.shape_cast %191 : vector<16xf32> to vector<16x1xf32>
    %193 = arith.mulf %190, %190 : vector<16x32xf32>
    %cst_63 = arith.constant dense<0.000000e+00> : vector<16xf32>
    %194 = vector.multi_reduction <add>, %193, %cst_63 [1] : vector<16x32xf32> to vector<16xf32>
    %195 = vector.shape_cast %194 : vector<16xf32> to vector<16x1xf32>
    %cst_64 = arith.constant 3.125000e-02 : f32
    %196 = vector.broadcast %cst_64 : f32 to vector<16x1xf32>
    %197 = arith.mulf %192, %196 : vector<16x1xf32>
    %cst_65 = arith.constant 3.125000e-02 : f32
    %198 = vector.broadcast %cst_65 : f32 to vector<16x1xf32>
    %199 = arith.mulf %195, %198 : vector<16x1xf32>
    %200 = arith.mulf %197, %197 : vector<16x1xf32>
    %201 = arith.subf %199, %200 : vector<16x1xf32>
    %202 = vector.broadcast %197 : vector<16x1xf32> to vector<16x32xf32>
    %203 = arith.subf %190, %202 : vector<16x32xf32>
    %cst_66 = arith.constant 9.99999974E-6 : f32
    %204 = vector.broadcast %cst_66 : f32 to vector<16x1xf32>
    %205 = arith.addf %201, %204 : vector<16x1xf32>
    %206 = math.rsqrt %205 : vector<16x1xf32>
    %207 = vector.broadcast %206 : vector<16x1xf32> to vector<16x32xf32>
    %208 = arith.mulf %203, %207 : vector<16x32xf32>
    %209 = vector.broadcast %10 : vector<1x32xf32> to vector<16x32xf32>
    %210 = arith.mulf %208, %209 : vector<16x32xf32>
    %211 = vector.broadcast %11 : vector<1x32xf32> to vector<16x32xf32>
    %212 = arith.addf %210, %211 : vector<16x32xf32>
    %c136 = arith.constant 136 : index
    %c0_67 = arith.constant 0 : index
    %213 = vector.load %arg2[%c136, %c0_67] : memref<344x128xf32, #tpu.memory_space<vmem>>, vector<32x128xf32>
    %c168 = arith.constant 168 : index
    %c0_68 = arith.constant 0 : index
    %214 = vector.load %arg2[%c168, %c0_68] : memref<344x128xf32, #tpu.memory_space<vmem>>, vector<32x64xf32>
    %c200 = arith.constant 200 : index
    %c0_69 = arith.constant 0 : index
    %215 = vector.load %arg2[%c200, %c0_69] : memref<344x128xf32, #tpu.memory_space<vmem>>, vector<64x32xf32>
    %c264 = arith.constant 264 : index
    %c0_70 = arith.constant 0 : index
    %216 = vector.load %arg2[%c264, %c0_70] : memref<344x128xf32, #tpu.memory_space<vmem>>, vector<1x96xf32>
    %c265 = arith.constant 265 : index
    %c0_71 = arith.constant 0 : index
    %217 = vector.load %arg2[%c265, %c0_71] : memref<344x128xf32, #tpu.memory_space<vmem>>, vector<1x32xf32>
    %c266 = arith.constant 266 : index
    %c0_72 = arith.constant 0 : index
    %218 = vector.load %arg2[%c266, %c0_72] : memref<344x128xf32, #tpu.memory_space<vmem>>, vector<1x32xf32>
    %c267 = arith.constant 267 : index
    %c0_73 = arith.constant 0 : index
    %219 = vector.load %arg2[%c267, %c0_73] : memref<344x128xf32, #tpu.memory_space<vmem>>, vector<1x32xf32>
    %c268 = arith.constant 268 : index
    %c0_74 = arith.constant 0 : index
    %220 = vector.load %arg2[%c268, %c0_74] : memref<344x128xf32, #tpu.memory_space<vmem>>, vector<1x64xf32>
    %c269 = arith.constant 269 : index
    %c0_75 = arith.constant 0 : index
    %221 = vector.load %arg2[%c269, %c0_75] : memref<344x128xf32, #tpu.memory_space<vmem>>, vector<1x32xf32>
    %c270 = arith.constant 270 : index
    %c0_76 = arith.constant 0 : index
    %222 = vector.load %arg2[%c270, %c0_76] : memref<344x128xf32, #tpu.memory_space<vmem>>, vector<1x32xf32>
    %c271 = arith.constant 271 : index
    %c0_77 = arith.constant 0 : index
    %223 = vector.load %arg2[%c271, %c0_77] : memref<344x128xf32, #tpu.memory_space<vmem>>, vector<1x32xf32>
    %224 = vector.extract_strided_slice %213 {offsets = [0, 0], sizes = [32, 96], strides = [1, 1]} : vector<32x128xf32> to vector<32x96xf32>
    %cst_78 = arith.constant dense<0.000000e+00> : vector<16x96xf32>
    %225 = tpu.matmul %212, %224, %cst_78 {dimension_numbers = #tpu.dot_dimension_numbers<[1], [0], [0], [1], [0, 0, 1, 1], [], []>} : vector<16x32xf32>, vector<32x96xf32>, vector<16x96xf32> -> vector<16x96xf32>
    %226 = vector.broadcast %216 : vector<1x96xf32> to vector<16x96xf32>
    %227 = arith.addf %225, %226 : vector<16x96xf32>
    %228 = vector.extract_strided_slice %227 {offsets = [0, 0], sizes = [8, 8], strides = [1, 1]} : vector<16x96xf32> to vector<8x8xf32>
    %229 = vector.extract_strided_slice %227 {offsets = [0, 32], sizes = [8, 8], strides = [1, 1]} : vector<16x96xf32> to vector<8x8xf32>
    %230 = vector.extract_strided_slice %227 {offsets = [0, 64], sizes = [8, 8], strides = [1, 1]} : vector<16x96xf32> to vector<8x8xf32>
    %cst_79 = arith.constant dense<0.000000e+00> : vector<8x8xf32>
    %231 = tpu.matmul %228, %229, %cst_79 {dimension_numbers = #tpu.dot_dimension_numbers<[1], [1], [0], [0], [0, 0, 1, 0], [], []>} : vector<8x8xf32>, vector<8x8xf32>, vector<8x8xf32> -> vector<8x8xf32>
    %cst_80 = arith.constant 0.353553385 : f32
    %232 = vector.broadcast %cst_80 : f32 to vector<8x8xf32>
    %233 = arith.mulf %231, %232 : vector<8x8xf32>
    %cst_81 = arith.constant dense<0xFF800000> : vector<8xf32>
    %234 = vector.multi_reduction <maximumf>, %233, %cst_81 [1] : vector<8x8xf32> to vector<8xf32>
    %235 = vector.shape_cast %234 : vector<8xf32> to vector<8x1xf32>
    %236 = vector.broadcast %235 : vector<8x1xf32> to vector<8x8xf32>
    %237 = arith.subf %233, %236 : vector<8x8xf32>
    %238 = math.exp %237 : vector<8x8xf32>
    %cst_82 = arith.constant dense<0.000000e+00> : vector<8xf32>
    %239 = vector.multi_reduction <add>, %238, %cst_82 [1] : vector<8x8xf32> to vector<8xf32>
    %240 = vector.shape_cast %239 : vector<8xf32> to vector<8x1xf32>
    %241 = tpu.reciprocal %240 {approx = true} : vector<8x1xf32> -> vector<8x1xf32>
    %242 = vector.broadcast %241 : vector<8x1xf32> to vector<8x8xf32>
    %243 = arith.mulf %238, %242 : vector<8x8xf32>
    %cst_83 = arith.constant dense<0.000000e+00> : vector<8x8xf32>
    %244 = tpu.matmul %243, %230, %cst_83 {dimension_numbers = #tpu.dot_dimension_numbers<[1], [0], [0], [1], [0, 0, 1, 1], [], []>} : vector<8x8xf32>, vector<8x8xf32>, vector<8x8xf32> -> vector<8x8xf32>
    %245 = vector.extract_strided_slice %227 {offsets = [0, 8], sizes = [8, 8], strides = [1, 1]} : vector<16x96xf32> to vector<8x8xf32>
    %246 = vector.extract_strided_slice %227 {offsets = [0, 40], sizes = [8, 8], strides = [1, 1]} : vector<16x96xf32> to vector<8x8xf32>
    %247 = vector.extract_strided_slice %227 {offsets = [0, 72], sizes = [8, 8], strides = [1, 1]} : vector<16x96xf32> to vector<8x8xf32>
    %cst_84 = arith.constant dense<0.000000e+00> : vector<8x8xf32>
    %248 = tpu.matmul %245, %246, %cst_84 {dimension_numbers = #tpu.dot_dimension_numbers<[1], [1], [0], [0], [0, 0, 1, 0], [], []>} : vector<8x8xf32>, vector<8x8xf32>, vector<8x8xf32> -> vector<8x8xf32>
    %cst_85 = arith.constant 0.353553385 : f32
    %249 = vector.broadcast %cst_85 : f32 to vector<8x8xf32>
    %250 = arith.mulf %248, %249 : vector<8x8xf32>
    %cst_86 = arith.constant dense<0xFF800000> : vector<8xf32>
    %251 = vector.multi_reduction <maximumf>, %250, %cst_86 [1] : vector<8x8xf32> to vector<8xf32>
    %252 = vector.shape_cast %251 : vector<8xf32> to vector<8x1xf32>
    %253 = vector.broadcast %252 : vector<8x1xf32> to vector<8x8xf32>
    %254 = arith.subf %250, %253 : vector<8x8xf32>
    %255 = math.exp %254 : vector<8x8xf32>
    %cst_87 = arith.constant dense<0.000000e+00> : vector<8xf32>
    %256 = vector.multi_reduction <add>, %255, %cst_87 [1] : vector<8x8xf32> to vector<8xf32>
    %257 = vector.shape_cast %256 : vector<8xf32> to vector<8x1xf32>
    %258 = tpu.reciprocal %257 {approx = true} : vector<8x1xf32> -> vector<8x1xf32>
    %259 = vector.broadcast %258 : vector<8x1xf32> to vector<8x8xf32>
    %260 = arith.mulf %255, %259 : vector<8x8xf32>
    %cst_88 = arith.constant dense<0.000000e+00> : vector<8x8xf32>
    %261 = tpu.matmul %260, %247, %cst_88 {dimension_numbers = #tpu.dot_dimension_numbers<[1], [0], [0], [1], [0, 0, 1, 1], [], []>} : vector<8x8xf32>, vector<8x8xf32>, vector<8x8xf32> -> vector<8x8xf32>
    %262 = vector.extract_strided_slice %227 {offsets = [0, 16], sizes = [8, 8], strides = [1, 1]} : vector<16x96xf32> to vector<8x8xf32>
    %263 = vector.extract_strided_slice %227 {offsets = [0, 48], sizes = [8, 8], strides = [1, 1]} : vector<16x96xf32> to vector<8x8xf32>
    %264 = vector.extract_strided_slice %227 {offsets = [0, 80], sizes = [8, 8], strides = [1, 1]} : vector<16x96xf32> to vector<8x8xf32>
    %cst_89 = arith.constant dense<0.000000e+00> : vector<8x8xf32>
    %265 = tpu.matmul %262, %263, %cst_89 {dimension_numbers = #tpu.dot_dimension_numbers<[1], [1], [0], [0], [0, 0, 1, 0], [], []>} : vector<8x8xf32>, vector<8x8xf32>, vector<8x8xf32> -> vector<8x8xf32>
    %cst_90 = arith.constant 0.353553385 : f32
    %266 = vector.broadcast %cst_90 : f32 to vector<8x8xf32>
    %267 = arith.mulf %265, %266 : vector<8x8xf32>
    %cst_91 = arith.constant dense<0xFF800000> : vector<8xf32>
    %268 = vector.multi_reduction <maximumf>, %267, %cst_91 [1] : vector<8x8xf32> to vector<8xf32>
    %269 = vector.shape_cast %268 : vector<8xf32> to vector<8x1xf32>
    %270 = vector.broadcast %269 : vector<8x1xf32> to vector<8x8xf32>
    %271 = arith.subf %267, %270 : vector<8x8xf32>
    %272 = math.exp %271 : vector<8x8xf32>
    %cst_92 = arith.constant dense<0.000000e+00> : vector<8xf32>
    %273 = vector.multi_reduction <add>, %272, %cst_92 [1] : vector<8x8xf32> to vector<8xf32>
    %274 = vector.shape_cast %273 : vector<8xf32> to vector<8x1xf32>
    %275 = tpu.reciprocal %274 {approx = true} : vector<8x1xf32> -> vector<8x1xf32>
    %276 = vector.broadcast %275 : vector<8x1xf32> to vector<8x8xf32>
    %277 = arith.mulf %272, %276 : vector<8x8xf32>
    %cst_93 = arith.constant dense<0.000000e+00> : vector<8x8xf32>
    %278 = tpu.matmul %277, %264, %cst_93 {dimension_numbers = #tpu.dot_dimension_numbers<[1], [0], [0], [1], [0, 0, 1, 1], [], []>} : vector<8x8xf32>, vector<8x8xf32>, vector<8x8xf32> -> vector<8x8xf32>
    %279 = vector.extract_strided_slice %227 {offsets = [0, 24], sizes = [8, 8], strides = [1, 1]} : vector<16x96xf32> to vector<8x8xf32>
    %280 = vector.extract_strided_slice %227 {offsets = [0, 56], sizes = [8, 8], strides = [1, 1]} : vector<16x96xf32> to vector<8x8xf32>
    %281 = vector.extract_strided_slice %227 {offsets = [0, 88], sizes = [8, 8], strides = [1, 1]} : vector<16x96xf32> to vector<8x8xf32>
    %cst_94 = arith.constant dense<0.000000e+00> : vector<8x8xf32>
    %282 = tpu.matmul %279, %280, %cst_94 {dimension_numbers = #tpu.dot_dimension_numbers<[1], [1], [0], [0], [0, 0, 1, 0], [], []>} : vector<8x8xf32>, vector<8x8xf32>, vector<8x8xf32> -> vector<8x8xf32>
    %cst_95 = arith.constant 0.353553385 : f32
    %283 = vector.broadcast %cst_95 : f32 to vector<8x8xf32>
    %284 = arith.mulf %282, %283 : vector<8x8xf32>
    %cst_96 = arith.constant dense<0xFF800000> : vector<8xf32>
    %285 = vector.multi_reduction <maximumf>, %284, %cst_96 [1] : vector<8x8xf32> to vector<8xf32>
    %286 = vector.shape_cast %285 : vector<8xf32> to vector<8x1xf32>
    %287 = vector.broadcast %286 : vector<8x1xf32> to vector<8x8xf32>
    %288 = arith.subf %284, %287 : vector<8x8xf32>
    %289 = math.exp %288 : vector<8x8xf32>
    %cst_97 = arith.constant dense<0.000000e+00> : vector<8xf32>
    %290 = vector.multi_reduction <add>, %289, %cst_97 [1] : vector<8x8xf32> to vector<8xf32>
    %291 = vector.shape_cast %290 : vector<8xf32> to vector<8x1xf32>
    %292 = tpu.reciprocal %291 {approx = true} : vector<8x1xf32> -> vector<8x1xf32>
    %293 = vector.broadcast %292 : vector<8x1xf32> to vector<8x8xf32>
    %294 = arith.mulf %289, %293 : vector<8x8xf32>
    %cst_98 = arith.constant dense<0.000000e+00> : vector<8x8xf32>
    %295 = tpu.matmul %294, %281, %cst_98 {dimension_numbers = #tpu.dot_dimension_numbers<[1], [0], [0], [1], [0, 0, 1, 1], [], []>} : vector<8x8xf32>, vector<8x8xf32>, vector<8x8xf32> -> vector<8x8xf32>
    %296 = tpu.concatenate %244, %261, %278, %295 in 1 : vector<8x8xf32>, vector<8x8xf32>, vector<8x8xf32>, vector<8x8xf32> -> vector<8x32xf32>
    %297 = vector.extract_strided_slice %227 {offsets = [8, 0], sizes = [8, 8], strides = [1, 1]} : vector<16x96xf32> to vector<8x8xf32>
    %298 = vector.extract_strided_slice %227 {offsets = [8, 32], sizes = [8, 8], strides = [1, 1]} : vector<16x96xf32> to vector<8x8xf32>
    %299 = vector.extract_strided_slice %227 {offsets = [8, 64], sizes = [8, 8], strides = [1, 1]} : vector<16x96xf32> to vector<8x8xf32>
    %cst_99 = arith.constant dense<0.000000e+00> : vector<8x8xf32>
    %300 = tpu.matmul %297, %298, %cst_99 {dimension_numbers = #tpu.dot_dimension_numbers<[1], [1], [0], [0], [0, 0, 1, 0], [], []>} : vector<8x8xf32>, vector<8x8xf32>, vector<8x8xf32> -> vector<8x8xf32>
    %cst_100 = arith.constant 0.353553385 : f32
    %301 = vector.broadcast %cst_100 : f32 to vector<8x8xf32>
    %302 = arith.mulf %300, %301 : vector<8x8xf32>
    %cst_101 = arith.constant dense<0xFF800000> : vector<8xf32>
    %303 = vector.multi_reduction <maximumf>, %302, %cst_101 [1] : vector<8x8xf32> to vector<8xf32>
    %304 = vector.shape_cast %303 : vector<8xf32> to vector<8x1xf32>
    %305 = vector.broadcast %304 : vector<8x1xf32> to vector<8x8xf32>
    %306 = arith.subf %302, %305 : vector<8x8xf32>
    %307 = math.exp %306 : vector<8x8xf32>
    %cst_102 = arith.constant dense<0.000000e+00> : vector<8xf32>
    %308 = vector.multi_reduction <add>, %307, %cst_102 [1] : vector<8x8xf32> to vector<8xf32>
    %309 = vector.shape_cast %308 : vector<8xf32> to vector<8x1xf32>
    %310 = tpu.reciprocal %309 {approx = true} : vector<8x1xf32> -> vector<8x1xf32>
    %311 = vector.broadcast %310 : vector<8x1xf32> to vector<8x8xf32>
    %312 = arith.mulf %307, %311 : vector<8x8xf32>
    %cst_103 = arith.constant dense<0.000000e+00> : vector<8x8xf32>
    %313 = tpu.matmul %312, %299, %cst_103 {dimension_numbers = #tpu.dot_dimension_numbers<[1], [0], [0], [1], [0, 0, 1, 1], [], []>} : vector<8x8xf32>, vector<8x8xf32>, vector<8x8xf32> -> vector<8x8xf32>
    %314 = vector.extract_strided_slice %227 {offsets = [8, 8], sizes = [8, 8], strides = [1, 1]} : vector<16x96xf32> to vector<8x8xf32>
    %315 = vector.extract_strided_slice %227 {offsets = [8, 40], sizes = [8, 8], strides = [1, 1]} : vector<16x96xf32> to vector<8x8xf32>
    %316 = vector.extract_strided_slice %227 {offsets = [8, 72], sizes = [8, 8], strides = [1, 1]} : vector<16x96xf32> to vector<8x8xf32>
    %cst_104 = arith.constant dense<0.000000e+00> : vector<8x8xf32>
    %317 = tpu.matmul %314, %315, %cst_104 {dimension_numbers = #tpu.dot_dimension_numbers<[1], [1], [0], [0], [0, 0, 1, 0], [], []>} : vector<8x8xf32>, vector<8x8xf32>, vector<8x8xf32> -> vector<8x8xf32>
    %cst_105 = arith.constant 0.353553385 : f32
    %318 = vector.broadcast %cst_105 : f32 to vector<8x8xf32>
    %319 = arith.mulf %317, %318 : vector<8x8xf32>
    %cst_106 = arith.constant dense<0xFF800000> : vector<8xf32>
    %320 = vector.multi_reduction <maximumf>, %319, %cst_106 [1] : vector<8x8xf32> to vector<8xf32>
    %321 = vector.shape_cast %320 : vector<8xf32> to vector<8x1xf32>
    %322 = vector.broadcast %321 : vector<8x1xf32> to vector<8x8xf32>
    %323 = arith.subf %319, %322 : vector<8x8xf32>
    %324 = math.exp %323 : vector<8x8xf32>
    %cst_107 = arith.constant dense<0.000000e+00> : vector<8xf32>
    %325 = vector.multi_reduction <add>, %324, %cst_107 [1] : vector<8x8xf32> to vector<8xf32>
    %326 = vector.shape_cast %325 : vector<8xf32> to vector<8x1xf32>
    %327 = tpu.reciprocal %326 {approx = true} : vector<8x1xf32> -> vector<8x1xf32>
    %328 = vector.broadcast %327 : vector<8x1xf32> to vector<8x8xf32>
    %329 = arith.mulf %324, %328 : vector<8x8xf32>
    %cst_108 = arith.constant dense<0.000000e+00> : vector<8x8xf32>
    %330 = tpu.matmul %329, %316, %cst_108 {dimension_numbers = #tpu.dot_dimension_numbers<[1], [0], [0], [1], [0, 0, 1, 1], [], []>} : vector<8x8xf32>, vector<8x8xf32>, vector<8x8xf32> -> vector<8x8xf32>
    %331 = vector.extract_strided_slice %227 {offsets = [8, 16], sizes = [8, 8], strides = [1, 1]} : vector<16x96xf32> to vector<8x8xf32>
    %332 = vector.extract_strided_slice %227 {offsets = [8, 48], sizes = [8, 8], strides = [1, 1]} : vector<16x96xf32> to vector<8x8xf32>
    %333 = vector.extract_strided_slice %227 {offsets = [8, 80], sizes = [8, 8], strides = [1, 1]} : vector<16x96xf32> to vector<8x8xf32>
    %cst_109 = arith.constant dense<0.000000e+00> : vector<8x8xf32>
    %334 = tpu.matmul %331, %332, %cst_109 {dimension_numbers = #tpu.dot_dimension_numbers<[1], [1], [0], [0], [0, 0, 1, 0], [], []>} : vector<8x8xf32>, vector<8x8xf32>, vector<8x8xf32> -> vector<8x8xf32>
    %cst_110 = arith.constant 0.353553385 : f32
    %335 = vector.broadcast %cst_110 : f32 to vector<8x8xf32>
    %336 = arith.mulf %334, %335 : vector<8x8xf32>
    %cst_111 = arith.constant dense<0xFF800000> : vector<8xf32>
    %337 = vector.multi_reduction <maximumf>, %336, %cst_111 [1] : vector<8x8xf32> to vector<8xf32>
    %338 = vector.shape_cast %337 : vector<8xf32> to vector<8x1xf32>
    %339 = vector.broadcast %338 : vector<8x1xf32> to vector<8x8xf32>
    %340 = arith.subf %336, %339 : vector<8x8xf32>
    %341 = math.exp %340 : vector<8x8xf32>
    %cst_112 = arith.constant dense<0.000000e+00> : vector<8xf32>
    %342 = vector.multi_reduction <add>, %341, %cst_112 [1] : vector<8x8xf32> to vector<8xf32>
    %343 = vector.shape_cast %342 : vector<8xf32> to vector<8x1xf32>
    %344 = tpu.reciprocal %343 {approx = true} : vector<8x1xf32> -> vector<8x1xf32>
    %345 = vector.broadcast %344 : vector<8x1xf32> to vector<8x8xf32>
    %346 = arith.mulf %341, %345 : vector<8x8xf32>
    %cst_113 = arith.constant dense<0.000000e+00> : vector<8x8xf32>
    %347 = tpu.matmul %346, %333, %cst_113 {dimension_numbers = #tpu.dot_dimension_numbers<[1], [0], [0], [1], [0, 0, 1, 1], [], []>} : vector<8x8xf32>, vector<8x8xf32>, vector<8x8xf32> -> vector<8x8xf32>
    %348 = vector.extract_strided_slice %227 {offsets = [8, 24], sizes = [8, 8], strides = [1, 1]} : vector<16x96xf32> to vector<8x8xf32>
    %349 = vector.extract_strided_slice %227 {offsets = [8, 56], sizes = [8, 8], strides = [1, 1]} : vector<16x96xf32> to vector<8x8xf32>
    %350 = vector.extract_strided_slice %227 {offsets = [8, 88], sizes = [8, 8], strides = [1, 1]} : vector<16x96xf32> to vector<8x8xf32>
    %cst_114 = arith.constant dense<0.000000e+00> : vector<8x8xf32>
    %351 = tpu.matmul %348, %349, %cst_114 {dimension_numbers = #tpu.dot_dimension_numbers<[1], [1], [0], [0], [0, 0, 1, 0], [], []>} : vector<8x8xf32>, vector<8x8xf32>, vector<8x8xf32> -> vector<8x8xf32>
    %cst_115 = arith.constant 0.353553385 : f32
    %352 = vector.broadcast %cst_115 : f32 to vector<8x8xf32>
    %353 = arith.mulf %351, %352 : vector<8x8xf32>
    %cst_116 = arith.constant dense<0xFF800000> : vector<8xf32>
    %354 = vector.multi_reduction <maximumf>, %353, %cst_116 [1] : vector<8x8xf32> to vector<8xf32>
    %355 = vector.shape_cast %354 : vector<8xf32> to vector<8x1xf32>
    %356 = vector.broadcast %355 : vector<8x1xf32> to vector<8x8xf32>
    %357 = arith.subf %353, %356 : vector<8x8xf32>
    %358 = math.exp %357 : vector<8x8xf32>
    %cst_117 = arith.constant dense<0.000000e+00> : vector<8xf32>
    %359 = vector.multi_reduction <add>, %358, %cst_117 [1] : vector<8x8xf32> to vector<8xf32>
    %360 = vector.shape_cast %359 : vector<8xf32> to vector<8x1xf32>
    %361 = tpu.reciprocal %360 {approx = true} : vector<8x1xf32> -> vector<8x1xf32>
    %362 = vector.broadcast %361 : vector<8x1xf32> to vector<8x8xf32>
    %363 = arith.mulf %358, %362 : vector<8x8xf32>
    %cst_118 = arith.constant dense<0.000000e+00> : vector<8x8xf32>
    %364 = tpu.matmul %363, %350, %cst_118 {dimension_numbers = #tpu.dot_dimension_numbers<[1], [0], [0], [1], [0, 0, 1, 1], [], []>} : vector<8x8xf32>, vector<8x8xf32>, vector<8x8xf32> -> vector<8x8xf32>
    %365 = tpu.concatenate %313, %330, %347, %364 in 1 : vector<8x8xf32>, vector<8x8xf32>, vector<8x8xf32>, vector<8x8xf32> -> vector<8x32xf32>
    %366 = tpu.concatenate %296, %365 in 0 : vector<8x32xf32>, vector<8x32xf32> -> vector<16x32xf32>
    %367 = vector.extract_strided_slice %213 {offsets = [0, 96], sizes = [32, 32], strides = [1, 1]} : vector<32x128xf32> to vector<32x32xf32>
    %cst_119 = arith.constant dense<0.000000e+00> : vector<16x32xf32>
    %368 = tpu.matmul %366, %367, %cst_119 {dimension_numbers = #tpu.dot_dimension_numbers<[1], [0], [0], [1], [0, 0, 1, 1], [], []>} : vector<16x32xf32>, vector<32x32xf32>, vector<16x32xf32> -> vector<16x32xf32>
    %369 = vector.broadcast %217 : vector<1x32xf32> to vector<16x32xf32>
    %370 = arith.addf %368, %369 : vector<16x32xf32>
    %371 = arith.addf %212, %370 : vector<16x32xf32>
    %cst_120 = arith.constant dense<0.000000e+00> : vector<16xf32>
    %372 = vector.multi_reduction <add>, %371, %cst_120 [1] : vector<16x32xf32> to vector<16xf32>
    %373 = vector.shape_cast %372 : vector<16xf32> to vector<16x1xf32>
    %374 = arith.mulf %371, %371 : vector<16x32xf32>
    %cst_121 = arith.constant dense<0.000000e+00> : vector<16xf32>
    %375 = vector.multi_reduction <add>, %374, %cst_121 [1] : vector<16x32xf32> to vector<16xf32>
    %376 = vector.shape_cast %375 : vector<16xf32> to vector<16x1xf32>
    %cst_122 = arith.constant 3.125000e-02 : f32
    %377 = vector.broadcast %cst_122 : f32 to vector<16x1xf32>
    %378 = arith.mulf %373, %377 : vector<16x1xf32>
    %cst_123 = arith.constant 3.125000e-02 : f32
    %379 = vector.broadcast %cst_123 : f32 to vector<16x1xf32>
    %380 = arith.mulf %376, %379 : vector<16x1xf32>
    %381 = arith.mulf %378, %378 : vector<16x1xf32>
    %382 = arith.subf %380, %381 : vector<16x1xf32>
    %383 = vector.broadcast %378 : vector<16x1xf32> to vector<16x32xf32>
    %384 = arith.subf %371, %383 : vector<16x32xf32>
    %cst_124 = arith.constant 9.99999974E-6 : f32
    %385 = vector.broadcast %cst_124 : f32 to vector<16x1xf32>
    %386 = arith.addf %382, %385 : vector<16x1xf32>
    %387 = math.rsqrt %386 : vector<16x1xf32>
    %388 = vector.broadcast %387 : vector<16x1xf32> to vector<16x32xf32>
    %389 = arith.mulf %384, %388 : vector<16x32xf32>
    %390 = vector.broadcast %218 : vector<1x32xf32> to vector<16x32xf32>
    %391 = arith.mulf %389, %390 : vector<16x32xf32>
    %392 = vector.broadcast %219 : vector<1x32xf32> to vector<16x32xf32>
    %393 = arith.addf %391, %392 : vector<16x32xf32>
    %cst_125 = arith.constant dense<0.000000e+00> : vector<16x64xf32>
    %394 = tpu.matmul %393, %214, %cst_125 {dimension_numbers = #tpu.dot_dimension_numbers<[1], [0], [0], [1], [0, 0, 1, 1], [], []>} : vector<16x32xf32>, vector<32x64xf32>, vector<16x64xf32> -> vector<16x64xf32>
    %395 = vector.broadcast %220 : vector<1x64xf32> to vector<16x64xf32>
    %396 = arith.addf %394, %395 : vector<16x64xf32>
    %cst_126 = arith.constant 0.000000e+00 : f32
    %397 = vector.broadcast %cst_126 : f32 to vector<16x64xf32>
    %398 = arith.maximumf %396, %397 : vector<16x64xf32>
    %cst_127 = arith.constant dense<0.000000e+00> : vector<16x32xf32>
    %399 = tpu.matmul %398, %215, %cst_127 {dimension_numbers = #tpu.dot_dimension_numbers<[1], [0], [0], [1], [0, 0, 1, 1], [], []>} : vector<16x64xf32>, vector<64x32xf32>, vector<16x32xf32> -> vector<16x32xf32>
    %400 = vector.broadcast %221 : vector<1x32xf32> to vector<16x32xf32>
    %401 = arith.addf %399, %400 : vector<16x32xf32>
    %402 = arith.addf %393, %401 : vector<16x32xf32>
    %cst_128 = arith.constant dense<0.000000e+00> : vector<16xf32>
    %403 = vector.multi_reduction <add>, %402, %cst_128 [1] : vector<16x32xf32> to vector<16xf32>
    %404 = vector.shape_cast %403 : vector<16xf32> to vector<16x1xf32>
    %405 = arith.mulf %402, %402 : vector<16x32xf32>
    %cst_129 = arith.constant dense<0.000000e+00> : vector<16xf32>
    %406 = vector.multi_reduction <add>, %405, %cst_129 [1] : vector<16x32xf32> to vector<16xf32>
    %407 = vector.shape_cast %406 : vector<16xf32> to vector<16x1xf32>
    %cst_130 = arith.constant 3.125000e-02 : f32
    %408 = vector.broadcast %cst_130 : f32 to vector<16x1xf32>
    %409 = arith.mulf %404, %408 : vector<16x1xf32>
    %cst_131 = arith.constant 3.125000e-02 : f32
    %410 = vector.broadcast %cst_131 : f32 to vector<16x1xf32>
    %411 = arith.mulf %407, %410 : vector<16x1xf32>
    %412 = arith.mulf %409, %409 : vector<16x1xf32>
    %413 = arith.subf %411, %412 : vector<16x1xf32>
    %414 = vector.broadcast %409 : vector<16x1xf32> to vector<16x32xf32>
    %415 = arith.subf %402, %414 : vector<16x32xf32>
    %cst_132 = arith.constant 9.99999974E-6 : f32
    %416 = vector.broadcast %cst_132 : f32 to vector<16x1xf32>
    %417 = arith.addf %413, %416 : vector<16x1xf32>
    %418 = math.rsqrt %417 : vector<16x1xf32>
    %419 = vector.broadcast %418 : vector<16x1xf32> to vector<16x32xf32>
    %420 = arith.mulf %415, %419 : vector<16x32xf32>
    %421 = vector.broadcast %222 : vector<1x32xf32> to vector<16x32xf32>
    %422 = arith.mulf %420, %421 : vector<16x32xf32>
    %423 = vector.broadcast %223 : vector<1x32xf32> to vector<16x32xf32>
    %424 = arith.addf %422, %423 : vector<16x32xf32>
    %c272 = arith.constant 272 : index
    %c0_133 = arith.constant 0 : index
    %425 = vector.load %arg2[%c272, %c0_133] : memref<344x128xf32, #tpu.memory_space<vmem>>, vector<32x32xf32>
    %c304 = arith.constant 304 : index
    %c0_134 = arith.constant 0 : index
    %426 = vector.load %arg2[%c304, %c0_134] : memref<344x128xf32, #tpu.memory_space<vmem>>, vector<32x8xf32>
    %c336 = arith.constant 336 : index
    %c0_135 = arith.constant 0 : index
    %427 = vector.load %arg2[%c336, %c0_135] : memref<344x128xf32, #tpu.memory_space<vmem>>, vector<1x32xf32>
    %c337 = arith.constant 337 : index
    %c0_136 = arith.constant 0 : index
    %428 = vector.load %arg2[%c337, %c0_136] : memref<344x128xf32, #tpu.memory_space<vmem>>, vector<1x32xf32>
    %c338 = arith.constant 338 : index
    %c0_137 = arith.constant 0 : index
    %429 = vector.load %arg2[%c338, %c0_137] : memref<344x128xf32, #tpu.memory_space<vmem>>, vector<1x32xf32>
    %c339 = arith.constant 339 : index
    %c0_138 = arith.constant 0 : index
    %430 = vector.load %arg2[%c339, %c0_138] : memref<344x128xf32, #tpu.memory_space<vmem>>, vector<1x32xf32>
    %c340 = arith.constant 340 : index
    %c0_139 = arith.constant 0 : index
    %431 = vector.load %arg2[%c340, %c0_139] : memref<344x128xf32, #tpu.memory_space<vmem>>, vector<1x32xf32>
    %c341 = arith.constant 341 : index
    %c0_140 = arith.constant 0 : index
    %432 = vector.load %arg2[%c341, %c0_140] : memref<344x128xf32, #tpu.memory_space<vmem>>, vector<1x8xf32>
    %cst_141 = arith.constant dense<0.000000e+00> : vector<16xf32>
    %433 = vector.multi_reduction <add>, %424, %cst_141 [1] : vector<16x32xf32> to vector<16xf32>
    %434 = vector.shape_cast %433 : vector<16xf32> to vector<16x1xf32>
    %435 = arith.mulf %424, %424 : vector<16x32xf32>
    %cst_142 = arith.constant dense<0.000000e+00> : vector<16xf32>
    %436 = vector.multi_reduction <add>, %435, %cst_142 [1] : vector<16x32xf32> to vector<16xf32>
    %437 = vector.shape_cast %436 : vector<16xf32> to vector<16x1xf32>
    %cst_143 = arith.constant 3.125000e-02 : f32
    %438 = vector.broadcast %cst_143 : f32 to vector<16x1xf32>
    %439 = arith.mulf %434, %438 : vector<16x1xf32>
    %cst_144 = arith.constant 3.125000e-02 : f32
    %440 = vector.broadcast %cst_144 : f32 to vector<16x1xf32>
    %441 = arith.mulf %437, %440 : vector<16x1xf32>
    %442 = arith.mulf %439, %439 : vector<16x1xf32>
    %443 = arith.subf %441, %442 : vector<16x1xf32>
    %444 = vector.broadcast %439 : vector<16x1xf32> to vector<16x32xf32>
    %445 = arith.subf %424, %444 : vector<16x32xf32>
    %cst_145 = arith.constant 9.99999974E-6 : f32
    %446 = vector.broadcast %cst_145 : f32 to vector<16x1xf32>
    %447 = arith.addf %443, %446 : vector<16x1xf32>
    %448 = math.rsqrt %447 : vector<16x1xf32>
    %449 = vector.broadcast %448 : vector<16x1xf32> to vector<16x32xf32>
    %450 = arith.mulf %445, %449 : vector<16x32xf32>
    %451 = vector.broadcast %427 : vector<1x32xf32> to vector<16x32xf32>
    %452 = arith.mulf %450, %451 : vector<16x32xf32>
    %453 = vector.broadcast %428 : vector<1x32xf32> to vector<16x32xf32>
    %454 = arith.addf %452, %453 : vector<16x32xf32>
    %455 = vector.extract_strided_slice %454 {offsets = [0, 0], sizes = [8, 32], strides = [1, 1]} : vector<16x32xf32> to vector<8x32xf32>
    %cst_146 = arith.constant dense<0.000000e+00> : vector<32xf32>
    %456 = vector.multi_reduction <add>, %455, %cst_146 [0] : vector<8x32xf32> to vector<32xf32>
    %457 = vector.shape_cast %456 : vector<32xf32> to vector<1x32xf32>
    %cst_147 = arith.constant 8.000000e+00 : f32
    %458 = vector.broadcast %cst_147 : f32 to vector<1x32xf32>
    %459 = arith.divf %457, %458 : vector<1x32xf32>
    %460 = vector.extract_strided_slice %454 {offsets = [8, 0], sizes = [8, 32], strides = [1, 1]} : vector<16x32xf32> to vector<8x32xf32>
    %cst_148 = arith.constant dense<0.000000e+00> : vector<32xf32>
    %461 = vector.multi_reduction <add>, %460, %cst_148 [0] : vector<8x32xf32> to vector<32xf32>
    %462 = vector.shape_cast %461 : vector<32xf32> to vector<1x32xf32>
    %cst_149 = arith.constant 8.000000e+00 : f32
    %463 = vector.broadcast %cst_149 : f32 to vector<1x32xf32>
    %464 = arith.divf %462, %463 : vector<1x32xf32>
    %465 = tpu.concatenate %459, %464 in 0 : vector<1x32xf32>, vector<1x32xf32> -> vector<2x32xf32>
    %cst_150 = arith.constant dense<0.000000e+00> : vector<2x32xf32>
    %466 = tpu.matmul %465, %425, %cst_150 {dimension_numbers = #tpu.dot_dimension_numbers<[1], [0], [0], [1], [0, 0, 1, 1], [], []>} : vector<2x32xf32>, vector<32x32xf32>, vector<2x32xf32> -> vector<2x32xf32>
    %467 = vector.broadcast %429 : vector<1x32xf32> to vector<2x32xf32>
    %468 = arith.addf %466, %467 : vector<2x32xf32>
    %469 = vector.broadcast %430 : vector<1x32xf32> to vector<2x32xf32>
    %470 = arith.mulf %468, %469 : vector<2x32xf32>
    %471 = vector.broadcast %431 : vector<1x32xf32> to vector<2x32xf32>
    %472 = arith.addf %470, %471 : vector<2x32xf32>
    %cst_151 = arith.constant 0.000000e+00 : f32
    %473 = vector.broadcast %cst_151 : f32 to vector<2x32xf32>
    %474 = arith.maximumf %472, %473 : vector<2x32xf32>
    %cst_152 = arith.constant dense<0.000000e+00> : vector<2x8xf32>
    %475 = tpu.matmul %474, %426, %cst_152 {dimension_numbers = #tpu.dot_dimension_numbers<[1], [0], [0], [1], [0, 0, 1, 1], [], []>} : vector<2x32xf32>, vector<32x8xf32>, vector<2x8xf32> -> vector<2x8xf32>
    %476 = vector.broadcast %432 : vector<1x8xf32> to vector<2x8xf32>
    %477 = arith.addf %475, %476 : vector<2x8xf32>
    %cst_153 = arith.constant dense<0xFF800000> : vector<2xf32>
    %478 = vector.multi_reduction <maximumf>, %477, %cst_153 [1] : vector<2x8xf32> to vector<2xf32>
    %479 = vector.shape_cast %478 : vector<2xf32> to vector<2x1xf32>
    %480 = vector.broadcast %479 : vector<2x1xf32> to vector<2x8xf32>
    %481 = arith.subf %477, %480 : vector<2x8xf32>
    %482 = math.exp %481 : vector<2x8xf32>
    %cst_154 = arith.constant dense<0.000000e+00> : vector<2xf32>
    %483 = vector.multi_reduction <add>, %482, %cst_154 [1] : vector<2x8xf32> to vector<2xf32>
    %484 = vector.shape_cast %483 : vector<2xf32> to vector<2x1xf32>
    %485 = math.log %484 : vector<2x1xf32>
    %486 = vector.broadcast %485 : vector<2x1xf32> to vector<2x8xf32>
    %487 = arith.subf %481, %486 : vector<2x8xf32>
    %cst_155 = arith.constant 0.000000e+00 : f32
    %488 = vector.broadcast %cst_155 : f32 to vector<8x128xf32>
    %c0_156 = arith.constant 0 : index
    %c0_157 = arith.constant 0 : index
    %489 = vector.load %arg3[%c0_156, %c0_157] : memref<8x128xf32, #tpu.memory_space<vmem>>, vector<8x128xf32>
    tpu.vector_store %arg3[%c0_156, %c0_157], %488 {strides = array<i32>} : memref<8x128xf32, #tpu.memory_space<vmem>>, vector<8x128xf32>,
    %c0_158 = arith.constant 0 : index
    %c0_159 = arith.constant 0 : index
    %490 = vector.load %arg3[%c0_158, %c0_159] : memref<8x128xf32, #tpu.memory_space<vmem>>, vector<2x8xf32>
    tpu.vector_store %arg3[%c0_158, %c0_159], %487 {strides = array<i32>} : memref<8x128xf32, #tpu.memory_space<vmem>>, vector<2x8xf32>,
    return
  }
  func.func @transform_0(%arg0: i32) -> (i32, i32) {
    %c0_i32 = arith.constant 0 : i32
    %c0_i32_0 = arith.constant 0 : i32
    %c0_i32_1 = arith.constant 0 : i32
    return %c0_i32, %c0_i32_0 : i32, i32
  }
  func.func @transform_1(%arg0: i32) -> (i32, i32) {
    %c0_i32 = arith.constant 0 : i32
    %c0_i32_0 = arith.constant 0 : i32
    %c0_i32_1 = arith.constant 0 : i32
    return %c0_i32, %c0_i32_0 : i32, i32
  }
  func.func @transform_2(%arg0: i32) -> (i32, i32) {
    %c0_i32 = arith.constant 0 : i32
    %c0_i32_0 = arith.constant 0 : i32
    %c0_i32_1 = arith.constant 0 : i32
    return %c0_i32, %c0_i32_0 : i32, i32
  }
}

</mosaic_0001>

<llo_original>
// kernel: transformer_forward.1
$region0: #{transformer_forward.1}
  #allocation0 [shape = 'u32[]', space=smem, size = 0x4, offset = 0x4, fixed_abs, tag = 'smem constant byte address 0x4 - core index']
  #allocation1 [shape = 'u32[144,128]{1,0:T(1,128)}', space=vmem, size = 0x12000, scoped, tag = 'internal scratch']
  %s0 = inlined_call_operand.vmem [shape: f32[16,32], index: 0, kind: input, shape index: {}]
  %s1 = inlined_call_operand.vmem [shape: f32[344,128], index: 1, kind: input, shape index: {}]
  %s2 = inlined_call_operand.vmem [shape: f32[8,128], index: 2, kind: output, shape index: {}]
  %s3 = sld [smem:[#allocation0]]
  $region18: #{transformer_forward.1} parent=0
    _
  %s5 = ssub.s32 1, %s3
  %s6 = scalar_select 0, %s5, %s3
  // Predicated region
  $region2: #{transformer_forward.1} parent=0 // pred_check
    _
  $region3: #{transformer_forward.1} parent=0 // pred_check_branch
    %8 = sbr.rel (0) target = $region5
  $region4: #{transformer_forward.1} parent=0 // pred_region
    _
  $region5: #{transformer_forward.1} parent=0 // pred_fallthru
    _
  // Predicated region
  $region6: #{transformer_forward.1} parent=0 // pred_check
    _
  $region7: #{transformer_forward.1} parent=0 // pred_check_branch
    %10 = sbr.rel (0) target = $region9
  $region8: #{transformer_forward.1} parent=0 // pred_region
    _
  $region9: #{transformer_forward.1} parent=0 // pred_fallthru
    _
  %v11 = vld [vmem:[%s0] sm:$0xff]
  %v12 = vld [vmem:[%s0 + $0x8] sm:$0xff]
  %v13 = vld [vmem:[%s1] sm:$0xff]
  %v14 = vld [vmem:[%s1 + $0x8] sm:$0xff]
  %v15 = vld [vmem:[%s1 + $0x10] sm:$0xff]
  %v16 = vld [vmem:[%s1 + $0x18] sm:$0xff]
  %v17 = vld [vmem:[%s1 + $0x20] sm:$0xff]
  %v18 = vld [vmem:[%s1 + $0x28] sm:$0xff]
  %v19 = vld [vmem:[%s1 + $0x30] sm:$0xff]
  %v20 = vld [vmem:[%s1 + $0x38] sm:$0xff]
  %v21 = vld [vmem:[%s1 + $0x40] sm:$0xff]
  %v22 = vld [vmem:[%s1 + $0x48] sm:$0xff]
  %v23 = vld [vmem:[%s1 + $0x50] sm:$0xff]
  %v24 = vld [vmem:[%s1 + $0x58] sm:$0xff]
  %v25 = vld [vmem:[%s1 + $0x60] sm:$0xff]
  %v26 = vld [vmem:[%s1 + $0x68] sm:$0xff]
  %v27 = vld [vmem:[%s1 + $0x70] sm:$0xff]
  %v28 = vld [vmem:[%s1 + $0x78] sm:$0xff]
  %v29 = vld [vmem:[%s1 + $0x80] sm:$0x1]
  %v30 = vld [vmem:[%s1 + $0x81] sm:$0x1]
  %v31 = vld [vmem:[%s1 + $0x82] sm:$0x1]
  %v32 = vld [vmem:[%s1 + $0x83] sm:$0x1]
  %v33 = vld [vmem:[%s1 + $0x84] sm:$0x1]
  %v34 = vld [vmem:[%s1 + $0x85] sm:$0x1]
  %v35 = vld [vmem:[%s1 + $0x86] sm:$0x1]
  %v36 = vld [vmem:[%s1 + $0x87] sm:$0x1]
  %v37 = vlaneseq
  %v38 = vshrl.u32 %v37, 7
  %v39 = vsub.s32 0, %v38
  %v40 = vrot.slane %v29, %v39
  %vm41 = vcmask 261120
  %v43 = vsel %vm41, %v11, 0
  %v46 = vsel %vm41, %v12, 0
  %48 = vmatprep.subr.mxu0 0.0
  %49 = vmatpush1.msra.mxu0 %v13
  %50 = vmatprep.subr.mxu0 0.0
  %51 = vmatpush1.msra.mxu0 %v14
  %52 = vmatprep.subr.mxu0 0.0
  %53 = vmatpush1.msra.mxu0 %v15
  %54 = vmatprep.subr.mxu0 0.0
  %55 = vmatpush1.msra.mxu0 %v16
  %56 = vmatprep.subr.mxu0 0.0
  %57 = vmatpush1.msra.mxu0 0.0
  %58 = vmatprep.subr.mxu0 0.0
  %59 = vmatpush1.msra.mxu0 0.0
  %60 = vmatprep.subr.mxu0 0.0
  %61 = vmatpush1.msra.mxu0 0.0
  %62 = vmatprep.subr.mxu0 0.0
  %63 = vmatpush1.msra.mxu0 0.0
  %64 = vmatprep.subr.mxu0 0.0
  %65 = vmatpush1.msra.mxu0 0.0
  %66 = vmatprep.subr.mxu0 0.0
  %67 = vmatpush1.msra.mxu0 0.0
  %68 = vmatprep.subr.mxu0 0.0
  %69 = vmatpush1.msra.mxu0 0.0
  %70 = vmatprep.subr.mxu0 0.0
  %71 = vmatpush1.msra.mxu0 0.0
  %72 = vmatprep.subr.mxu0 0.0
  %73 = vmatpush1.msra.mxu0 0.0
  %74 = vmatprep.subr.mxu0 0.0
  %75 = vmatpush1.msra.mxu0 0.0
  %76 = vmatprep.subr.mxu0 0.0
  %77 = vmatpush1.msra.mxu0 0.0
  %78 = vmatprep.subr.mxu0 0.0
  %79 = vmatpush1.msra.mxu0 0.0
  %80 = vmatprep.subr.mxu0 0.0
  %81 = vmatpush1.msra.mxu0 0.0
  %82 = vmatprep.subr.mxu0 0.0
  %83 = vmatpush1.msra.mxu0 0.0
  %84 = vmatprep.subr.mxu0 0.0
  %85 = vmatpush1.msra.mxu0 0.0
  %86 = vmatprep.subr.mxu0 0.0
  %87 = vmatpush1.msra.mxu0 0.0
  %88 = vmatprep.subr.mxu0 0.0
  %89 = vmatpush1.msra.mxu0 0.0
  %90 = vmatprep.subr.mxu0 0.0
  %91 = vmatpush1.msra.mxu0 0.0
  %92 = vmatprep.subr.mxu0 0.0
  %93 = vmatpush1.msra.mxu0 0.0
  %94 = vmatprep.subr.mxu0 0.0
  %95 = vmatpush1.msra.mxu0 0.0
  %96 = vmatprep.subr.mxu0 0.0
  %97 = vmatpush1.msra.mxu0 0.0
  %98 = vmatprep.subr.mxu0 0.0
  %99 = vmatpush1.msra.mxu0 0.0
  %100 = vmatprep.subr.mxu0 0.0
  %101 = vmatpush1.msra.mxu0 0.0
  %102 = vmatprep.subr.mxu0 0.0
  %103 = vmatpush1.msra.mxu0 0.0
  %104 = vmatprep.subr.mxu0 0.0
  %105 = vmatpush1.msra.mxu0 0.0
  %106 = vmatprep.subr.mxu0 0.0
  %107 = vmatpush1.msra.mxu0 0.0
  %108 = vmatprep.subr.mxu0 0.0
  %109 = vmatpush1.msra.mxu0 0.0
  %110 = vmatprep.subr.mxu0 0.0
  %111 = vmatpush1.msra.mxu0 0.0
  %112 = vmatprep.mubr.f32.mxu0 0.0
  %113 = vmatmul.mubr.f32.gmra.mrb[0].mxu0 %v43
  %v114 = vpop.f32.mrb[0].mxu0
  %v115 = vadd.f32 %v40, %v114
  %v116 = vpop.f32.mrb[0].mxu0
  %117 = vmatprep.mubr.f32.mxu0 0.0
  %118 = vmatmul.mubr.f32.gmra.mrb[0].mxu0 %v46
  %v119 = vpop.f32.mrb[0].mxu0
  %v120 = vadd.f32 %v40, %v119
  %v121 = vpop.f32.mrb[0].mxu0
  %122 = vdwg.mxu0
  %124 = vrot.lane.b32.xlu0 %v115, 96
  %v125 = vpop.permute.xlu0 %124
  %vm126 = vcmask 64512
  %v127 = vsel %vm126, %v115, 0
  %v129 = vsel %vm126, %v125, 0
  %131 = vmatprep.subr.mxu0 0.0
  %132 = vmatpush1.xpose.msra.mxu0 %v129
  %133 = vmatprep.subr.mxu0 0.0
  %134 = vmatpush1.xpose.msra.mxu0 0.0
  %135 = vmatprep.subr.mxu0 0.0
  %136 = vmatpush1.xpose.msra.mxu0 0.0
  %137 = vmatprep.subr.mxu0 0.0
  %138 = vmatpush1.xpose.msra.mxu0 0.0
  %139 = vmatprep.subr.mxu0 0.0
  %140 = vmatpush1.xpose.msra.mxu0 0.0
  %141 = vmatprep.subr.mxu0 0.0
  %142 = vmatpush1.xpose.msra.mxu0 0.0
  %143 = vmatprep.subr.mxu0 0.0
  %144 = vmatpush1.xpose.msra.mxu0 0.0
  %145 = vmatprep.subr.mxu0 0.0
  %146 = vmatpush1.xpose.msra.mxu0 0.0
  %147 = vmatprep.subr.mxu0 0.0
  %148 = vmatpush1.xpose.msra.mxu0 0.0
  %149 = vmatprep.subr.mxu0 0.0
  %150 = vmatpush1.xpose.msra.mxu0 0.0
  %151 = vmatprep.subr.mxu0 0.0
  %152 = vmatpush1.xpose.msra.mxu0 0.0
  %153 = vmatprep.subr.mxu0 0.0
  %154 = vmatpush1.xpose.msra.mxu0 0.0
  %155 = vmatprep.subr.mxu0 0.0
  %156 = vmatpush1.xpose.msra.mxu0 0.0
  %157 = vmatprep.subr.mxu0 0.0
  %158 = vmatpush1.xpose.msra.mxu0 0.0
  %159 = vmatprep.subr.mxu0 0.0
  %160 = vmatpush1.xpose.msra.mxu0 0.0
  %161 = vmatprep.subr.mxu0 0.0
  %162 = vmatpush1.xpose.msra.mxu0 0.0
  %163 = vmatprep.subr.mxu0 0.0
  %164 = vmatpush1.xpose.msra.mxu0 0.0
  %165 = vmatprep.subr.mxu0 0.0
  %166 = vmatpush1.xpose.msra.mxu0 0.0
  %167 = vmatprep.subr.mxu0 0.0
  %168 = vmatpush1.xpose.msra.mxu0 0.0
  %169 = vmatprep.subr.mxu0 0.0
  %170 = vmatpush1.xpose.msra.mxu0 0.0
  %171 = vmatprep.subr.mxu0 0.0
  %172 = vmatpush1.xpose.msra.mxu0 0.0
  %173 = vmatprep.subr.mxu0 0.0
  %174 = vmatpush1.xpose.msra.mxu0 0.0
  %175 = vmatprep.subr.mxu0 0.0
  %176 = vmatpush1.xpose.msra.mxu0 0.0
  %177 = vmatprep.subr.mxu0 0.0
  %178 = vmatpush1.xpose.msra.mxu0 0.0
  %179 = vmatprep.subr.mxu0 0.0
  %180 = vmatpush1.xpose.msra.mxu0 0.0
  %181 = vmatprep.subr.mxu0 0.0
  %182 = vmatpush1.xpose.msra.mxu0 0.0
  %183 = vmatprep.subr.mxu0 0.0
  %184 = vmatpush1.xpose.msra.mxu0 0.0
  %185 = vmatprep.subr.mxu0 0.0
  %186 = vmatpush1.xpose.msra.mxu0 0.0
  %187 = vmatprep.subr.mxu0 0.0
  %188 = vmatpush1.xpose.msra.mxu0 0.0
  %189 = vmatprep.subr.mxu0 0.0
  %190 = vmatpush1.xpose.msra.mxu0 0.0
  %191 = vmatprep.subr.mxu0 0.0
  %192 = vmatpush1.xpose.msra.mxu0 0.0
  %193 = vmatprep.subr.mxu0 0.0
  %194 = vmatpush1.xpose.msra.mxu0 0.0
  %195 = vmatprep.mubr.f32.mxu0 0.0
  %196 = vmatmul.mubr.f32.gmra.mrb[0].mxu0 %v127
  %v197 = vpop.f32.mrb[0].mxu0
  %v198 = vadd.f32 0.0, %v197
  %v199 = vpop.f32.mrb[0].mxu0
  %200 = vdwg.mxu0
  %v201 = vmul.f32 %v198, 0.35355338
  %v202 = vsel %vm126, %v201, -inf
  %203 = vmax.xlane.f32.xlu0 %v202
  %v204 = vpop.xlane.xlu0 %203
  %v205 = vsub.f32 %v201, %v204
  %v206 = vmul.f32 %v205, 1.442695
  %v207 = vpow.pop %v206
  %v208 = vsel %vm126, %v207, 0.0
  %209 = vadd.xlane.f32.xlu0 %v208
  %v210 = vpop.xlane.xlu0 %209
  %v211 = vrcp.pop %v210
  %v212 = vmul.f32 %v207, %v211
  %213 = vrot.lane.b32.xlu0 %v115, 64
  %v214 = vpop.permute.xlu0 %213
  %v217 = vsel %vm126, %v212, 0
  %219 = vmatprep.subr.mxu0 0.0
  %220 = vmatpush1.msra.mxu0 %v214
  %221 = vmatprep.subr.mxu0 0.0
  %222 = vmatpush1.msra.mxu0 0.0
  %223 = vmatprep.subr.mxu0 0.0
  %224 = vmatpush1.msra.mxu0 0.0
  %225 = vmatprep.subr.mxu0 0.0
  %226 = vmatpush1.msra.mxu0 0.0
  %227 = vmatprep.subr.mxu0 0.0
  %228 = vmatpush1.msra.mxu0 0.0
  %229 = vmatprep.subr.mxu0 0.0
  %230 = vmatpush1.msra.mxu0 0.0
  %231 = vmatprep.subr.mxu0 0.0
  %232 = vmatpush1.msra.mxu0 0.0
  %233 = vmatprep.subr.mxu0 0.0
  %234 = vmatpush1.msra.mxu0 0.0
  %235 = vmatprep.subr.mxu0 0.0
  %236 = vmatpush1.msra.mxu0 0.0
  %237 = vmatprep.subr.mxu0 0.0
  %238 = vmatpush1.msra.mxu0 0.0
  %239 = vmatprep.subr.mxu0 0.0
  %240 = vmatpush1.msra.mxu0 0.0
  %241 = vmatprep.subr.mxu0 0.0
  %242 = vmatpush1.msra.mxu0 0.0
  %243 = vmatprep.subr.mxu0 0.0
  %244 = vmatpush1.msra.mxu0 0.0
  %245 = vmatprep.subr.mxu0 0.0
  %246 = vmatpush1.msra.mxu0 0.0
  %247 = vmatprep.subr.mxu0 0.0
  %248 = vmatpush1.msra.mxu0 0.0
  %249 = vmatprep.subr.mxu0 0.0
  %250 = vmatpush1.msra.mxu0 0.0
  %251 = vmatprep.subr.mxu0 0.0
  %252 = vmatpush1.msra.mxu0 0.0
  %253 = vmatprep.subr.mxu0 0.0
  %254 = vmatpush1.msra.mxu0 0.0
  %255 = vmatprep.subr.mxu0 0.0
  %256 = vmatpush1.msra.mxu0 0.0
  %257 = vmatprep.subr.mxu0 0.0
  %258 = vmatpush1.msra.mxu0 0.0
  %259 = vmatprep.subr.mxu0 0.0
  %260 = vmatpush1.msra.mxu0 0.0
  %261 = vmatprep.subr.mxu0 0.0
  %262 = vmatpush1.msra.mxu0 0.0
  %263 = vmatprep.subr.mxu0 0.0
  %264 = vmatpush1.msra.mxu0 0.0
  %265 = vmatprep.subr.mxu0 0.0
  %266 = vmatpush1.msra.mxu0 0.0
  %267 = vmatprep.subr.mxu0 0.0
  %268 = vmatpush1.msra.mxu0 0.0
  %269 = vmatprep.subr.mxu0 0.0
  %270 = vmatpush1.msra.mxu0 0.0
  %271 = vmatprep.subr.mxu0 0.0
  %272 = vmatpush1.msra.mxu0 0.0
  %273 = vmatprep.subr.mxu0 0.0
  %274 = vmatpush1.msra.mxu0 0.0
  %275 = vmatprep.subr.mxu0 0.0
  %276 = vmatpush1.msra.mxu0 0.0
  %277 = vmatprep.subr.mxu0 0.0
  %278 = vmatpush1.msra.mxu0 0.0
  %279 = vmatprep.subr.mxu0 0.0
  %280 = vmatpush1.msra.mxu0 0.0
  %281 = vmatprep.subr.mxu0 0.0
  %282 = vmatpush1.msra.mxu0 0.0
  %283 = vmatprep.mubr.f32.mxu0 0.0
  %284 = vmatmul.mubr.f32.gmra.mrb[0].mxu0 %v217
  %v285 = vpop.f32.mrb[0].mxu0
  %v286 = vadd.f32 0.0, %v285
  %v287 = vpop.f32.mrb[0].mxu0
  %288 = vdwg.mxu0
  %289 = vrot.lane.b32.xlu0 %v115, 120
  %v290 = vpop.permute.xlu0 %289
  %291 = vrot.lane.b32.xlu0 %v115, 88
  %v292 = vpop.permute.xlu0 %291
  %v293 = vsel %vm126, %v290, 0
  %v295 = vsel %vm126, %v292, 0
  %297 = vmatprep.subr.mxu0 0.0
  %298 = vmatpush1.xpose.msra.mxu0 %v295
  %299 = vmatprep.subr.mxu0 0.0
  %300 = vmatpush1.xpose.msra.mxu0 0.0
  %301 = vmatprep.subr.mxu0 0.0
  %302 = vmatpush1.xpose.msra.mxu0 0.0
  %303 = vmatprep.subr.mxu0 0.0
  %304 = vmatpush1.xpose.msra.mxu0 0.0
  %305 = vmatprep.subr.mxu0 0.0
  %306 = vmatpush1.xpose.msra.mxu0 0.0
  %307 = vmatprep.subr.mxu0 0.0
  %308 = vmatpush1.xpose.msra.mxu0 0.0
  %309 = vmatprep.subr.mxu0 0.0
  %310 = vmatpush1.xpose.msra.mxu0 0.0
  %311 = vmatprep.subr.mxu0 0.0
  %312 = vmatpush1.xpose.msra.mxu0 0.0
  %313 = vmatprep.subr.mxu0 0.0
  %314 = vmatpush1.xpose.msra.mxu0 0.0
  %315 = vmatprep.subr.mxu0 0.0
  %316 = vmatpush1.xpose.msra.mxu0 0.0
  %317 = vmatprep.subr.mxu0 0.0
  %318 = vmatpush1.xpose.msra.mxu0 0.0
  %319 = vmatprep.subr.mxu0 0.0
  %320 = vmatpush1.xpose.msra.mxu0 0.0
  %321 = vmatprep.subr.mxu0 0.0
  %322 = vmatpush1.xpose.msra.mxu0 0.0
  %323 = vmatprep.subr.mxu0 0.0
  %324 = vmatpush1.xpose.msra.mxu0 0.0
  %325 = vmatprep.subr.mxu0 0.0
  %326 = vmatpush1.xpose.msra.mxu0 0.0
  %327 = vmatprep.subr.mxu0 0.0
  %328 = vmatpush1.xpose.msra.mxu0 0.0
  %329 = vmatprep.subr.mxu0 0.0
  %330 = vmatpush1.xpose.msra.mxu0 0.0
  %331 = vmatprep.subr.mxu0 0.0
  %332 = vmatpush1.xpose.msra.mxu0 0.0
  %333 = vmatprep.subr.mxu0 0.0
  %334 = vmatpush1.xpose.msra.mxu0 0.0
  %335 = vmatprep.subr.mxu0 0.0
  %336 = vmatpush1.xpose.msra.mxu0 0.0
  %337 = vmatprep.subr.mxu0 0.0
  %338 = vmatpush1.xpose.msra.mxu0 0.0
  %339 = vmatprep.subr.mxu0 0.0
  %340 = vmatpush1.xpose.msra.mxu0 0.0
  %341 = vmatprep.subr.mxu0 0.0
  %342 = vmatpush1.xpose.msra.mxu0 0.0
  %343 = vmatprep.subr.mxu0 0.0
  %344 = vmatpush1.xpose.msra.mxu0 0.0
  %345 = vmatprep.subr.mxu0 0.0
  %346 = vmatpush1.xpose.msra.mxu0 0.0
  %347 = vmatprep.subr.mxu0 0.0
  %348 = vmatpush1.xpose.msra.mxu0 0.0
  %349 = vmatprep.subr.mxu0 0.0
  %350 = vmatpush1.xpose.msra.mxu0 0.0
  %351 = vmatprep.subr.mxu0 0.0
  %352 = vmatpush1.xpose.msra.mxu0 0.0
  %353 = vmatprep.subr.mxu0 0.0
  %354 = vmatpush1.xpose.msra.mxu0 0.0
  %355 = vmatprep.subr.mxu0 0.0
  %356 = vmatpush1.xpose.msra.mxu0 0.0
  %357 = vmatprep.subr.mxu0 0.0
  %358 = vmatpush1.xpose.msra.mxu0 0.0
  %359 = vmatprep.subr.mxu0 0.0
  %360 = vmatpush1.xpose.msra.mxu0 0.0
  %361 = vmatprep.mubr.f32.mxu0 0.0
  %362 = vmatmul.mubr.f32.gmra.mrb[0].mxu0 %v293
  %v363 = vpop.f32.mrb[0].mxu0
  %v364 = vadd.f32 0.0, %v363
  %v365 = vpop.f32.mrb[0].mxu0
  %366 = vdwg.mxu0
  %v367 = vmul.f32 %v364, 0.35355338
  %v368 = vsel %vm126, %v367, -inf
  %369 = vmax.xlane.f32.xlu0 %v368
  %v370 = vpop.xlane.xlu0 %369
  %v371 = vsub.f32 %v367, %v370
  %v372 = vmul.f32 %v371, 1.442695
  %v373 = vpow.pop %v372
  %v374 = vsel %vm126, %v373, 0.0
  %375 = vadd.xlane.f32.xlu0 %v374
  %v376 = vpop.xlane.xlu0 %375
  %v377 = vrcp.pop %v376
  %v378 = vmul.f32 %v373, %v377
  %379 = vrot.lane.b32.xlu0 %v115, 56
  %v380 = vpop.permute.xlu0 %379
  %v383 = vsel %vm126, %v378, 0
  %385 = vmatprep.subr.mxu0 0.0
  %386 = vmatpush1.msra.mxu0 %v380
  %387 = vmatprep.subr.mxu0 0.0
  %388 = vmatpush1.msra.mxu0 0.0
  %389 = vmatprep.subr.mxu0 0.0
  %390 = vmatpush1.msra.mxu0 0.0
  %391 = vmatprep.subr.mxu0 0.0
  %392 = vmatpush1.msra.mxu0 0.0
  %393 = vmatprep.subr.mxu0 0.0
  %394 = vmatpush1.msra.mxu0 0.0
  %395 = vmatprep.subr.mxu0 0.0
  %396 = vmatpush1.msra.mxu0 0.0
  %397 = vmatprep.subr.mxu0 0.0
  %398 = vmatpush1.msra.mxu0 0.0
  %399 = vmatprep.subr.mxu0 0.0
  %400 = vmatpush1.msra.mxu0 0.0
  %401 = vmatprep.subr.mxu0 0.0
  %402 = vmatpush1.msra.mxu0 0.0
  %403 = vmatprep.subr.mxu0 0.0
  %404 = vmatpush1.msra.mxu0 0.0
  %405 = vmatprep.subr.mxu0 0.0
  %406 = vmatpush1.msra.mxu0 0.0
  %407 = vmatprep.subr.mxu0 0.0
  %408 = vmatpush1.msra.mxu0 0.0
  %409 = vmatprep.subr.mxu0 0.0
  %410 = vmatpush1.msra.mxu0 0.0
  %411 = vmatprep.subr.mxu0 0.0
  %412 = vmatpush1.msra.mxu0 0.0
  %413 = vmatprep.subr.mxu0 0.0
  %414 = vmatpush1.msra.mxu0 0.0
  %415 = vmatprep.subr.mxu0 0.0
  %416 = vmatpush1.msra.mxu0 0.0
  %417 = vmatprep.subr.mxu0 0.0
  %418 = vmatpush1.msra.mxu0 0.0
  %419 = vmatprep.subr.mxu0 0.0
  %420 = vmatpush1.msra.mxu0 0.0
  %421 = vmatprep.subr.mxu0 0.0
  %422 = vmatpush1.msra.mxu0 0.0
  %423 = vmatprep.subr.mxu0 0.0
  %424 = vmatpush1.msra.mxu0 0.0
  %425 = vmatprep.subr.mxu0 0.0
  %426 = vmatpush1.msra.mxu0 0.0
  %427 = vmatprep.subr.mxu0 0.0
  %428 = vmatpush1.msra.mxu0 0.0
  %429 = vmatprep.subr.mxu0 0.0
  %430 = vmatpush1.msra.mxu0 0.0
  %431 = vmatprep.subr.mxu0 0.0
  %432 = vmatpush1.msra.mxu0 0.0
  %433 = vmatprep.subr.mxu0 0.0
  %434 = vmatpush1.msra.mxu0 0.0
  %435 = vmatprep.subr.mxu0 0.0
  %436 = vmatpush1.msra.mxu0 0.0
  %437 = vmatprep.subr.mxu0 0.0
  %438 = vmatpush1.msra.mxu0 0.0
  %439 = vmatprep.subr.mxu0 0.0
  %440 = vmatpush1.msra.mxu0 0.0
  %441 = vmatprep.subr.mxu0 0.0
  %442 = vmatpush1.msra.mxu0 0.0
  %443 = vmatprep.subr.mxu0 0.0
  %444 = vmatpush1.msra.mxu0 0.0
  %445 = vmatprep.subr.mxu0 0.0
  %446 = vmatpush1.msra.mxu0 0.0
  %447 = vmatprep.subr.mxu0 0.0
  %448 = vmatpush1.msra.mxu0 0.0
  %449 = vmatprep.mubr.f32.mxu0 0.0
  %450 = vmatmul.mubr.f32.gmra.mrb[0].mxu0 %v383
  %v451 = vpop.f32.mrb[0].mxu0
  %v452 = vadd.f32 0.0, %v451
  %v453 = vpop.f32.mrb[0].mxu0
  %454 = vdwg.mxu0
  %455 = vrot.lane.b32.xlu0 %v115, 112
  %v456 = vpop.permute.xlu0 %455
  %457 = vrot.lane.b32.xlu0 %v115, 80
  %v458 = vpop.permute.xlu0 %457
  %v459 = vsel %vm126, %v456, 0
  %v461 = vsel %vm126, %v458, 0
  %463 = vmatprep.subr.mxu0 0.0
  %464 = vmatpush1.xpose.msra.mxu0 %v461
  %465 = vmatprep.subr.mxu0 0.0
  %466 = vmatpush1.xpose.msra.mxu0 0.0
  %467 = vmatprep.subr.mxu0 0.0
  %468 = vmatpush1.xpose.msra.mxu0 0.0
  %469 = vmatprep.subr.mxu0 0.0
  %470 = vmatpush1.xpose.msra.mxu0 0.0
  %471 = vmatprep.subr.mxu0 0.0
  %472 = vmatpush1.xpose.msra.mxu0 0.0
  %473 = vmatprep.subr.mxu0 0.0
  %474 = vmatpush1.xpose.msra.mxu0 0.0
  %475 = vmatprep.subr.mxu0 0.0
  %476 = vmatpush1.xpose.msra.mxu0 0.0
  %477 = vmatprep.subr.mxu0 0.0
  %478 = vmatpush1.xpose.msra.mxu0 0.0
  %479 = vmatprep.subr.mxu0 0.0
  %480 = vmatpush1.xpose.msra.mxu0 0.0
  %481 = vmatprep.subr.mxu0 0.0
  %482 = vmatpush1.xpose.msra.mxu0 0.0
  %483 = vmatprep.subr.mxu0 0.0
  %484 = vmatpush1.xpose.msra.mxu0 0.0
  %485 = vmatprep.subr.mxu0 0.0
  %486 = vmatpush1.xpose.msra.mxu0 0.0
  %487 = vmatprep.subr.mxu0 0.0
  %488 = vmatpush1.xpose.msra.mxu0 0.0
  %489 = vmatprep.subr.mxu0 0.0
  %490 = vmatpush1.xpose.msra.mxu0 0.0
  %491 = vmatprep.subr.mxu0 0.0
  %492 = vmatpush1.xpose.msra.mxu0 0.0
  %493 = vmatprep.subr.mxu0 0.0
  %494 = vmatpush1.xpose.msra.mxu0 0.0
  %495 = vmatprep.subr.mxu0 0.0
  %496 = vmatpush1.xpose.msra.mxu0 0.0
  %497 = vmatprep.subr.mxu0 0.0
  %498 = vmatpush1.xpose.msra.mxu0 0.0
  %499 = vmatprep.subr.mxu0 0.0
  %500 = vmatpush1.xpose.msra.mxu0 0.0
  %501 = vmatprep.subr.mxu0 0.0
  %502 = vmatpush1.xpose.msra.mxu0 0.0
  %503 = vmatprep.subr.mxu0 0.0
  %504 = vmatpush1.xpose.msra.mxu0 0.0
  %505 = vmatprep.subr.mxu0 0.0
  %506 = vmatpush1.xpose.msra.mxu0 0.0
  %507 = vmatprep.subr.mxu0 0.0
  %508 = vmatpush1.xpose.msra.mxu0 0.0
  %509 = vmatprep.subr.mxu0 0.0
  %510 = vmatpush1.xpose.msra.mxu0 0.0
  %511 = vmatprep.subr.mxu0 0.0
  %512 = vmatpush1.xpose.msra.mxu0 0.0
  %513 = vmatprep.subr.mxu0 0.0
  %514 = vmatpush1.xpose.msra.mxu0 0.0
  %515 = vmatprep.subr.mxu0 0.0
  %516 = vmatpush1.xpose.msra.mxu0 0.0
  %517 = vmatprep.subr.mxu0 0.0
  %518 = vmatpush1.xpose.msra.mxu0 0.0
  %519 = vmatprep.subr.mxu0 0.0
  %520 = vmatpush1.xpose.msra.mxu0 0.0
  %521 = vmatprep.subr.mxu0 0.0
  %522 = vmatpush1.xpose.msra.mxu0 0.0
  %523 = vmatprep.subr.mxu0 0.0
  %524 = vmatpush1.xpose.msra.mxu0 0.0
  %525 = vmatprep.subr.mxu0 0.0
  %526 = vmatpush1.xpose.msra.mxu0 0.0
  %527 = vmatprep.mubr.f32.mxu0 0.0
  %528 = vmatmul.mubr.f32.gmra.mrb[0].mxu0 %v459
  %v529 = vpop.f32.mrb[0].mxu0
  %v530 = vadd.f32 0.0, %v529
  %v531 = vpop.f32.mrb[0].mxu0
  %532 = vdwg.mxu0
  %v533 = vmul.f32 %v530, 0.35355338
  %v534 = vsel %vm126, %v533, -inf
  %535 = vmax.xlane.f32.xlu0 %v534
  %v536 = vpop.xlane.xlu0 %535
  %v537 = vsub.f32 %v533, %v536
  %v538 = vmul.f32 %v537, 1.442695
  %v539 = vpow.pop %v538
  %v540 = vsel %vm126, %v539, 0.0
  %541 = vadd.xlane.f32.xlu0 %v540
  %v542 = vpop.xlane.xlu0 %541
  %v543 = vrcp.pop %v542
  %v544 = vmul.f32 %v539, %v543
  %545 = vrot.lane.b32.xlu0 %v115, 48
  %v546 = vpop.permute.xlu0 %545
  %v549 = vsel %vm126, %v544, 0
  %551 = vmatprep.subr.mxu0 0.0
  %552 = vmatpush1.msra.mxu0 %v546
  %553 = vmatprep.subr.mxu0 0.0
  %554 = vmatpush1.msra.mxu0 0.0
  %555 = vmatprep.subr.mxu0 0.0
  %556 = vmatpush1.msra.mxu0 0.0
  %557 = vmatprep.subr.mxu0 0.0
  %558 = vmatpush1.msra.mxu0 0.0
  %559 = vmatprep.subr.mxu0 0.0
  %560 = vmatpush1.msra.mxu0 0.0
  %561 = vmatprep.subr.mxu0 0.0
  %562 = vmatpush1.msra.mxu0 0.0
  %563 = vmatprep.subr.mxu0 0.0
  %564 = vmatpush1.msra.mxu0 0.0
  %565 = vmatprep.subr.mxu0 0.0
  %566 = vmatpush1.msra.mxu0 0.0
  %567 = vmatprep.subr.mxu0 0.0
  %568 = vmatpush1.msra.mxu0 0.0
  %569 = vmatprep.subr.mxu0 0.0
  %570 = vmatpush1.msra.mxu0 0.0
  %571 = vmatprep.subr.mxu0 0.0
  %572 = vmatpush1.msra.mxu0 0.0
  %573 = vmatprep.subr.mxu0 0.0
  %574 = vmatpush1.msra.mxu0 0.0
  %575 = vmatprep.subr.mxu0 0.0
  %576 = vmatpush1.msra.mxu0 0.0
  %577 = vmatprep.subr.mxu0 0.0
  %578 = vmatpush1.msra.mxu0 0.0
  %579 = vmatprep.subr.mxu0 0.0
  %580 = vmatpush1.msra.mxu0 0.0
  %581 = vmatprep.subr.mxu0 0.0
  %582 = vmatpush1.msra.mxu0 0.0
  %583 = vmatprep.subr.mxu0 0.0
  %584 = vmatpush1.msra.mxu0 0.0
  %585 = vmatprep.subr.mxu0 0.0
  %586 = vmatpush1.msra.mxu0 0.0
  %587 = vmatprep.subr.mxu0 0.0
  %588 = vmatpush1.msra.mxu0 0.0
  %589 = vmatprep.subr.mxu0 0.0
  %590 = vmatpush1.msra.mxu0 0.0
  %591 = vmatprep.subr.mxu0 0.0
  %592 = vmatpush1.msra.mxu0 0.0
  %593 = vmatprep.subr.mxu0 0.0
  %594 = vmatpush1.msra.mxu0 0.0
  %595 = vmatprep.subr.mxu0 0.0
  %596 = vmatpush1.msra.mxu0 0.0
  %597 = vmatprep.subr.mxu0 0.0
  %598 = vmatpush1.msra.mxu0 0.0
  %599 = vmatprep.subr.mxu0 0.0
  %600 = vmatpush1.msra.mxu0 0.0
  %601 = vmatprep.subr.mxu0 0.0
  %602 = vmatpush1.msra.mxu0 0.0
  %603 = vmatprep.subr.mxu0 0.0
  %604 = vmatpush1.msra.mxu0 0.0
  %605 = vmatprep.subr.mxu0 0.0
  %606 = vmatpush1.msra.mxu0 0.0
  %607 = vmatprep.subr.mxu0 0.0
  %608 = vmatpush1.msra.mxu0 0.0
  %609 = vmatprep.subr.mxu0 0.0
  %610 = vmatpush1.msra.mxu0 0.0
  %611 = vmatprep.subr.mxu0 0.0
  %612 = vmatpush1.msra.mxu0 0.0
  %613 = vmatprep.subr.mxu0 0.0
  %614 = vmatpush1.msra.mxu0 0.0
  %615 = vmatprep.mubr.f32.mxu0 0.0
  %616 = vmatmul.mubr.f32.gmra.mrb[0].mxu0 %v549
  %v617 = vpop.f32.mrb[0].mxu0
  %v618 = vadd.f32 0.0, %v617
  %v619 = vpop.f32.mrb[0].mxu0
  %620 = vdwg.mxu0
  %621 = vrot.lane.b32.xlu0 %v115, 104
  %v622 = vpop.permute.xlu0 %621
  %623 = vrot.lane.b32.xlu0 %v115, 72
  %v624 = vpop.permute.xlu0 %623
  %v625 = vsel %vm126, %v622, 0
  %v627 = vsel %vm126, %v624, 0
  %629 = vmatprep.subr.mxu0 0.0
  %630 = vmatpush1.xpose.msra.mxu0 %v627
  %631 = vmatprep.subr.mxu0 0.0
  %632 = vmatpush1.xpose.msra.mxu0 0.0
  %633 = vmatprep.subr.mxu0 0.0
  %634 = vmatpush1.xpose.msra.mxu0 0.0
  %635 = vmatprep.subr.mxu0 0.0
  %636 = vmatpush1.xpose.msra.mxu0 0.0
  %637 = vmatprep.subr.mxu0 0.0
  %638 = vmatpush1.xpose.msra.mxu0 0.0
  %639 = vmatprep.subr.mxu0 0.0
  %640 = vmatpush1.xpose.msra.mxu0 0.0
  %641 = vmatprep.subr.mxu0 0.0
  %642 = vmatpush1.xpose.msra.mxu0 0.0
  %643 = vmatprep.subr.mxu0 0.0
  %644 = vmatpush1.xpose.msra.mxu0 0.0
  %645 = vmatprep.subr.mxu0 0.0
  %646 = vmatpush1.xpose.msra.mxu0 0.0
  %647 = vmatprep.subr.mxu0 0.0
  %648 = vmatpush1.xpose.msra.mxu0 0.0
  %649 = vmatprep.subr.mxu0 0.0
  %650 = vmatpush1.xpose.msra.mxu0 0.0
  %651 = vmatprep.subr.mxu0 0.0
  %652 = vmatpush1.xpose.msra.mxu0 0.0
  %653 = vmatprep.subr.mxu0 0.0
  %654 = vmatpush1.xpose.msra.mxu0 0.0
  %655 = vmatprep.subr.mxu0 0.0
  %656 = vmatpush1.xpose.msra.mxu0 0.0
  %657 = vmatprep.subr.mxu0 0.0
  %658 = vmatpush1.xpose.msra.mxu0 0.0
  %659 = vmatprep.subr.mxu0 0.0
  %660 = vmatpush1.xpose.msra.mxu0 0.0
  %661 = vmatprep.subr.mxu0 0.0
  %662 = vmatpush1.xpose.msra.mxu0 0.0
  %663 = vmatprep.subr.mxu0 0.0
  %664 = vmatpush1.xpose.msra.mxu0 0.0
  %665 = vmatprep.subr.mxu0 0.0
  %666 = vmatpush1.xpose.msra.mxu0 0.0
  %667 = vmatprep.subr.mxu0 0.0
  %668 = vmatpush1.xpose.msra.mxu0 0.0
  %669 = vmatprep.subr.mxu0 0.0
  %670 = vmatpush1.xpose.msra.mxu0 0.0
  %671 = vmatprep.subr.mxu0 0.0
  %672 = vmatpush1.xpose.msra.mxu0 0.0
  %673 = vmatprep.subr.mxu0 0.0
  %674 = vmatpush1.xpose.msra.mxu0 0.0
  %675 = vmatprep.subr.mxu0 0.0
  %676 = vmatpush1.xpose.msra.mxu0 0.0
  %677 = vmatprep.subr.mxu0 0.0
  %678 = vmatpush1.xpose.msra.mxu0 0.0
  %679 = vmatprep.subr.mxu0 0.0
  %680 = vmatpush1.xpose.msra.mxu0 0.0
  %681 = vmatprep.subr.mxu0 0.0
  %682 = vmatpush1.xpose.msra.mxu0 0.0
  %683 = vmatprep.subr.mxu0 0.0
  %684 = vmatpush1.xpose.msra.mxu0 0.0
  %685 = vmatprep.subr.mxu0 0.0
  %686 = vmatpush1.xpose.msra.mxu0 0.0
  %687 = vmatprep.subr.mxu0 0.0
  %688 = vmatpush1.xpose.msra.mxu0 0.0
  %689 = vmatprep.subr.mxu0 0.0
  %690 = vmatpush1.xpose.msra.mxu0 0.0
  %691 = vmatprep.subr.mxu0 0.0
  %692 = vmatpush1.xpose.msra.mxu0 0.0
  %693 = vmatprep.mubr.f32.mxu0 0.0
  %694 = vmatmul.mubr.f32.gmra.mrb[0].mxu0 %v625
  %v695 = vpop.f32.mrb[0].mxu0
  %v696 = vadd.f32 0.0, %v695
  %v697 = vpop.f32.mrb[0].mxu0
  %698 = vdwg.mxu0
  %v699 = vmul.f32 %v696, 0.35355338
  %v700 = vsel %vm126, %v699, -inf
  %701 = vmax.xlane.f32.xlu0 %v700
  %v702 = vpop.xlane.xlu0 %701
  %v703 = vsub.f32 %v699, %v702
  %v704 = vmul.f32 %v703, 1.442695
  %v705 = vpow.pop %v704
  %v706 = vsel %vm126, %v705, 0.0
  %707 = vadd.xlane.f32.xlu0 %v706
  %v708 = vpop.xlane.xlu0 %707
  %v709 = vrcp.pop %v708
  %v710 = vmul.f32 %v705, %v709
  %711 = vrot.lane.b32.xlu0 %v115, 40
  %v712 = vpop.permute.xlu0 %711
  %v715 = vsel %vm126, %v710, 0
  %717 = vmatprep.subr.mxu0 0.0
  %718 = vmatpush1.msra.mxu0 %v712
  %719 = vmatprep.subr.mxu0 0.0
  %720 = vmatpush1.msra.mxu0 0.0
  %721 = vmatprep.subr.mxu0 0.0
  %722 = vmatpush1.msra.mxu0 0.0
  %723 = vmatprep.subr.mxu0 0.0
  %724 = vmatpush1.msra.mxu0 0.0
  %725 = vmatprep.subr.mxu0 0.0
  %726 = vmatpush1.msra.mxu0 0.0
  %727 = vmatprep.subr.mxu0 0.0
  %728 = vmatpush1.msra.mxu0 0.0
  %729 = vmatprep.subr.mxu0 0.0
  %730 = vmatpush1.msra.mxu0 0.0
  %731 = vmatprep.subr.mxu0 0.0
  %732 = vmatpush1.msra.mxu0 0.0
  %733 = vmatprep.subr.mxu0 0.0
  %734 = vmatpush1.msra.mxu0 0.0
  %735 = vmatprep.subr.mxu0 0.0
  %736 = vmatpush1.msra.mxu0 0.0
  %737 = vmatprep.subr.mxu0 0.0
  %738 = vmatpush1.msra.mxu0 0.0
  %739 = vmatprep.subr.mxu0 0.0
  %740 = vmatpush1.msra.mxu0 0.0
  %741 = vmatprep.subr.mxu0 0.0
  %742 = vmatpush1.msra.mxu0 0.0
  %743 = vmatprep.subr.mxu0 0.0
  %744 = vmatpush1.msra.mxu0 0.0
  %745 = vmatprep.subr.mxu0 0.0
  %746 = vmatpush1.msra.mxu0 0.0
  %747 = vmatprep.subr.mxu0 0.0
  %748 = vmatpush1.msra.mxu0 0.0
  %749 = vmatprep.subr.mxu0 0.0
  %750 = vmatpush1.msra.mxu0 0.0
  %751 = vmatprep.subr.mxu0 0.0
  %752 = vmatpush1.msra.mxu0 0.0
  %753 = vmatprep.subr.mxu0 0.0
  %754 = vmatpush1.msra.mxu0 0.0
  %755 = vmatprep.subr.mxu0 0.0
  %756 = vmatpush1.msra.mxu0 0.0
  %757 = vmatprep.subr.mxu0 0.0
  %758 = vmatpush1.msra.mxu0 0.0
  %759 = vmatprep.subr.mxu0 0.0
  %760 = vmatpush1.msra.mxu0 0.0
  %761 = vmatprep.subr.mxu0 0.0
  %762 = vmatpush1.msra.mxu0 0.0
  %763 = vmatprep.subr.mxu0 0.0
  %764 = vmatpush1.msra.mxu0 0.0
  %765 = vmatprep.subr.mxu0 0.0
  %766 = vmatpush1.msra.mxu0 0.0
  %767 = vmatprep.subr.mxu0 0.0
  %768 = vmatpush1.msra.mxu0 0.0
  %769 = vmatprep.subr.mxu0 0.0
  %770 = vmatpush1.msra.mxu0 0.0
  %771 = vmatprep.subr.mxu0 0.0
  %772 = vmatpush1.msra.mxu0 0.0
  %773 = vmatprep.subr.mxu0 0.0
  %774 = vmatpush1.msra.mxu0 0.0
  %775 = vmatprep.subr.mxu0 0.0
  %776 = vmatpush1.msra.mxu0 0.0
  %777 = vmatprep.subr.mxu0 0.0
  %778 = vmatpush1.msra.mxu0 0.0
  %779 = vmatprep.subr.mxu0 0.0
  %780 = vmatpush1.msra.mxu0 0.0
  %781 = vmatprep.mubr.f32.mxu0 0.0
  %782 = vmatmul.mubr.f32.gmra.mrb[0].mxu0 %v715
  %v783 = vpop.f32.mrb[0].mxu0
  %v784 = vadd.f32 0.0, %v783
  %v785 = vpop.f32.mrb[0].mxu0
  %786 = vdwg.mxu0
  %788 = vrot.lane.b32.xlu0 %v452, 8
  %v789 = vpop.permute.xlu0 %788
  %792 = vrot.lane.b32.xlu0 %v618, 16
  %v793 = vpop.permute.xlu0 %792
  %796 = vrot.lane.b32.xlu0 %v784, 24
  %v797 = vpop.permute.xlu0 %796
  %v799 = vsel %vm126, %v286, %v789
  %vm800 = vcmask 130048
  %v801 = vsel %vm800, %v799, %v793
  %vm802 = vcmask 195584
  %v803 = vsel %vm802, %v801, %v797
  %805 = vrot.lane.b32.xlu0 %v120, 96
  %v806 = vpop.permute.xlu0 %805
  %v807 = vsel %vm126, %v120, 0
  %v809 = vsel %vm126, %v806, 0
  %811 = vmatprep.subr.mxu0 0.0
  %812 = vmatpush1.xpose.msra.mxu0 %v809
  %813 = vmatprep.subr.mxu0 0.0
  %814 = vmatpush1.xpose.msra.mxu0 0.0
  %815 = vmatprep.subr.mxu0 0.0
  %816 = vmatpush1.xpose.msra.mxu0 0.0
  %817 = vmatprep.subr.mxu0 0.0
  %818 = vmatpush1.xpose.msra.mxu0 0.0
  %819 = vmatprep.subr.mxu0 0.0
  %820 = vmatpush1.xpose.msra.mxu0 0.0
  %821 = vmatprep.subr.mxu0 0.0
  %822 = vmatpush1.xpose.msra.mxu0 0.0
  %823 = vmatprep.subr.mxu0 0.0
  %824 = vmatpush1.xpose.msra.mxu0 0.0
  %825 = vmatprep.subr.mxu0 0.0
  %826 = vmatpush1.xpose.msra.mxu0 0.0
  %827 = vmatprep.subr.mxu0 0.0
  %828 = vmatpush1.xpose.msra.mxu0 0.0
  %829 = vmatprep.subr.mxu0 0.0
  %830 = vmatpush1.xpose.msra.mxu0 0.0
  %831 = vmatprep.subr.mxu0 0.0
  %832 = vmatpush1.xpose.msra.mxu0 0.0
  %833 = vmatprep.subr.mxu0 0.0
  %834 = vmatpush1.xpose.msra.mxu0 0.0
  %835 = vmatprep.subr.mxu0 0.0
  %836 = vmatpush1.xpose.msra.mxu0 0.0
  %837 = vmatprep.subr.mxu0 0.0
  %838 = vmatpush1.xpose.msra.mxu0 0.0
  %839 = vmatprep.subr.mxu0 0.0
  %840 = vmatpush1.xpose.msra.mxu0 0.0
  %841 = vmatprep.subr.mxu0 0.0
  %842 = vmatpush1.xpose.msra.mxu0 0.0
  %843 = vmatprep.subr.mxu0 0.0
  %844 = vmatpush1.xpose.msra.mxu0 0.0
  %845 = vmatprep.subr.mxu0 0.0
  %846 = vmatpush1.xpose.msra.mxu0 0.0
  %847 = vmatprep.subr.mxu0 0.0
  %848 = vmatpush1.xpose.msra.mxu0 0.0
  %849 = vmatprep.subr.mxu0 0.0
  %850 = vmatpush1.xpose.msra.mxu0 0.0
  %851 = vmatprep.subr.mxu0 0.0
  %852 = vmatpush1.xpose.msra.mxu0 0.0
  %853 = vmatprep.subr.mxu0 0.0
  %854 = vmatpush1.xpose.msra.mxu0 0.0
  %855 = vmatprep.subr.mxu0 0.0
  %856 = vmatpush1.xpose.msra.mxu0 0.0
  %857 = vmatprep.subr.mxu0 0.0
  %858 = vmatpush1.xpose.msra.mxu0 0.0
  %859 = vmatprep.subr.mxu0 0.0
  %860 = vmatpush1.xpose.msra.mxu0 0.0
  %861 = vmatprep.subr.mxu0 0.0
  %862 = vmatpush1.xpose.msra.mxu0 0.0
  %863 = vmatprep.subr.mxu0 0.0
  %864 = vmatpush1.xpose.msra.mxu0 0.0
  %865 = vmatprep.subr.mxu0 0.0
  %866 = vmatpush1.xpose.msra.mxu0 0.0
  %867 = vmatprep.subr.mxu0 0.0
  %868 = vmatpush1.xpose.msra.mxu0 0.0
  %869 = vmatprep.subr.mxu0 0.0
  %870 = vmatpush1.xpose.msra.mxu0 0.0
  %871 = vmatprep.subr.mxu0 0.0
  %872 = vmatpush1.xpose.msra.mxu0 0.0
  %873 = vmatprep.subr.mxu0 0.0
  %874 = vmatpush1.xpose.msra.mxu0 0.0
  %875 = vmatprep.mubr.f32.mxu0 0.0
  %876 = vmatmul.mubr.f32.gmra.mrb[0].mxu0 %v807
  %v877 = vpop.f32.mrb[0].mxu0
  %v878 = vadd.f32 0.0, %v877
  %v879 = vpop.f32.mrb[0].mxu0
  %880 = vdwg.mxu0
  %v881 = vmul.f32 %v878, 0.35355338
  %v882 = vsel %vm126, %v881, -inf
  %883 = vmax.xlane.f32.xlu0 %v882
  %v884 = vpop.xlane.xlu0 %883
  %v885 = vsub.f32 %v881, %v884
  %v886 = vmul.f32 %v885, 1.442695
  %v887 = vpow.pop %v886
  %v888 = vsel %vm126, %v887, 0.0
  %889 = vadd.xlane.f32.xlu0 %v888
  %v890 = vpop.xlane.xlu0 %889
  %v891 = vrcp.pop %v890
  %v892 = vmul.f32 %v887, %v891
  %893 = vrot.lane.b32.xlu0 %v120, 64
  %v894 = vpop.permute.xlu0 %893
  %v897 = vsel %vm126, %v892, 0
  %899 = vmatprep.subr.mxu0 0.0
  %900 = vmatpush1.msra.mxu0 %v894
  %901 = vmatprep.subr.mxu0 0.0
  %902 = vmatpush1.msra.mxu0 0.0
  %903 = vmatprep.subr.mxu0 0.0
  %904 = vmatpush1.msra.mxu0 0.0
  %905 = vmatprep.subr.mxu0 0.0
  %906 = vmatpush1.msra.mxu0 0.0
  %907 = vmatprep.subr.mxu0 0.0
  %908 = vmatpush1.msra.mxu0 0.0
  %909 = vmatprep.subr.mxu0 0.0
  %910 = vmatpush1.msra.mxu0 0.0
  %911 = vmatprep.subr.mxu0 0.0
  %912 = vmatpush1.msra.mxu0 0.0
  %913 = vmatprep.subr.mxu0 0.0
  %914 = vmatpush1.msra.mxu0 0.0
  %915 = vmatprep.subr.mxu0 0.0
  %916 = vmatpush1.msra.mxu0 0.0
  %917 = vmatprep.subr.mxu0 0.0
  %918 = vmatpush1.msra.mxu0 0.0
  %919 = vmatprep.subr.mxu0 0.0
  %920 = vmatpush1.msra.mxu0 0.0
  %921 = vmatprep.subr.mxu0 0.0
  %922 = vmatpush1.msra.mxu0 0.0
  %923 = vmatprep.subr.mxu0 0.0
  %924 = vmatpush1.msra.mxu0 0.0
  %925 = vmatprep.subr.mxu0 0.0
  %926 = vmatpush1.msra.mxu0 0.0
  %927 = vmatprep.subr.mxu0 0.0
  %928 = vmatpush1.msra.mxu0 0.0
  %929 = vmatprep.subr.mxu0 0.0
  %930 = vmatpush1.msra.mxu0 0.0
  %931 = vmatprep.subr.mxu0 0.0
  %932 = vmatpush1.msra.mxu0 0.0
  %933 = vmatprep.subr.mxu0 0.0
  %934 = vmatpush1.msra.mxu0 0.0
  %935 = vmatprep.subr.mxu0 0.0
  %936 = vmatpush1.msra.mxu0 0.0
  %937 = vmatprep.subr.mxu0 0.0
  %938 = vmatpush1.msra.mxu0 0.0
  %939 = vmatprep.subr.mxu0 0.0
  %940 = vmatpush1.msra.mxu0 0.0
  %941 = vmatprep.subr.mxu0 0.0
  %942 = vmatpush1.msra.mxu0 0.0
  %943 = vmatprep.subr.mxu0 0.0
  %944 = vmatpush1.msra.mxu0 0.0
  %945 = vmatprep.subr.mxu0 0.0
  %946 = vmatpush1.msra.mxu0 0.0
  %947 = vmatprep.subr.mxu0 0.0
  %948 = vmatpush1.msra.mxu0 0.0
  %949 = vmatprep.subr.mxu0 0.0
  %950 = vmatpush1.msra.mxu0 0.0
  %951 = vmatprep.subr.mxu0 0.0
  %952 = vmatpush1.msra.mxu0 0.0
  %953 = vmatprep.subr.mxu0 0.0
  %954 = vmatpush1.msra.mxu0 0.0
  %955 = vmatprep.subr.mxu0 0.0
  %956 = vmatpush1.msra.mxu0 0.0
  %957 = vmatprep.subr.mxu0 0.0
  %958 = vmatpush1.msra.mxu0 0.0
  %959 = vmatprep.subr.mxu0 0.0
  %960 = vmatpush1.msra.mxu0 0.0
  %961 = vmatprep.subr.mxu0 0.0
  %962 = vmatpush1.msra.mxu0 0.0
  %963 = vmatprep.mubr.f32.mxu0 0.0
  %964 = vmatmul.mubr.f32.gmra.mrb[0].mxu0 %v897
  %v965 = vpop.f32.mrb[0].mxu0
  %v966 = vadd.f32 0.0, %v965
  %v967 = vpop.f32.mrb[0].mxu0
  %968 = vdwg.mxu0
  %969 = vrot.lane.b32.xlu0 %v120, 120
  %v970 = vpop.permute.xlu0 %969
  %971 = vrot.lane.b32.xlu0 %v120, 88
  %v972 = vpop.permute.xlu0 %971
  %v973 = vsel %vm126, %v970, 0
  %v975 = vsel %vm126, %v972, 0
  %977 = vmatprep.subr.mxu0 0.0
  %978 = vmatpush1.xpose.msra.mxu0 %v975
  %979 = vmatprep.subr.mxu0 0.0
  %980 = vmatpush1.xpose.msra.mxu0 0.0
  %981 = vmatprep.subr.mxu0 0.0
  %982 = vmatpush1.xpose.msra.mxu0 0.0
  %983 = vmatprep.subr.mxu0 0.0
  %984 = vmatpush1.xpose.msra.mxu0 0.0
  %985 = vmatprep.subr.mxu0 0.0
  %986 = vmatpush1.xpose.msra.mxu0 0.0
  %987 = vmatprep.subr.mxu0 0.0
  %988 = vmatpush1.xpose.msra.mxu0 0.0
  %989 = vmatprep.subr.mxu0 0.0
  %990 = vmatpush1.xpose.msra.mxu0 0.0
  %991 = vmatprep.subr.mxu0 0.0
  %992 = vmatpush1.xpose.msra.mxu0 0.0
  %993 = vmatprep.subr.mxu0 0.0
  %994 = vmatpush1.xpose.msra.mxu0 0.0
  %995 = vmatprep.subr.mxu0 0.0
  %996 = vmatpush1.xpose.msra.mxu0 0.0
  %997 = vmatprep.subr.mxu0 0.0
  %998 = vmatpush1.xpose.msra.mxu0 0.0
  %999 = vmatprep.subr.mxu0 0.0
  %1000 = vmatpush1.xpose.msra.mxu0 0.0
  %1001 = vmatprep.subr.mxu0 0.0
  %1002 = vmatpush1.xpose.msra.mxu0 0.0
  %1003 = vmatprep.subr.mxu0 0.0
  %1004 = vmatpush1.xpose.msra.mxu0 0.0
  %1005 = vmatprep.subr.mxu0 0.0
  %1006 = vmatpush1.xpose.msra.mxu0 0.0
  %1007 = vmatprep.subr.mxu0 0.0
  %1008 = vmatpush1.xpose.msra.mxu0 0.0
  %1009 = vmatprep.subr.mxu0 0.0
  %1010 = vmatpush1.xpose.msra.mxu0 0.0
  %1011 = vmatprep.subr.mxu0 0.0
  %1012 = vmatpush1.xpose.msra.mxu0 0.0
  %1013 = vmatprep.subr.mxu0 0.0
  %1014 = vmatpush1.xpose.msra.mxu0 0.0
  %1015 = vmatprep.subr.mxu0 0.0
  %1016 = vmatpush1.xpose.msra.mxu0 0.0
  %1017 = vmatprep.subr.mxu0 0.0
  %1018 = vmatpush1.xpose.msra.mxu0 0.0
  %1019 = vmatprep.subr.mxu0 0.0
  %1020 = vmatpush1.xpose.msra.mxu0 0.0
  %1021 = vmatprep.subr.mxu0 0.0
  %1022 = vmatpush1.xpose.msra.mxu0 0.0
  %1023 = vmatprep.subr.mxu0 0.0
  %1024 = vmatpush1.xpose.msra.mxu0 0.0
  %1025 = vmatprep.subr.mxu0 0.0
  %1026 = vmatpush1.xpose.msra.mxu0 0.0
  %1027 = vmatprep.subr.mxu0 0.0
  %1028 = vmatpush1.xpose.msra.mxu0 0.0
  %1029 = vmatprep.subr.mxu0 0.0
  %1030 = vmatpush1.xpose.msra.mxu0 0.0
  %1031 = vmatprep.subr.mxu0 0.0
  %1032 = vmatpush1.xpose.msra.mxu0 0.0
  %1033 = vmatprep.subr.mxu0 0.0
  %1034 = vmatpush1.xpose.msra.mxu0 0.0
  %1035 = vmatprep.subr.mxu0 0.0
  %1036 = vmatpush1.xpose.msra.mxu0 0.0
  %1037 = vmatprep.subr.mxu0 0.0
  %1038 = vmatpush1.xpose.msra.mxu0 0.0
  %1039 = vmatprep.subr.mxu0 0.0
  %1040 = vmatpush1.xpose.msra.mxu0 0.0
  %1041 = vmatprep.mubr.f32.mxu0 0.0
  %1042 = vmatmul.mubr.f32.gmra.mrb[0].mxu0 %v973
  %v1043 = vpop.f32.mrb[0].mxu0
  %v1044 = vadd.f32 0.0, %v1043
  %v1045 = vpop.f32.mrb[0].mxu0
  %1046 = vdwg.mxu0
  %v1047 = vmul.f32 %v1044, 0.35355338
  %v1048 = vsel %vm126, %v1047, -inf
  %1049 = vmax.xlane.f32.xlu0 %v1048
  %v1050 = vpop.xlane.xlu0 %1049
  %v1051 = vsub.f32 %v1047, %v1050
  %v1052 = vmul.f32 %v1051, 1.442695
  %v1053 = vpow.pop %v1052
  %v1054 = vsel %vm126, %v1053, 0.0
  %1055 = vadd.xlane.f32.xlu0 %v1054
  %v1056 = vpop.xlane.xlu0 %1055
  %v1057 = vrcp.pop %v1056
  %v1058 = vmul.f32 %v1053, %v1057
  %1059 = vrot.lane.b32.xlu0 %v120, 56
  %v1060 = vpop.permute.xlu0 %1059
  %v1063 = vsel %vm126, %v1058, 0
  %1065 = vmatprep.subr.mxu0 0.0
  %1066 = vmatpush1.msra.mxu0 %v1060
  %1067 = vmatprep.subr.mxu0 0.0
  %1068 = vmatpush1.msra.mxu0 0.0
  %1069 = vmatprep.subr.mxu0 0.0
  %1070 = vmatpush1.msra.mxu0 0.0
  %1071 = vmatprep.subr.mxu0 0.0
  %1072 = vmatpush1.msra.mxu0 0.0
  %1073 = vmatprep.subr.mxu0 0.0
  %1074 = vmatpush1.msra.mxu0 0.0
  %1075 = vmatprep.subr.mxu0 0.0
  %1076 = vmatpush1.msra.mxu0 0.0
  %1077 = vmatprep.subr.mxu0 0.0
  %1078 = vmatpush1.msra.mxu0 0.0
  %1079 = vmatprep.subr.mxu0 0.0
  %1080 = vmatpush1.msra.mxu0 0.0
  %1081 = vmatprep.subr.mxu0 0.0
  %1082 = vmatpush1.msra.mxu0 0.0
  %1083 = vmatprep.subr.mxu0 0.0
  %1084 = vmatpush1.msra.mxu0 0.0
  %1085 = vmatprep.subr.mxu0 0.0
  %1086 = vmatpush1.msra.mxu0 0.0
  %1087 = vmatprep.subr.mxu0 0.0
  %1088 = vmatpush1.msra.mxu0 0.0
  %1089 = vmatprep.subr.mxu0 0.0
  %1090 = vmatpush1.msra.mxu0 0.0
  %1091 = vmatprep.subr.mxu0 0.0
  %1092 = vmatpush1.msra.mxu0 0.0
  %1093 = vmatprep.subr.mxu0 0.0
  %1094 = vmatpush1.msra.mxu0 0.0
  %1095 = vmatprep.subr.mxu0 0.0
  %1096 = vmatpush1.msra.mxu0 0.0
  %1097 = vmatprep.subr.mxu0 0.0
  %1098 = vmatpush1.msra.mxu0 0.0
  %1099 = vmatprep.subr.mxu0 0.0
  %1100 = vmatpush1.msra.mxu0 0.0
  %1101 = vmatprep.subr.mxu0 0.0
  %1102 = vmatpush1.msra.mxu0 0.0
  %1103 = vmatprep.subr.mxu0 0.0
  %1104 = vmatpush1.msra.mxu0 0.0
  %1105 = vmatprep.subr.mxu0 0.0
  %1106 = vmatpush1.msra.mxu0 0.0
  %1107 = vmatprep.subr.mxu0 0.0
  %1108 = vmatpush1.msra.mxu0 0.0
  %1109 = vmatprep.subr.mxu0 0.0
  %1110 = vmatpush1.msra.mxu0 0.0
  %1111 = vmatprep.subr.mxu0 0.0
  %1112 = vmatpush1.msra.mxu0 0.0
  %1113 = vmatprep.subr.mxu0 0.0
  %1114 = vmatpush1.msra.mxu0 0.0
  %1115 = vmatprep.subr.mxu0 0.0
  %1116 = vmatpush1.msra.mxu0 0.0
  %1117 = vmatprep.subr.mxu0 0.0
  %1118 = vmatpush1.msra.mxu0 0.0
  %1119 = vmatprep.subr.mxu0 0.0
  %1120 = vmatpush1.msra.mxu0 0.0
  %1121 = vmatprep.subr.mxu0 0.0
  %1122 = vmatpush1.msra.mxu0 0.0
  %1123 = vmatprep.subr.mxu0 0.0
  %1124 = vmatpush1.msra.mxu0 0.0
  %1125 = vmatprep.subr.mxu0 0.0
  %1126 = vmatpush1.msra.mxu0 0.0
  %1127 = vmatprep.subr.mxu0 0.0
  %1128 = vmatpush1.msra.mxu0 0.0
  %1129 = vmatprep.mubr.f32.mxu0 0.0
  %1130 = vmatmul.mubr.f32.gmra.mrb[0].mxu0 %v1063
  %v1131 = vpop.f32.mrb[0].mxu0
  %v1132 = vadd.f32 0.0, %v1131
  %v1133 = vpop.f32.mrb[0].mxu0
  %1134 = vdwg.mxu0
  %1135 = vrot.lane.b32.xlu0 %v120, 112
  %v1136 = vpop.permute.xlu0 %1135
  %1137 = vrot.lane.b32.xlu0 %v120, 80
  %v1138 = vpop.permute.xlu0 %1137
  %v1139 = vsel %vm126, %v1136, 0
  %v1141 = vsel %vm126, %v1138, 0
  %1143 = vmatprep.subr.mxu0 0.0
  %1144 = vmatpush1.xpose.msra.mxu0 %v1141
  %1145 = vmatprep.subr.mxu0 0.0
  %1146 = vmatpush1.xpose.msra.mxu0 0.0
  %1147 = vmatprep.subr.mxu0 0.0
  %1148 = vmatpush1.xpose.msra.mxu0 0.0
  %1149 = vmatprep.subr.mxu0 0.0
  %1150 = vmatpush1.xpose.msra.mxu0 0.0
  %1151 = vmatprep.subr.mxu0 0.0
  %1152 = vmatpush1.xpose.msra.mxu0 0.0
  %1153 = vmatprep.subr.mxu0 0.0
  %1154 = vmatpush1.xpose.msra.mxu0 0.0
  %1155 = vmatprep.subr.mxu0 0.0
  %1156 = vmatpush1.xpose.msra.mxu0 0.0
  %1157 = vmatprep.subr.mxu0 0.0
  %1158 = vmatpush1.xpose.msra.mxu0 0.0
  %1159 = vmatprep.subr.mxu0 0.0
  %1160 = vmatpush1.xpose.msra.mxu0 0.0
  %1161 = vmatprep.subr.mxu0 0.0
  %1162 = vmatpush1.xpose.msra.mxu0 0.0
  %1163 = vmatprep.subr.mxu0 0.0
  %1164 = vmatpush1.xpose.msra.mxu0 0.0
  %1165 = vmatprep.subr.mxu0 0.0
  %1166 = vmatpush1.xpose.msra.mxu0 0.0
  %1167 = vmatprep.subr.mxu0 0.0
  %1168 = vmatpush1.xpose.msra.mxu0 0.0
  %1169 = vmatprep.subr.mxu0 0.0
  %1170 = vmatpush1.xpose.msra.mxu0 0.0
  %1171 = vmatprep.subr.mxu0 0.0
  %1172 = vmatpush1.xpose.msra.mxu0 0.0
  %1173 = vmatprep.subr.mxu0 0.0
  %1174 = vmatpush1.xpose.msra.mxu0 0.0
  %1175 = vmatprep.subr.mxu0 0.0
  %1176 = vmatpush1.xpose.msra.mxu0 0.0
  %1177 = vmatprep.subr.mxu0 0.0
  %1178 = vmatpush1.xpose.msra.mxu0 0.0
  %1179 = vmatprep.subr.mxu0 0.0
  %1180 = vmatpush1.xpose.msra.mxu0 0.0
  %1181 = vmatprep.subr.mxu0 0.0
  %1182 = vmatpush1.xpose.msra.mxu0 0.0
  %1183 = vmatprep.subr.mxu0 0.0
  %1184 = vmatpush1.xpose.msra.mxu0 0.0
  %1185 = vmatprep.subr.mxu0 0.0
  %1186 = vmatpush1.xpose.msra.mxu0 0.0
  %1187 = vmatprep.subr.mxu0 0.0
  %1188 = vmatpush1.xpose.msra.mxu0 0.0
  %1189 = vmatprep.subr.mxu0 0.0
  %1190 = vmatpush1.xpose.msra.mxu0 0.0
  %1191 = vmatprep.subr.mxu0 0.0
  %1192 = vmatpush1.xpose.msra.mxu0 0.0
  %1193 = vmatprep.subr.mxu0 0.0
  %1194 = vmatpush1.xpose.msra.mxu0 0.0
  %1195 = vmatprep.subr.mxu0 0.0
  %1196 = vmatpush1.xpose.msra.mxu0 0.0
  %1197 = vmatprep.subr.mxu0 0.0
  %1198 = vmatpush1.xpose.msra.mxu0 0.0
  %1199 = vmatprep.subr.mxu0 0.0
  %1200 = vmatpush1.xpose.msra.mxu0 0.0
  %1201 = vmatprep.subr.mxu0 0.0
  %1202 = vmatpush1.xpose.msra.mxu0 0.0
  %1203 = vmatprep.subr.mxu0 0.0
  %1204 = vmatpush1.xpose.msra.mxu0 0.0
  %1205 = vmatprep.subr.mxu0 0.0
  %1206 = vmatpush1.xpose.msra.mxu0 0.0
  %1207 = vmatprep.mubr.f32.mxu0 0.0
  %1208 = vmatmul.mubr.f32.gmra.mrb[0].mxu0 %v1139
  %v1209 = vpop.f32.mrb[0].mxu0
  %v1210 = vadd.f32 0.0, %v1209
  %v1211 = vpop.f32.mrb[0].mxu0
  %1212 = vdwg.mxu0
  %v1213 = vmul.f32 %v1210, 0.35355338
  %v1214 = vsel %vm126, %v1213, -inf
  %1215 = vmax.xlane.f32.xlu0 %v1214
  %v1216 = vpop.xlane.xlu0 %1215
  %v1217 = vsub.f32 %v1213, %v1216
  %v1218 = vmul.f32 %v1217, 1.442695
  %v1219 = vpow.pop %v1218
  %v1220 = vsel %vm126, %v1219, 0.0
  %1221 = vadd.xlane.f32.xlu0 %v1220
  %v1222 = vpop.xlane.xlu0 %1221
  %v1223 = vrcp.pop %v1222
  %v1224 = vmul.f32 %v1219, %v1223
  %1225 = vrot.lane.b32.xlu0 %v120, 48
  %v1226 = vpop.permute.xlu0 %1225
  %v1229 = vsel %vm126, %v1224, 0
  %1231 = vmatprep.subr.mxu0 0.0
  %1232 = vmatpush1.msra.mxu0 %v1226
  %1233 = vmatprep.subr.mxu0 0.0
  %1234 = vmatpush1.msra.mxu0 0.0
  %1235 = vmatprep.subr.mxu0 0.0
  %1236 = vmatpush1.msra.mxu0 0.0
  %1237 = vmatprep.subr.mxu0 0.0
  %1238 = vmatpush1.msra.mxu0 0.0
  %1239 = vmatprep.subr.mxu0 0.0
  %1240 = vmatpush1.msra.mxu0 0.0
  %1241 = vmatprep.subr.mxu0 0.0
  %1242 = vmatpush1.msra.mxu0 0.0
  %1243 = vmatprep.subr.mxu0 0.0
  %1244 = vmatpush1.msra.mxu0 0.0
  %1245 = vmatprep.subr.mxu0 0.0
  %1246 = vmatpush1.msra.mxu0 0.0
  %1247 = vmatprep.subr.mxu0 0.0
  %1248 = vmatpush1.msra.mxu0 0.0
  %1249 = vmatprep.subr.mxu0 0.0
  %1250 = vmatpush1.msra.mxu0 0.0
  %1251 = vmatprep.subr.mxu0 0.0
  %1252 = vmatpush1.msra.mxu0 0.0
  %1253 = vmatprep.subr.mxu0 0.0
  %1254 = vmatpush1.msra.mxu0 0.0
  %1255 = vmatprep.subr.mxu0 0.0
  %1256 = vmatpush1.msra.mxu0 0.0
  %1257 = vmatprep.subr.mxu0 0.0
  %1258 = vmatpush1.msra.mxu0 0.0
  %1259 = vmatprep.subr.mxu0 0.0
  %1260 = vmatpush1.msra.mxu0 0.0
  %1261 = vmatprep.subr.mxu0 0.0
  %1262 = vmatpush1.msra.mxu0 0.0
  %1263 = vmatprep.subr.mxu0 0.0
  %1264 = vmatpush1.msra.mxu0 0.0
  %1265 = vmatprep.subr.mxu0 0.0
  %1266 = vmatpush1.msra.mxu0 0.0
  %1267 = vmatprep.subr.mxu0 0.0
  %1268 = vmatpush1.msra.mxu0 0.0
  %1269 = vmatprep.subr.mxu0 0.0
  %1270 = vmatpush1.msra.mxu0 0.0
  %1271 = vmatprep.subr.mxu0 0.0
  %1272 = vmatpush1.msra.mxu0 0.0
  %1273 = vmatprep.subr.mxu0 0.0
  %1274 = vmatpush1.msra.mxu0 0.0
  %1275 = vmatprep.subr.mxu0 0.0
  %1276 = vmatpush1.msra.mxu0 0.0
  %1277 = vmatprep.subr.mxu0 0.0
  %1278 = vmatpush1.msra.mxu0 0.0
  %1279 = vmatprep.subr.mxu0 0.0
  %1280 = vmatpush1.msra.mxu0 0.0
  %1281 = vmatprep.subr.mxu0 0.0
  %1282 = vmatpush1.msra.mxu0 0.0
  %1283 = vmatprep.subr.mxu0 0.0
  %1284 = vmatpush1.msra.mxu0 0.0
  %1285 = vmatprep.subr.mxu0 0.0
  %1286 = vmatpush1.msra.mxu0 0.0
  %1287 = vmatprep.subr.mxu0 0.0
  %1288 = vmatpush1.msra.mxu0 0.0
  %1289 = vmatprep.subr.mxu0 0.0
  %1290 = vmatpush1.msra.mxu0 0.0
  %1291 = vmatprep.subr.mxu0 0.0
  %1292 = vmatpush1.msra.mxu0 0.0
  %1293 = vmatprep.subr.mxu0 0.0
  %1294 = vmatpush1.msra.mxu0 0.0
  %1295 = vmatprep.mubr.f32.mxu0 0.0
  %1296 = vmatmul.mubr.f32.gmra.mrb[0].mxu0 %v1229
  %v1297 = vpop.f32.mrb[0].mxu0
  %v1298 = vadd.f32 0.0, %v1297
  %v1299 = vpop.f32.mrb[0].mxu0
  %1300 = vdwg.mxu0
  %1301 = vrot.lane.b32.xlu0 %v120, 104
  %v1302 = vpop.permute.xlu0 %1301
  %1303 = vrot.lane.b32.xlu0 %v120, 72
  %v1304 = vpop.permute.xlu0 %1303
  %v1305 = vsel %vm126, %v1302, 0
  %v1307 = vsel %vm126, %v1304, 0
  %1309 = vmatprep.subr.mxu0 0.0
  %1310 = vmatpush1.xpose.msra.mxu0 %v1307
  %1311 = vmatprep.subr.mxu0 0.0
  %1312 = vmatpush1.xpose.msra.mxu0 0.0
  %1313 = vmatprep.subr.mxu0 0.0
  %1314 = vmatpush1.xpose.msra.mxu0 0.0
  %1315 = vmatprep.subr.mxu0 0.0
  %1316 = vmatpush1.xpose.msra.mxu0 0.0
  %1317 = vmatprep.subr.mxu0 0.0
  %1318 = vmatpush1.xpose.msra.mxu0 0.0
  %1319 = vmatprep.subr.mxu0 0.0
  %1320 = vmatpush1.xpose.msra.mxu0 0.0
  %1321 = vmatprep.subr.mxu0 0.0
  %1322 = vmatpush1.xpose.msra.mxu0 0.0
  %1323 = vmatprep.subr.mxu0 0.0
  %1324 = vmatpush1.xpose.msra.mxu0 0.0
  %1325 = vmatprep.subr.mxu0 0.0
  %1326 = vmatpush1.xpose.msra.mxu0 0.0
  %1327 = vmatprep.subr.mxu0 0.0
  %1328 = vmatpush1.xpose.msra.mxu0 0.0
  %1329 = vmatprep.subr.mxu0 0.0
  %1330 = vmatpush1.xpose.msra.mxu0 0.0
  %1331 = vmatprep.subr.mxu0 0.0
  %1332 = vmatpush1.xpose.msra.mxu0 0.0
  %1333 = vmatprep.subr.mxu0 0.0
  %1334 = vmatpush1.xpose.msra.mxu0 0.0
  %1335 = vmatprep.subr.mxu0 0.0
  %1336 = vmatpush1.xpose.msra.mxu0 0.0
  %1337 = vmatprep.subr.mxu0 0.0
  %1338 = vmatpush1.xpose.msra.mxu0 0.0
  %1339 = vmatprep.subr.mxu0 0.0
  %1340 = vmatpush1.xpose.msra.mxu0 0.0
  %1341 = vmatprep.subr.mxu0 0.0
  %1342 = vmatpush1.xpose.msra.mxu0 0.0
  %1343 = vmatprep.subr.mxu0 0.0
  %1344 = vmatpush1.xpose.msra.mxu0 0.0
  %1345 = vmatprep.subr.mxu0 0.0
  %1346 = vmatpush1.xpose.msra.mxu0 0.0
  %1347 = vmatprep.subr.mxu0 0.0
  %1348 = vmatpush1.xpose.msra.mxu0 0.0
  %1349 = vmatprep.subr.mxu0 0.0
  %1350 = vmatpush1.xpose.msra.mxu0 0.0
  %1351 = vmatprep.subr.mxu0 0.0
  %1352 = vmatpush1.xpose.msra.mxu0 0.0
  %1353 = vmatprep.subr.mxu0 0.0
  %1354 = vmatpush1.xpose.msra.mxu0 0.0
  %1355 = vmatprep.subr.mxu0 0.0
  %1356 = vmatpush1.xpose.msra.mxu0 0.0
  %1357 = vmatprep.subr.mxu0 0.0
  %1358 = vmatpush1.xpose.msra.mxu0 0.0
  %1359 = vmatprep.subr.mxu0 0.0
  %1360 = vmatpush1.xpose.msra.mxu0 0.0
  %1361 = vmatprep.subr.mxu0 0.0
  %1362 = vmatpush1.xpose.msra.mxu0 0.0
  %1363 = vmatprep.subr.mxu0 0.0
  %1364 = vmatpush1.xpose.msra.mxu0 0.0
  %1365 = vmatprep.subr.mxu0 0.0
  %1366 = vmatpush1.xpose.msra.mxu0 0.0
  %1367 = vmatprep.subr.mxu0 0.0
  %1368 = vmatpush1.xpose.msra.mxu0 0.0
  %1369 = vmatprep.subr.mxu0 0.0
  %1370 = vmatpush1.xpose.msra.mxu0 0.0
  %1371 = vmatprep.subr.mxu0 0.0
  %1372 = vmatpush1.xpose.msra.mxu0 0.0
  %1373 = vmatprep.mubr.f32.mxu0 0.0
  %1374 = vmatmul.mubr.f32.gmra.mrb[0].mxu0 %v1305
  %v1375 = vpop.f32.mrb[0].mxu0
  %v1376 = vadd.f32 0.0, %v1375
  %v1377 = vpop.f32.mrb[0].mxu0
  %1378 = vdwg.mxu0
  %v1379 = vmul.f32 %v1376, 0.35355338
  %v1380 = vsel %vm126, %v1379, -inf
  %1381 = vmax.xlane.f32.xlu0 %v1380
  %v1382 = vpop.xlane.xlu0 %1381
  %v1383 = vsub.f32 %v1379, %v1382
  %v1384 = vmul.f32 %v1383, 1.442695
  %v1385 = vpow.pop %v1384
  %v1386 = vsel %vm126, %v1385, 0.0
  %1387 = vadd.xlane.f32.xlu0 %v1386
  %v1388 = vpop.xlane.xlu0 %1387
  %v1389 = vrcp.pop %v1388
  %v1390 = vmul.f32 %v1385, %v1389
  %1391 = vrot.lane.b32.xlu0 %v120, 40
  %v1392 = vpop.permute.xlu0 %1391
  %v1395 = vsel %vm126, %v1390, 0
  %1397 = vmatprep.subr.mxu0 0.0
  %1398 = vmatpush1.msra.mxu0 %v1392
  %1399 = vmatprep.subr.mxu0 0.0
  %1400 = vmatpush1.msra.mxu0 0.0
  %1401 = vmatprep.subr.mxu0 0.0
  %1402 = vmatpush1.msra.mxu0 0.0
  %1403 = vmatprep.subr.mxu0 0.0
  %1404 = vmatpush1.msra.mxu0 0.0
  %1405 = vmatprep.subr.mxu0 0.0
  %1406 = vmatpush1.msra.mxu0 0.0
  %1407 = vmatprep.subr.mxu0 0.0
  %1408 = vmatpush1.msra.mxu0 0.0
  %1409 = vmatprep.subr.mxu0 0.0
  %1410 = vmatpush1.msra.mxu0 0.0
  %1411 = vmatprep.subr.mxu0 0.0
  %1412 = vmatpush1.msra.mxu0 0.0
  %1413 = vmatprep.subr.mxu0 0.0
  %1414 = vmatpush1.msra.mxu0 0.0
  %1415 = vmatprep.subr.mxu0 0.0
  %1416 = vmatpush1.msra.mxu0 0.0
  %1417 = vmatprep.subr.mxu0 0.0
  %1418 = vmatpush1.msra.mxu0 0.0
  %1419 = vmatprep.subr.mxu0 0.0
  %1420 = vmatpush1.msra.mxu0 0.0
  %1421 = vmatprep.subr.mxu0 0.0
  %1422 = vmatpush1.msra.mxu0 0.0
  %1423 = vmatprep.subr.mxu0 0.0
  %1424 = vmatpush1.msra.mxu0 0.0
  %1425 = vmatprep.subr.mxu0 0.0
  %1426 = vmatpush1.msra.mxu0 0.0
  %1427 = vmatprep.subr.mxu0 0.0
  %1428 = vmatpush1.msra.mxu0 0.0
  %1429 = vmatprep.subr.mxu0 0.0
  %1430 = vmatpush1.msra.mxu0 0.0
  %1431 = vmatprep.subr.mxu0 0.0
  %1432 = vmatpush1.msra.mxu0 0.0
  %1433 = vmatprep.subr.mxu0 0.0
  %1434 = vmatpush1.msra.mxu0 0.0
  %1435 = vmatprep.subr.mxu0 0.0
  %1436 = vmatpush1.msra.mxu0 0.0
  %1437 = vmatprep.subr.mxu0 0.0
  %1438 = vmatpush1.msra.mxu0 0.0
  %1439 = vmatprep.subr.mxu0 0.0
  %1440 = vmatpush1.msra.mxu0 0.0
  %1441 = vmatprep.subr.mxu0 0.0
  %1442 = vmatpush1.msra.mxu0 0.0
  %1443 = vmatprep.subr.mxu0 0.0
  %1444 = vmatpush1.msra.mxu0 0.0
  %1445 = vmatprep.subr.mxu0 0.0
  %1446 = vmatpush1.msra.mxu0 0.0
  %1447 = vmatprep.subr.mxu0 0.0
  %1448 = vmatpush1.msra.mxu0 0.0
  %1449 = vmatprep.subr.mxu0 0.0
  %1450 = vmatpush1.msra.mxu0 0.0
  %1451 = vmatprep.subr.mxu0 0.0
  %1452 = vmatpush1.msra.mxu0 0.0
  %1453 = vmatprep.subr.mxu0 0.0
  %1454 = vmatpush1.msra.mxu0 0.0
  %1455 = vmatprep.subr.mxu0 0.0
  %1456 = vmatpush1.msra.mxu0 0.0
  %1457 = vmatprep.subr.mxu0 0.0
  %1458 = vmatpush1.msra.mxu0 0.0
  %1459 = vmatprep.subr.mxu0 0.0
  %1460 = vmatpush1.msra.mxu0 0.0
  %1461 = vmatprep.mubr.f32.mxu0 0.0
  %1462 = vmatmul.mubr.f32.gmra.mrb[0].mxu0 %v1395
  %v1463 = vpop.f32.mrb[0].mxu0
  %v1464 = vadd.f32 0.0, %v1463
  %v1465 = vpop.f32.mrb[0].mxu0
  %1466 = vdwg.mxu0
  %1468 = vrot.lane.b32.xlu0 %v1132, 8
  %v1469 = vpop.permute.xlu0 %1468
  %1472 = vrot.lane.b32.xlu0 %v1298, 16
  %v1473 = vpop.permute.xlu0 %1472
  %1476 = vrot.lane.b32.xlu0 %v1464, 24
  %v1477 = vpop.permute.xlu0 %1476
  %v1479 = vsel %vm126, %v966, %v1469
  %v1480 = vsel %vm800, %v1479, %v1473
  %v1481 = vsel %vm802, %v1480, %v1477
  %v1482 = vlaneseq
  %v1483 = vshrl.u32 %v1482, 7
  %v1484 = vsub.s32 0, %v1483
  %v1485 = vrot.slane %v30, %v1484
  %1490 = vrot.lane.b32.xlu0 %v13, 32
  %v1491 = vpop.permute.xlu0 %1490
  %1492 = vrot.lane.b32.xlu0 %v14, 32
  %v1493 = vpop.permute.xlu0 %1492
  %1494 = vrot.lane.b32.xlu0 %v15, 32
  %v1495 = vpop.permute.xlu0 %1494
  %1496 = vrot.lane.b32.xlu0 %v16, 32
  %v1497 = vpop.permute.xlu0 %1496
  %v1503 = vsel %vm41, %v803, 0
  %v1506 = vsel %vm41, %v1481, 0
  %1508 = vmatprep.subr.mxu0 0.0
  %1509 = vmatpush1.msra.mxu0 %v1491
  %1510 = vmatprep.subr.mxu0 0.0
  %1511 = vmatpush1.msra.mxu0 %v1493
  %1512 = vmatprep.subr.mxu0 0.0
  %1513 = vmatpush1.msra.mxu0 %v1495
  %1514 = vmatprep.subr.mxu0 0.0
  %1515 = vmatpush1.msra.mxu0 %v1497
  %1516 = vmatprep.subr.mxu0 0.0
  %1517 = vmatpush1.msra.mxu0 0.0
  %1518 = vmatprep.subr.mxu0 0.0
  %1519 = vmatpush1.msra.mxu0 0.0
  %1520 = vmatprep.subr.mxu0 0.0
  %1521 = vmatpush1.msra.mxu0 0.0
  %1522 = vmatprep.subr.mxu0 0.0
  %1523 = vmatpush1.msra.mxu0 0.0
  %1524 = vmatprep.subr.mxu0 0.0
  %1525 = vmatpush1.msra.mxu0 0.0
  %1526 = vmatprep.subr.mxu0 0.0
  %1527 = vmatpush1.msra.mxu0 0.0
  %1528 = vmatprep.subr.mxu0 0.0
  %1529 = vmatpush1.msra.mxu0 0.0
  %1530 = vmatprep.subr.mxu0 0.0
  %1531 = vmatpush1.msra.mxu0 0.0
  %1532 = vmatprep.subr.mxu0 0.0
  %1533 = vmatpush1.msra.mxu0 0.0
  %1534 = vmatprep.subr.mxu0 0.0
  %1535 = vmatpush1.msra.mxu0 0.0
  %1536 = vmatprep.subr.mxu0 0.0
  %1537 = vmatpush1.msra.mxu0 0.0
  %1538 = vmatprep.subr.mxu0 0.0
  %1539 = vmatpush1.msra.mxu0 0.0
  %1540 = vmatprep.subr.mxu0 0.0
  %1541 = vmatpush1.msra.mxu0 0.0
  %1542 = vmatprep.subr.mxu0 0.0
  %1543 = vmatpush1.msra.mxu0 0.0
  %1544 = vmatprep.subr.mxu0 0.0
  %1545 = vmatpush1.msra.mxu0 0.0
  %1546 = vmatprep.subr.mxu0 0.0
  %1547 = vmatpush1.msra.mxu0 0.0
  %1548 = vmatprep.subr.mxu0 0.0
  %1549 = vmatpush1.msra.mxu0 0.0
  %1550 = vmatprep.subr.mxu0 0.0
  %1551 = vmatpush1.msra.mxu0 0.0
  %1552 = vmatprep.subr.mxu0 0.0
  %1553 = vmatpush1.msra.mxu0 0.0
  %1554 = vmatprep.subr.mxu0 0.0
  %1555 = vmatpush1.msra.mxu0 0.0
  %1556 = vmatprep.subr.mxu0 0.0
  %1557 = vmatpush1.msra.mxu0 0.0
  %1558 = vmatprep.subr.mxu0 0.0
  %1559 = vmatpush1.msra.mxu0 0.0
  %1560 = vmatprep.subr.mxu0 0.0
  %1561 = vmatpush1.msra.mxu0 0.0
  %1562 = vmatprep.subr.mxu0 0.0
  %1563 = vmatpush1.msra.mxu0 0.0
  %1564 = vmatprep.subr.mxu0 0.0
  %1565 = vmatpush1.msra.mxu0 0.0
  %1566 = vmatprep.subr.mxu0 0.0
  %1567 = vmatpush1.msra.mxu0 0.0
  %1568 = vmatprep.subr.mxu0 0.0
  %1569 = vmatpush1.msra.mxu0 0.0
  %1570 = vmatprep.subr.mxu0 0.0
  %1571 = vmatpush1.msra.mxu0 0.0
  %1572 = vmatprep.mubr.f32.mxu0 0.0
  %1573 = vmatmul.mubr.f32.gmra.mrb[0].mxu0 %v1503
  %v1574 = vpop.f32.mrb[0].mxu0
  %v1575 = vadd.f32 %v1485, %v1574
  %v1576 = vpop.f32.mrb[0].mxu0
  %1577 = vmatprep.mubr.f32.mxu0 0.0
  %1578 = vmatmul.mubr.f32.gmra.mrb[0].mxu0 %v1506
  %v1579 = vpop.f32.mrb[0].mxu0
  %v1580 = vadd.f32 %v1485, %v1579
  %v1581 = vpop.f32.mrb[0].mxu0
  %1582 = vdwg.mxu0
  %v1583 = vadd.f32 %v11, %v1575
  %v1584 = vadd.f32 %v12, %v1580
  %v1585 = vsel %vm41, %v1583, 0.0
  %1586 = vadd.xlane.f32.xlu0 %v1585
  %v1587 = vpop.xlane.xlu0 %1586
  %v1588 = vsel %vm41, %v1584, 0.0
  %1589 = vadd.xlane.f32.xlu0 %v1588
  %v1590 = vpop.xlane.xlu0 %1589
  %v1591 = vmul.f32 %v1583, %v1583
  %v1592 = vmul.f32 %v1584, %v1584
  %v1593 = vsel %vm41, %v1591, 0.0
  %1594 = vadd.xlane.f32.xlu0 %v1593
  %v1595 = vpop.xlane.xlu0 %1594
  %v1596 = vsel %vm41, %v1592, 0.0
  %1597 = vadd.xlane.f32.xlu0 %v1596
  %v1598 = vpop.xlane.xlu0 %1597
  %v1599 = vmul.f32 %v1587, 0.03125
  %v1600 = vmul.f32 %v1590, 0.03125
  %v1601 = vmul.f32 %v1595, 0.03125
  %v1602 = vmul.f32 %v1598, 0.03125
  %v1603 = vmul.f32 %v1599, %v1599
  %v1604 = vmul.f32 %v1600, %v1600
  %v1605 = vsub.f32 %v1601, %v1603
  %v1606 = vsub.f32 %v1602, %v1604
  %v1607 = vsub.f32 %v1583, %v1599
  %v1608 = vsub.f32 %v1584, %v1600
  %v1609 = vadd.f32 %v1605, 1e-05
  %v1610 = vadd.f32 %v1606, 1e-05
  %v1611 = vrsqrt.pop %v1609
  %v1612 = vrsqrt.pop %v1610
  %v1613 = vmul.f32 %v1607, %v1611
  %v1614 = vmul.f32 %v1608, %v1612
  %v1615 = vlaneseq
  %v1616 = vshrl.u32 %v1615, 7
  %v1617 = vsub.s32 0, %v1616
  %v1618 = vrot.slane %v31, %v1617
  %v1619 = vmul.f32 %v1613, %v1618
  %v1620 = vmul.f32 %v1614, %v1618
  %v1621 = vlaneseq
  %v1622 = vshrl.u32 %v1621, 7
  %v1623 = vsub.s32 0, %v1622
  %v1624 = vrot.slane %v32, %v1623
  %v1625 = vadd.f32 %v1619, %v1624
  %v1626 = vadd.f32 %v1620, %v1624
  %v1627 = vlaneseq
  %v1628 = vshrl.u32 %v1627, 7
  %v1629 = vsub.s32 0, %v1628
  %v1630 = vrot.slane %v33, %v1629
  %v1632 = vsel %vm41, %v1625, 0
  %v1635 = vsel %vm41, %v1626, 0
  %1637 = vmatprep.subr.mxu0 0.0
  %1638 = vmatpush1.msra.mxu0 %v17
  %1639 = vmatprep.subr.mxu0 0.0
  %1640 = vmatpush1.msra.mxu0 %v18
  %1641 = vmatprep.subr.mxu0 0.0
  %1642 = vmatpush1.msra.mxu0 %v19
  %1643 = vmatprep.subr.mxu0 0.0
  %1644 = vmatpush1.msra.mxu0 %v20
  %1645 = vmatprep.subr.mxu0 0.0
  %1646 = vmatpush1.msra.mxu0 0.0
  %1647 = vmatprep.subr.mxu0 0.0
  %1648 = vmatpush1.msra.mxu0 0.0
  %1649 = vmatprep.subr.mxu0 0.0
  %1650 = vmatpush1.msra.mxu0 0.0
  %1651 = vmatprep.subr.mxu0 0.0
  %1652 = vmatpush1.msra.mxu0 0.0
  %1653 = vmatprep.subr.mxu0 0.0
  %1654 = vmatpush1.msra.mxu0 0.0
  %1655 = vmatprep.subr.mxu0 0.0
  %1656 = vmatpush1.msra.mxu0 0.0
  %1657 = vmatprep.subr.mxu0 0.0
  %1658 = vmatpush1.msra.mxu0 0.0
  %1659 = vmatprep.subr.mxu0 0.0
  %1660 = vmatpush1.msra.mxu0 0.0
  %1661 = vmatprep.subr.mxu0 0.0
  %1662 = vmatpush1.msra.mxu0 0.0
  %1663 = vmatprep.subr.mxu0 0.0
  %1664 = vmatpush1.msra.mxu0 0.0
  %1665 = vmatprep.subr.mxu0 0.0
  %1666 = vmatpush1.msra.mxu0 0.0
  %1667 = vmatprep.subr.mxu0 0.0
  %1668 = vmatpush1.msra.mxu0 0.0
  %1669 = vmatprep.subr.mxu0 0.0
  %1670 = vmatpush1.msra.mxu0 0.0
  %1671 = vmatprep.subr.mxu0 0.0
  %1672 = vmatpush1.msra.mxu0 0.0
  %1673 = vmatprep.subr.mxu0 0.0
  %1674 = vmatpush1.msra.mxu0 0.0
  %1675 = vmatprep.subr.mxu0 0.0
  %1676 = vmatpush1.msra.mxu0 0.0
  %1677 = vmatprep.subr.mxu0 0.0
  %1678 = vmatpush1.msra.mxu0 0.0
  %1679 = vmatprep.subr.mxu0 0.0
  %1680 = vmatpush1.msra.mxu0 0.0
  %1681 = vmatprep.subr.mxu0 0.0
  %1682 = vmatpush1.msra.mxu0 0.0
  %1683 = vmatprep.subr.mxu0 0.0
  %1684 = vmatpush1.msra.mxu0 0.0
  %1685 = vmatprep.subr.mxu0 0.0
  %1686 = vmatpush1.msra.mxu0 0.0
  %1687 = vmatprep.subr.mxu0 0.0
  %1688 = vmatpush1.msra.mxu0 0.0
  %1689 = vmatprep.subr.mxu0 0.0
  %1690 = vmatpush1.msra.mxu0 0.0
  %1691 = vmatprep.subr.mxu0 0.0
  %1692 = vmatpush1.msra.mxu0 0.0
  %1693 = vmatprep.subr.mxu0 0.0
  %1694 = vmatpush1.msra.mxu0 0.0
  %1695 = vmatprep.subr.mxu0 0.0
  %1696 = vmatpush1.msra.mxu0 0.0
  %1697 = vmatprep.subr.mxu0 0.0
  %1698 = vmatpush1.msra.mxu0 0.0
  %1699 = vmatprep.subr.mxu0 0.0
  %1700 = vmatpush1.msra.mxu0 0.0
  %1701 = vmatprep.mubr.f32.mxu0 0.0
  %1702 = vmatmul.mubr.f32.gmra.mrb[0].mxu0 %v1632
  %v1703 = vpop.f32.mrb[0].mxu0
  %v1704 = vadd.f32 %v1630, %v1703
  %v1705 = vpop.f32.mrb[0].mxu0
  %1706 = vmatprep.mubr.f32.mxu0 0.0
  %1707 = vmatmul.mubr.f32.gmra.mrb[0].mxu0 %v1635
  %v1708 = vpop.f32.mrb[0].mxu0
  %v1709 = vadd.f32 %v1630, %v1708
  %v1710 = vpop.f32.mrb[0].mxu0
  %1711 = vdwg.mxu0
  %v1712 = vmax.f32 %v1704, 0.0
  %v1713 = vmax.f32 %v1709, 0.0
  %v1714 = vlaneseq
  %v1715 = vshrl.u32 %v1714, 7
  %v1716 = vsub.s32 0, %v1715
  %v1717 = vrot.slane %v34, %v1716
  %vm1718 = vcmask 523264
  %v1720 = vsel %vm1718, %v1712, 0
  %v1723 = vsel %vm1718, %v1713, 0
  %1725 = vmatprep.subr.mxu0 0.0
  %1726 = vmatpush1.msra.mxu0 %v21
  %1727 = vmatprep.subr.mxu0 0.0
  %1728 = vmatpush1.msra.mxu0 %v22
  %1729 = vmatprep.subr.mxu0 0.0
  %1730 = vmatpush1.msra.mxu0 %v23
  %1731 = vmatprep.subr.mxu0 0.0
  %1732 = vmatpush1.msra.mxu0 %v24
  %1733 = vmatprep.subr.mxu0 0.0
  %1734 = vmatpush1.msra.mxu0 %v25
  %1735 = vmatprep.subr.mxu0 0.0
  %1736 = vmatpush1.msra.mxu0 %v26
  %1737 = vmatprep.subr.mxu0 0.0
  %1738 = vmatpush1.msra.mxu0 %v27
  %1739 = vmatprep.subr.mxu0 0.0
  %1740 = vmatpush1.msra.mxu0 %v28
  %1741 = vmatprep.subr.mxu0 0.0
  %1742 = vmatpush1.msra.mxu0 0.0
  %1743 = vmatprep.subr.mxu0 0.0
  %1744 = vmatpush1.msra.mxu0 0.0
  %1745 = vmatprep.subr.mxu0 0.0
  %1746 = vmatpush1.msra.mxu0 0.0
  %1747 = vmatprep.subr.mxu0 0.0
  %1748 = vmatpush1.msra.mxu0 0.0
  %1749 = vmatprep.subr.mxu0 0.0
  %1750 = vmatpush1.msra.mxu0 0.0
  %1751 = vmatprep.subr.mxu0 0.0
  %1752 = vmatpush1.msra.mxu0 0.0
  %1753 = vmatprep.subr.mxu0 0.0
  %1754 = vmatpush1.msra.mxu0 0.0
  %1755 = vmatprep.subr.mxu0 0.0
  %1756 = vmatpush1.msra.mxu0 0.0
  %1757 = vmatprep.subr.mxu0 0.0
  %1758 = vmatpush1.msra.mxu0 0.0
  %1759 = vmatprep.subr.mxu0 0.0
  %1760 = vmatpush1.msra.mxu0 0.0
  %1761 = vmatprep.subr.mxu0 0.0
  %1762 = vmatpush1.msra.mxu0 0.0
  %1763 = vmatprep.subr.mxu0 0.0
  %1764 = vmatpush1.msra.mxu0 0.0
  %1765 = vmatprep.subr.mxu0 0.0
  %1766 = vmatpush1.msra.mxu0 0.0
  %1767 = vmatprep.subr.mxu0 0.0
  %1768 = vmatpush1.msra.mxu0 0.0
  %1769 = vmatprep.subr.mxu0 0.0
  %1770 = vmatpush1.msra.mxu0 0.0
  %1771 = vmatprep.subr.mxu0 0.0
  %1772 = vmatpush1.msra.mxu0 0.0
  %1773 = vmatprep.subr.mxu0 0.0
  %1774 = vmatpush1.msra.mxu0 0.0
  %1775 = vmatprep.subr.mxu0 0.0
  %1776 = vmatpush1.msra.mxu0 0.0
  %1777 = vmatprep.subr.mxu0 0.0
  %1778 = vmatpush1.msra.mxu0 0.0
  %1779 = vmatprep.subr.mxu0 0.0
  %1780 = vmatpush1.msra.mxu0 0.0
  %1781 = vmatprep.subr.mxu0 0.0
  %1782 = vmatpush1.msra.mxu0 0.0
  %1783 = vmatprep.subr.mxu0 0.0
  %1784 = vmatpush1.msra.mxu0 0.0
  %1785 = vmatprep.subr.mxu0 0.0
  %1786 = vmatpush1.msra.mxu0 0.0
  %1787 = vmatprep.subr.mxu0 0.0
  %1788 = vmatpush1.msra.mxu0 0.0
  %1789 = vmatprep.mubr.f32.mxu0 0.0
  %1790 = vmatmul.mubr.f32.gmra.mrb[0].mxu0 %v1720
  %v1791 = vpop.f32.mrb[0].mxu0
  %v1792 = vadd.f32 %v1717, %v1791
  %v1793 = vpop.f32.mrb[0].mxu0
  %1794 = vmatprep.mubr.f32.mxu0 0.0
  %1795 = vmatmul.mubr.f32.gmra.mrb[0].mxu0 %v1723
  %v1796 = vpop.f32.mrb[0].mxu0
  %v1797 = vadd.f32 %v1717, %v1796
  %v1798 = vpop.f32.mrb[0].mxu0
  %1799 = vdwg.mxu0
  %v1800 = vadd.f32 %v1625, %v1792
  %v1801 = vadd.f32 %v1626, %v1797
  %v1802 = vsel %vm41, %v1800, 0.0
  %1803 = vadd.xlane.f32.xlu0 %v1802
  %v1804 = vpop.xlane.xlu0 %1803
  %v1805 = vsel %vm41, %v1801, 0.0
  %1806 = vadd.xlane.f32.xlu0 %v1805
  %v1807 = vpop.xlane.xlu0 %1806
  %v1808 = vmul.f32 %v1800, %v1800
  %v1809 = vmul.f32 %v1801, %v1801
  %v1810 = vsel %vm41, %v1808, 0.0
  %1811 = vadd.xlane.f32.xlu0 %v1810
  %v1812 = vpop.xlane.xlu0 %1811
  %v1813 = vsel %vm41, %v1809, 0.0
  %1814 = vadd.xlane.f32.xlu0 %v1813
  %v1815 = vpop.xlane.xlu0 %1814
  %v1816 = vmul.f32 %v1804, 0.03125
  %v1817 = vmul.f32 %v1807, 0.03125
  %v1818 = vmul.f32 %v1812, 0.03125
  %v1819 = vmul.f32 %v1815, 0.03125
  %v1820 = vmul.f32 %v1816, %v1816
  %v1821 = vmul.f32 %v1817, %v1817
  %v1822 = vsub.f32 %v1818, %v1820
  %v1823 = vsub.f32 %v1819, %v1821
  %v1824 = vsub.f32 %v1800, %v1816
  %v1825 = vsub.f32 %v1801, %v1817
  %v1826 = vadd.f32 %v1822, 1e-05
  %v1827 = vadd.f32 %v1823, 1e-05
  %v1828 = vrsqrt.pop %v1826
  %v1829 = vrsqrt.pop %v1827
  %v1830 = vmul.f32 %v1824, %v1828
  %v1831 = vmul.f32 %v1825, %v1829
  %v1832 = vlaneseq
  %v1833 = vshrl.u32 %v1832, 7
  %v1834 = vsub.s32 0, %v1833
  %v1835 = vrot.slane %v35, %v1834
  %v1836 = vmul.f32 %v1830, %v1835
  %v1837 = vmul.f32 %v1831, %v1835
  %v1838 = vlaneseq
  %v1839 = vshrl.u32 %v1838, 7
  %v1840 = vsub.s32 0, %v1839
  %v1841 = vrot.slane %v36, %v1840
  %v1842 = vadd.f32 %v1836, %v1841
  %v1843 = vadd.f32 %v1837, %v1841
  %v1844 = vld [vmem:[%s1 + $0x88] sm:$0xff]
  %v1845 = vld [vmem:[%s1 + $0x90] sm:$0xff]
  %v1846 = vld [vmem:[%s1 + $0x98] sm:$0xff]
  %v1847 = vld [vmem:[%s1 + $0xa0] sm:$0xff]
  %v1848 = vld [vmem:[%s1 + $0xa8] sm:$0xff]
  %v1849 = vld [vmem:[%s1 + $0xb0] sm:$0xff]
  %v1850 = vld [vmem:[%s1 + $0xb8] sm:$0xff]
  %v1851 = vld [vmem:[%s1 + $0xc0] sm:$0xff]
  %v1852 = vld [vmem:[%s1 + $0xc8] sm:$0xff]
  %v1853 = vld [vmem:[%s1 + $0xd0] sm:$0xff]
  %v1854 = vld [vmem:[%s1 + $0xd8] sm:$0xff]
  %v1855 = vld [vmem:[%s1 + $0xe0] sm:$0xff]
  %v1856 = vld [vmem:[%s1 + $0xe8] sm:$0xff]
  %v1857 = vld [vmem:[%s1 + $0xf0] sm:$0xff]
  %v1858 = vld [vmem:[%s1 + $0xf8] sm:$0xff]
  %v1859 = vld [vmem:[%s1 + $0x100] sm:$0xff]
  %v1860 = vld [vmem:[%s1 + $0x108] sm:$0x1]
  %v1861 = vld [vmem:[%s1 + $0x109] sm:$0x1]
  %v1862 = vld [vmem:[%s1 + $0x10a] sm:$0x1]
  %v1863 = vld [vmem:[%s1 + $0x10b] sm:$0x1]
  %v1864 = vld [vmem:[%s1 + $0x10c] sm:$0x1]
  %v1865 = vld [vmem:[%s1 + $0x10d] sm:$0x1]
  %v1866 = vld [vmem:[%s1 + $0x10e] sm:$0x1]
  %v1867 = vld [vmem:[%s1 + $0x10f] sm:$0x1]
  %v1868 = vlaneseq
  %v1869 = vshrl.u32 %v1868, 7
  %v1870 = vsub.s32 0, %v1869
  %v1871 = vrot.slane %v1860, %v1870
  %v1873 = vsel %vm41, %v1842, 0
  %v1876 = vsel %vm41, %v1843, 0
  %1878 = vmatprep.subr.mxu0 0.0
  %1879 = vmatpush1.msra.mxu0 %v1844
  %1880 = vmatprep.subr.mxu0 0.0
  %1881 = vmatpush1.msra.mxu0 %v1845
  %1882 = vmatprep.subr.mxu0 0.0
  %1883 = vmatpush1.msra.mxu0 %v1846
  %1884 = vmatprep.subr.mxu0 0.0
  %1885 = vmatpush1.msra.mxu0 %v1847
  %1886 = vmatprep.subr.mxu0 0.0
  %1887 = vmatpush1.msra.mxu0 0.0
  %1888 = vmatprep.subr.mxu0 0.0
  %1889 = vmatpush1.msra.mxu0 0.0
  %1890 = vmatprep.subr.mxu0 0.0
  %1891 = vmatpush1.msra.mxu0 0.0
  %1892 = vmatprep.subr.mxu0 0.0
  %1893 = vmatpush1.msra.mxu0 0.0
  %1894 = vmatprep.subr.mxu0 0.0
  %1895 = vmatpush1.msra.mxu0 0.0
  %1896 = vmatprep.subr.mxu0 0.0
  %1897 = vmatpush1.msra.mxu0 0.0
  %1898 = vmatprep.subr.mxu0 0.0
  %1899 = vmatpush1.msra.mxu0 0.0
  %1900 = vmatprep.subr.mxu0 0.0
  %1901 = vmatpush1.msra.mxu0 0.0
  %1902 = vmatprep.subr.mxu0 0.0
  %1903 = vmatpush1.msra.mxu0 0.0
  %1904 = vmatprep.subr.mxu0 0.0
  %1905 = vmatpush1.msra.mxu0 0.0
  %1906 = vmatprep.subr.mxu0 0.0
  %1907 = vmatpush1.msra.mxu0 0.0
  %1908 = vmatprep.subr.mxu0 0.0
  %1909 = vmatpush1.msra.mxu0 0.0
  %1910 = vmatprep.subr.mxu0 0.0
  %1911 = vmatpush1.msra.mxu0 0.0
  %1912 = vmatprep.subr.mxu0 0.0
  %1913 = vmatpush1.msra.mxu0 0.0
  %1914 = vmatprep.subr.mxu0 0.0
  %1915 = vmatpush1.msra.mxu0 0.0
  %1916 = vmatprep.subr.mxu0 0.0
  %1917 = vmatpush1.msra.mxu0 0.0
  %1918 = vmatprep.subr.mxu0 0.0
  %1919 = vmatpush1.msra.mxu0 0.0
  %1920 = vmatprep.subr.mxu0 0.0
  %1921 = vmatpush1.msra.mxu0 0.0
  %1922 = vmatprep.subr.mxu0 0.0
  %1923 = vmatpush1.msra.mxu0 0.0
  %1924 = vmatprep.subr.mxu0 0.0
  %1925 = vmatpush1.msra.mxu0 0.0
  %1926 = vmatprep.subr.mxu0 0.0
  %1927 = vmatpush1.msra.mxu0 0.0
  %1928 = vmatprep.subr.mxu0 0.0
  %1929 = vmatpush1.msra.mxu0 0.0
  %1930 = vmatprep.subr.mxu0 0.0
  %1931 = vmatpush1.msra.mxu0 0.0
  %1932 = vmatprep.subr.mxu0 0.0
  %1933 = vmatpush1.msra.mxu0 0.0
  %1934 = vmatprep.subr.mxu0 0.0
  %1935 = vmatpush1.msra.mxu0 0.0
  %1936 = vmatprep.subr.mxu0 0.0
  %1937 = vmatpush1.msra.mxu0 0.0
  %1938 = vmatprep.subr.mxu0 0.0
  %1939 = vmatpush1.msra.mxu0 0.0
  %1940 = vmatprep.subr.mxu0 0.0
  %1941 = vmatpush1.msra.mxu0 0.0
  %1942 = vmatprep.mubr.f32.mxu0 0.0
  %1943 = vmatmul.mubr.f32.gmra.mrb[0].mxu0 %v1873
  %v1944 = vpop.f32.mrb[0].mxu0
  %v1945 = vadd.f32 %v1871, %v1944
  %v1946 = vpop.f32.mrb[0].mxu0
  %1947 = vmatprep.mubr.f32.mxu0 0.0
  %1948 = vmatmul.mubr.f32.gmra.mrb[0].mxu0 %v1876
  %v1949 = vpop.f32.mrb[0].mxu0
  %v1950 = vadd.f32 %v1871, %v1949
  %v1951 = vpop.f32.mrb[0].mxu0
  %1952 = vdwg.mxu0
  %1954 = vrot.lane.b32.xlu0 %v1945, 96
  %v1955 = vpop.permute.xlu0 %1954
  %v1956 = vsel %vm126, %v1945, 0
  %v1958 = vsel %vm126, %v1955, 0
  %1960 = vmatprep.subr.mxu0 0.0
  %1961 = vmatpush1.xpose.msra.mxu0 %v1958
  %1962 = vmatprep.subr.mxu0 0.0
  %1963 = vmatpush1.xpose.msra.mxu0 0.0
  %1964 = vmatprep.subr.mxu0 0.0
  %1965 = vmatpush1.xpose.msra.mxu0 0.0
  %1966 = vmatprep.subr.mxu0 0.0
  %1967 = vmatpush1.xpose.msra.mxu0 0.0
  %1968 = vmatprep.subr.mxu0 0.0
  %1969 = vmatpush1.xpose.msra.mxu0 0.0
  %1970 = vmatprep.subr.mxu0 0.0
  %1971 = vmatpush1.xpose.msra.mxu0 0.0
  %1972 = vmatprep.subr.mxu0 0.0
  %1973 = vmatpush1.xpose.msra.mxu0 0.0
  %1974 = vmatprep.subr.mxu0 0.0
  %1975 = vmatpush1.xpose.msra.mxu0 0.0
  %1976 = vmatprep.subr.mxu0 0.0
  %1977 = vmatpush1.xpose.msra.mxu0 0.0
  %1978 = vmatprep.subr.mxu0 0.0
  %1979 = vmatpush1.xpose.msra.mxu0 0.0
  %1980 = vmatprep.subr.mxu0 0.0
  %1981 = vmatpush1.xpose.msra.mxu0 0.0
  %1982 = vmatprep.subr.mxu0 0.0
  %1983 = vmatpush1.xpose.msra.mxu0 0.0
  %1984 = vmatprep.subr.mxu0 0.0
  %1985 = vmatpush1.xpose.msra.mxu0 0.0
  %1986 = vmatprep.subr.mxu0 0.0
  %1987 = vmatpush1.xpose.msra.mxu0 0.0
  %1988 = vmatprep.subr.mxu0 0.0
  %1989 = vmatpush1.xpose.msra.mxu0 0.0
  %1990 = vmatprep.subr.mxu0 0.0
  %1991 = vmatpush1.xpose.msra.mxu0 0.0
  %1992 = vmatprep.subr.mxu0 0.0
  %1993 = vmatpush1.xpose.msra.mxu0 0.0
  %1994 = vmatprep.subr.mxu0 0.0
  %1995 = vmatpush1.xpose.msra.mxu0 0.0
  %1996 = vmatprep.subr.mxu0 0.0
  %1997 = vmatpush1.xpose.msra.mxu0 0.0
  %1998 = vmatprep.subr.mxu0 0.0
  %1999 = vmatpush1.xpose.msra.mxu0 0.0
  %2000 = vmatprep.subr.mxu0 0.0
  %2001 = vmatpush1.xpose.msra.mxu0 0.0
  %2002 = vmatprep.subr.mxu0 0.0
  %2003 = vmatpush1.xpose.msra.mxu0 0.0
  %2004 = vmatprep.subr.mxu0 0.0
  %2005 = vmatpush1.xpose.msra.mxu0 0.0
  %2006 = vmatprep.subr.mxu0 0.0
  %2007 = vmatpush1.xpose.msra.mxu0 0.0
  %2008 = vmatprep.subr.mxu0 0.0
  %2009 = vmatpush1.xpose.msra.mxu0 0.0
  %2010 = vmatprep.subr.mxu0 0.0
  %2011 = vmatpush1.xpose.msra.mxu0 0.0
  %2012 = vmatprep.subr.mxu0 0.0
  %2013 = vmatpush1.xpose.msra.mxu0 0.0
  %2014 = vmatprep.subr.mxu0 0.0
  %2015 = vmatpush1.xpose.msra.mxu0 0.0
  %2016 = vmatprep.subr.mxu0 0.0
  %2017 = vmatpush1.xpose.msra.mxu0 0.0
  %2018 = vmatprep.subr.mxu0 0.0
  %2019 = vmatpush1.xpose.msra.mxu0 0.0
  %2020 = vmatprep.subr.mxu0 0.0
  %2021 = vmatpush1.xpose.msra.mxu0 0.0
  %2022 = vmatprep.subr.mxu0 0.0
  %2023 = vmatpush1.xpose.msra.mxu0 0.0
  %2024 = vmatprep.mubr.f32.mxu0 0.0
  %2025 = vmatmul.mubr.f32.gmra.mrb[0].mxu0 %v1956
  %v2026 = vpop.f32.mrb[0].mxu0
  %v2027 = vadd.f32 0.0, %v2026
  %v2028 = vpop.f32.mrb[0].mxu0
  %2029 = vdwg.mxu0
  %v2030 = vmul.f32 %v2027, 0.35355338
  %v2031 = vsel %vm126, %v2030, -inf
  %2032 = vmax.xlane.f32.xlu0 %v2031
  %v2033 = vpop.xlane.xlu0 %2032
  %v2034 = vsub.f32 %v2030, %v2033
  %v2035 = vmul.f32 %v2034, 1.442695
  %v2036 = vpow.pop %v2035
  %v2037 = vsel %vm126, %v2036, 0.0
  %2038 = vadd.xlane.f32.xlu0 %v2037
  %v2039 = vpop.xlane.xlu0 %2038
  %v2040 = vrcp.pop %v2039
  %v2041 = vmul.f32 %v2036, %v2040
  %2042 = vrot.lane.b32.xlu0 %v1945, 64
  %v2043 = vpop.permute.xlu0 %2042
  %v2046 = vsel %vm126, %v2041, 0
  %2048 = vmatprep.subr.mxu0 0.0
  %2049 = vmatpush1.msra.mxu0 %v2043
  %2050 = vmatprep.subr.mxu0 0.0
  %2051 = vmatpush1.msra.mxu0 0.0
  %2052 = vmatprep.subr.mxu0 0.0
  %2053 = vmatpush1.msra.mxu0 0.0
  %2054 = vmatprep.subr.mxu0 0.0
  %2055 = vmatpush1.msra.mxu0 0.0
  %2056 = vmatprep.subr.mxu0 0.0
  %2057 = vmatpush1.msra.mxu0 0.0
  %2058 = vmatprep.subr.mxu0 0.0
  %2059 = vmatpush1.msra.mxu0 0.0
  %2060 = vmatprep.subr.mxu0 0.0
  %2061 = vmatpush1.msra.mxu0 0.0
  %2062 = vmatprep.subr.mxu0 0.0
  %2063 = vmatpush1.msra.mxu0 0.0
  %2064 = vmatprep.subr.mxu0 0.0
  %2065 = vmatpush1.msra.mxu0 0.0
  %2066 = vmatprep.subr.mxu0 0.0
  %2067 = vmatpush1.msra.mxu0 0.0
  %2068 = vmatprep.subr.mxu0 0.0
  %2069 = vmatpush1.msra.mxu0 0.0
  %2070 = vmatprep.subr.mxu0 0.0
  %2071 = vmatpush1.msra.mxu0 0.0
  %2072 = vmatprep.subr.mxu0 0.0
  %2073 = vmatpush1.msra.mxu0 0.0
  %2074 = vmatprep.subr.mxu0 0.0
  %2075 = vmatpush1.msra.mxu0 0.0
  %2076 = vmatprep.subr.mxu0 0.0
  %2077 = vmatpush1.msra.mxu0 0.0
  %2078 = vmatprep.subr.mxu0 0.0
  %2079 = vmatpush1.msra.mxu0 0.0
  %2080 = vmatprep.subr.mxu0 0.0
  %2081 = vmatpush1.msra.mxu0 0.0
  %2082 = vmatprep.subr.mxu0 0.0
  %2083 = vmatpush1.msra.mxu0 0.0
  %2084 = vmatprep.subr.mxu0 0.0
  %2085 = vmatpush1.msra.mxu0 0.0
  %2086 = vmatprep.subr.mxu0 0.0
  %2087 = vmatpush1.msra.mxu0 0.0
  %2088 = vmatprep.subr.mxu0 0.0
  %2089 = vmatpush1.msra.mxu0 0.0
  %2090 = vmatprep.subr.mxu0 0.0
  %2091 = vmatpush1.msra.mxu0 0.0
  %2092 = vmatprep.subr.mxu0 0.0
  %2093 = vmatpush1.msra.mxu0 0.0
  %2094 = vmatprep.subr.mxu0 0.0
  %2095 = vmatpush1.msra.mxu0 0.0
  %2096 = vmatprep.subr.mxu0 0.0
  %2097 = vmatpush1.msra.mxu0 0.0
  %2098 = vmatprep.subr.mxu0 0.0
  %2099 = vmatpush1.msra.mxu0 0.0
  %2100 = vmatprep.subr.mxu0 0.0
  %2101 = vmatpush1.msra.mxu0 0.0
  %2102 = vmatprep.subr.mxu0 0.0
  %2103 = vmatpush1.msra.mxu0 0.0
  %2104 = vmatprep.subr.mxu0 0.0
  %2105 = vmatpush1.msra.mxu0 0.0
  %2106 = vmatprep.subr.mxu0 0.0
  %2107 = vmatpush1.msra.mxu0 0.0
  %2108 = vmatprep.subr.mxu0 0.0
  %2109 = vmatpush1.msra.mxu0 0.0
  %2110 = vmatprep.subr.mxu0 0.0
  %2111 = vmatpush1.msra.mxu0 0.0
  %2112 = vmatprep.mubr.f32.mxu0 0.0
  %2113 = vmatmul.mubr.f32.gmra.mrb[0].mxu0 %v2046
  %v2114 = vpop.f32.mrb[0].mxu0
  %v2115 = vadd.f32 0.0, %v2114
  %v2116 = vpop.f32.mrb[0].mxu0
  %2117 = vdwg.mxu0
  %2118 = vrot.lane.b32.xlu0 %v1945, 120
  %v2119 = vpop.permute.xlu0 %2118
  %2120 = vrot.lane.b32.xlu0 %v1945, 88
  %v2121 = vpop.permute.xlu0 %2120
  %v2122 = vsel %vm126, %v2119, 0
  %v2124 = vsel %vm126, %v2121, 0
  %2126 = vmatprep.subr.mxu0 0.0
  %2127 = vmatpush1.xpose.msra.mxu0 %v2124
  %2128 = vmatprep.subr.mxu0 0.0
  %2129 = vmatpush1.xpose.msra.mxu0 0.0
  %2130 = vmatprep.subr.mxu0 0.0
  %2131 = vmatpush1.xpose.msra.mxu0 0.0
  %2132 = vmatprep.subr.mxu0 0.0
  %2133 = vmatpush1.xpose.msra.mxu0 0.0
  %2134 = vmatprep.subr.mxu0 0.0
  %2135 = vmatpush1.xpose.msra.mxu0 0.0
  %2136 = vmatprep.subr.mxu0 0.0
  %2137 = vmatpush1.xpose.msra.mxu0 0.0
  %2138 = vmatprep.subr.mxu0 0.0
  %2139 = vmatpush1.xpose.msra.mxu0 0.0
  %2140 = vmatprep.subr.mxu0 0.0
  %2141 = vmatpush1.xpose.msra.mxu0 0.0
  %2142 = vmatprep.subr.mxu0 0.0
  %2143 = vmatpush1.xpose.msra.mxu0 0.0
  %2144 = vmatprep.subr.mxu0 0.0
  %2145 = vmatpush1.xpose.msra.mxu0 0.0
  %2146 = vmatprep.subr.mxu0 0.0
  %2147 = vmatpush1.xpose.msra.mxu0 0.0
  %2148 = vmatprep.subr.mxu0 0.0
  %2149 = vmatpush1.xpose.msra.mxu0 0.0
  %2150 = vmatprep.subr.mxu0 0.0
  %2151 = vmatpush1.xpose.msra.mxu0 0.0
  %2152 = vmatprep.subr.mxu0 0.0
  %2153 = vmatpush1.xpose.msra.mxu0 0.0
  %2154 = vmatprep.subr.mxu0 0.0
  %2155 = vmatpush1.xpose.msra.mxu0 0.0
  %2156 = vmatprep.subr.mxu0 0.0
  %2157 = vmatpush1.xpose.msra.mxu0 0.0
  %2158 = vmatprep.subr.mxu0 0.0
  %2159 = vmatpush1.xpose.msra.mxu0 0.0
  %2160 = vmatprep.subr.mxu0 0.0
  %2161 = vmatpush1.xpose.msra.mxu0 0.0
  %2162 = vmatprep.subr.mxu0 0.0
  %2163 = vmatpush1.xpose.msra.mxu0 0.0
  %2164 = vmatprep.subr.mxu0 0.0
  %2165 = vmatpush1.xpose.msra.mxu0 0.0
  %2166 = vmatprep.subr.mxu0 0.0
  %2167 = vmatpush1.xpose.msra.mxu0 0.0
  %2168 = vmatprep.subr.mxu0 0.0
  %2169 = vmatpush1.xpose.msra.mxu0 0.0
  %2170 = vmatprep.subr.mxu0 0.0
  %2171 = vmatpush1.xpose.msra.mxu0 0.0
  %2172 = vmatprep.subr.mxu0 0.0
  %2173 = vmatpush1.xpose.msra.mxu0 0.0
  %2174 = vmatprep.subr.mxu0 0.0
  %2175 = vmatpush1.xpose.msra.mxu0 0.0
  %2176 = vmatprep.subr.mxu0 0.0
  %2177 = vmatpush1.xpose.msra.mxu0 0.0
  %2178 = vmatprep.subr.mxu0 0.0
  %2179 = vmatpush1.xpose.msra.mxu0 0.0
  %2180 = vmatprep.subr.mxu0 0.0
  %2181 = vmatpush1.xpose.msra.mxu0 0.0
  %2182 = vmatprep.subr.mxu0 0.0
  %2183 = vmatpush1.xpose.msra.mxu0 0.0
  %2184 = vmatprep.subr.mxu0 0.0
  %2185 = vmatpush1.xpose.msra.mxu0 0.0
  %2186 = vmatprep.subr.mxu0 0.0
  %2187 = vmatpush1.xpose.msra.mxu0 0.0
  %2188 = vmatprep.subr.mxu0 0.0
  %2189 = vmatpush1.xpose.msra.mxu0 0.0
  %2190 = vmatprep.mubr.f32.mxu0 0.0
  %2191 = vmatmul.mubr.f32.gmra.mrb[0].mxu0 %v2122
  %v2192 = vpop.f32.mrb[0].mxu0
  %v2193 = vadd.f32 0.0, %v2192
  %v2194 = vpop.f32.mrb[0].mxu0
  %2195 = vdwg.mxu0
  %v2196 = vmul.f32 %v2193, 0.35355338
  %v2197 = vsel %vm126, %v2196, -inf
  %2198 = vmax.xlane.f32.xlu0 %v2197
  %v2199 = vpop.xlane.xlu0 %2198
  %v2200 = vsub.f32 %v2196, %v2199
  %v2201 = vmul.f32 %v2200, 1.442695
  %v2202 = vpow.pop %v2201
  %v2203 = vsel %vm126, %v2202, 0.0
  %2204 = vadd.xlane.f32.xlu0 %v2203
  %v2205 = vpop.xlane.xlu0 %2204
  %v2206 = vrcp.pop %v2205
  %v2207 = vmul.f32 %v2202, %v2206
  %2208 = vrot.lane.b32.xlu0 %v1945, 56
  %v2209 = vpop.permute.xlu0 %2208
  %v2212 = vsel %vm126, %v2207, 0
  %2214 = vmatprep.subr.mxu0 0.0
  %2215 = vmatpush1.msra.mxu0 %v2209
  %2216 = vmatprep.subr.mxu0 0.0
  %2217 = vmatpush1.msra.mxu0 0.0
  %2218 = vmatprep.subr.mxu0 0.0
  %2219 = vmatpush1.msra.mxu0 0.0
  %2220 = vmatprep.subr.mxu0 0.0
  %2221 = vmatpush1.msra.mxu0 0.0
  %2222 = vmatprep.subr.mxu0 0.0
  %2223 = vmatpush1.msra.mxu0 0.0
  %2224 = vmatprep.subr.mxu0 0.0
  %2225 = vmatpush1.msra.mxu0 0.0
  %2226 = vmatprep.subr.mxu0 0.0
  %2227 = vmatpush1.msra.mxu0 0.0
  %2228 = vmatprep.subr.mxu0 0.0
  %2229 = vmatpush1.msra.mxu0 0.0
  %2230 = vmatprep.subr.mxu0 0.0
  %2231 = vmatpush1.msra.mxu0 0.0
  %2232 = vmatprep.subr.mxu0 0.0
  %2233 = vmatpush1.msra.mxu0 0.0
  %2234 = vmatprep.subr.mxu0 0.0
  %2235 = vmatpush1.msra.mxu0 0.0
  %2236 = vmatprep.subr.mxu0 0.0
  %2237 = vmatpush1.msra.mxu0 0.0
  %2238 = vmatprep.subr.mxu0 0.0
  %2239 = vmatpush1.msra.mxu0 0.0
  %2240 = vmatprep.subr.mxu0 0.0
  %2241 = vmatpush1.msra.mxu0 0.0
  %2242 = vmatprep.subr.mxu0 0.0
  %2243 = vmatpush1.msra.mxu0 0.0
  %2244 = vmatprep.subr.mxu0 0.0
  %2245 = vmatpush1.msra.mxu0 0.0
  %2246 = vmatprep.subr.mxu0 0.0
  %2247 = vmatpush1.msra.mxu0 0.0
  %2248 = vmatprep.subr.mxu0 0.0
  %2249 = vmatpush1.msra.mxu0 0.0
  %2250 = vmatprep.subr.mxu0 0.0
  %2251 = vmatpush1.msra.mxu0 0.0
  %2252 = vmatprep.subr.mxu0 0.0
  %2253 = vmatpush1.msra.mxu0 0.0
  %2254 = vmatprep.subr.mxu0 0.0
  %2255 = vmatpush1.msra.mxu0 0.0
  %2256 = vmatprep.subr.mxu0 0.0
  %2257 = vmatpush1.msra.mxu0 0.0
  %2258 = vmatprep.subr.mxu0 0.0
  %2259 = vmatpush1.msra.mxu0 0.0
  %2260 = vmatprep.subr.mxu0 0.0
  %2261 = vmatpush1.msra.mxu0 0.0
  %2262 = vmatprep.subr.mxu0 0.0
  %2263 = vmatpush1.msra.mxu0 0.0
  %2264 = vmatprep.subr.mxu0 0.0
  %2265 = vmatpush1.msra.mxu0 0.0
  %2266 = vmatprep.subr.mxu0 0.0
  %2267 = vmatpush1.msra.mxu0 0.0
  %2268 = vmatprep.subr.mxu0 0.0
  %2269 = vmatpush1.msra.mxu0 0.0
  %2270 = vmatprep.subr.mxu0 0.0
  %2271 = vmatpush1.msra.mxu0 0.0
  %2272 = vmatprep.subr.mxu0 0.0
  %2273 = vmatpush1.msra.mxu0 0.0
  %2274 = vmatprep.subr.mxu0 0.0
  %2275 = vmatpush1.msra.mxu0 0.0
  %2276 = vmatprep.subr.mxu0 0.0
  %2277 = vmatpush1.msra.mxu0 0.0
  %2278 = vmatprep.mubr.f32.mxu0 0.0
  %2279 = vmatmul.mubr.f32.gmra.mrb[0].mxu0 %v2212
  %v2280 = vpop.f32.mrb[0].mxu0
  %v2281 = vadd.f32 0.0, %v2280
  %v2282 = vpop.f32.mrb[0].mxu0
  %2283 = vdwg.mxu0
  %2284 = vrot.lane.b32.xlu0 %v1945, 112
  %v2285 = vpop.permute.xlu0 %2284
  %2286 = vrot.lane.b32.xlu0 %v1945, 80
  %v2287 = vpop.permute.xlu0 %2286
  %v2288 = vsel %vm126, %v2285, 0
  %v2290 = vsel %vm126, %v2287, 0
  %2292 = vmatprep.subr.mxu0 0.0
  %2293 = vmatpush1.xpose.msra.mxu0 %v2290
  %2294 = vmatprep.subr.mxu0 0.0
  %2295 = vmatpush1.xpose.msra.mxu0 0.0
  %2296 = vmatprep.subr.mxu0 0.0
  %2297 = vmatpush1.xpose.msra.mxu0 0.0
  %2298 = vmatprep.subr.mxu0 0.0
  %2299 = vmatpush1.xpose.msra.mxu0 0.0
  %2300 = vmatprep.subr.mxu0 0.0
  %2301 = vmatpush1.xpose.msra.mxu0 0.0
  %2302 = vmatprep.subr.mxu0 0.0
  %2303 = vmatpush1.xpose.msra.mxu0 0.0
  %2304 = vmatprep.subr.mxu0 0.0
  %2305 = vmatpush1.xpose.msra.mxu0 0.0
  %2306 = vmatprep.subr.mxu0 0.0
  %2307 = vmatpush1.xpose.msra.mxu0 0.0
  %2308 = vmatprep.subr.mxu0 0.0
  %2309 = vmatpush1.xpose.msra.mxu0 0.0
  %2310 = vmatprep.subr.mxu0 0.0
  %2311 = vmatpush1.xpose.msra.mxu0 0.0
  %2312 = vmatprep.subr.mxu0 0.0
  %2313 = vmatpush1.xpose.msra.mxu0 0.0
  %2314 = vmatprep.subr.mxu0 0.0
  %2315 = vmatpush1.xpose.msra.mxu0 0.0
  %2316 = vmatprep.subr.mxu0 0.0
  %2317 = vmatpush1.xpose.msra.mxu0 0.0
  %2318 = vmatprep.subr.mxu0 0.0
  %2319 = vmatpush1.xpose.msra.mxu0 0.0
  %2320 = vmatprep.subr.mxu0 0.0
  %2321 = vmatpush1.xpose.msra.mxu0 0.0
  %2322 = vmatprep.subr.mxu0 0.0
  %2323 = vmatpush1.xpose.msra.mxu0 0.0
  %2324 = vmatprep.subr.mxu0 0.0
  %2325 = vmatpush1.xpose.msra.mxu0 0.0
  %2326 = vmatprep.subr.mxu0 0.0
  %2327 = vmatpush1.xpose.msra.mxu0 0.0
  %2328 = vmatprep.subr.mxu0 0.0
  %2329 = vmatpush1.xpose.msra.mxu0 0.0
  %2330 = vmatprep.subr.mxu0 0.0
  %2331 = vmatpush1.xpose.msra.mxu0 0.0
  %2332 = vmatprep.subr.mxu0 0.0
  %2333 = vmatpush1.xpose.msra.mxu0 0.0
  %2334 = vmatprep.subr.mxu0 0.0
  %2335 = vmatpush1.xpose.msra.mxu0 0.0
  %2336 = vmatprep.subr.mxu0 0.0
  %2337 = vmatpush1.xpose.msra.mxu0 0.0
  %2338 = vmatprep.subr.mxu0 0.0
  %2339 = vmatpush1.xpose.msra.mxu0 0.0
  %2340 = vmatprep.subr.mxu0 0.0
  %2341 = vmatpush1.xpose.msra.mxu0 0.0
  %2342 = vmatprep.subr.mxu0 0.0
  %2343 = vmatpush1.xpose.msra.mxu0 0.0
  %2344 = vmatprep.subr.mxu0 0.0
  %2345 = vmatpush1.xpose.msra.mxu0 0.0
  %2346 = vmatprep.subr.mxu0 0.0
  %2347 = vmatpush1.xpose.msra.mxu0 0.0
  %2348 = vmatprep.subr.mxu0 0.0
  %2349 = vmatpush1.xpose.msra.mxu0 0.0
  %2350 = vmatprep.subr.mxu0 0.0
  %2351 = vmatpush1.xpose.msra.mxu0 0.0
  %2352 = vmatprep.subr.mxu0 0.0
  %2353 = vmatpush1.xpose.msra.mxu0 0.0
  %2354 = vmatprep.subr.mxu0 0.0
  %2355 = vmatpush1.xpose.msra.mxu0 0.0
  %2356 = vmatprep.mubr.f32.mxu0 0.0
  %2357 = vmatmul.mubr.f32.gmra.mrb[0].mxu0 %v2288
  %v2358 = vpop.f32.mrb[0].mxu0
  %v2359 = vadd.f32 0.0, %v2358
  %v2360 = vpop.f32.mrb[0].mxu0
  %2361 = vdwg.mxu0
  %v2362 = vmul.f32 %v2359, 0.35355338
  %v2363 = vsel %vm126, %v2362, -inf
  %2364 = vmax.xlane.f32.xlu0 %v2363
  %v2365 = vpop.xlane.xlu0 %2364
  %v2366 = vsub.f32 %v2362, %v2365
  %v2367 = vmul.f32 %v2366, 1.442695
  %v2368 = vpow.pop %v2367
  %v2369 = vsel %vm126, %v2368, 0.0
  %2370 = vadd.xlane.f32.xlu0 %v2369
  %v2371 = vpop.xlane.xlu0 %2370
  %v2372 = vrcp.pop %v2371
  %v2373 = vmul.f32 %v2368, %v2372
  %2374 = vrot.lane.b32.xlu0 %v1945, 48
  %v2375 = vpop.permute.xlu0 %2374
  %v2378 = vsel %vm126, %v2373, 0
  %2380 = vmatprep.subr.mxu0 0.0
  %2381 = vmatpush1.msra.mxu0 %v2375
  %2382 = vmatprep.subr.mxu0 0.0
  %2383 = vmatpush1.msra.mxu0 0.0
  %2384 = vmatprep.subr.mxu0 0.0
  %2385 = vmatpush1.msra.mxu0 0.0
  %2386 = vmatprep.subr.mxu0 0.0
  %2387 = vmatpush1.msra.mxu0 0.0
  %2388 = vmatprep.subr.mxu0 0.0
  %2389 = vmatpush1.msra.mxu0 0.0
  %2390 = vmatprep.subr.mxu0 0.0
  %2391 = vmatpush1.msra.mxu0 0.0
  %2392 = vmatprep.subr.mxu0 0.0
  %2393 = vmatpush1.msra.mxu0 0.0
  %2394 = vmatprep.subr.mxu0 0.0
  %2395 = vmatpush1.msra.mxu0 0.0
  %2396 = vmatprep.subr.mxu0 0.0
  %2397 = vmatpush1.msra.mxu0 0.0
  %2398 = vmatprep.subr.mxu0 0.0
  %2399 = vmatpush1.msra.mxu0 0.0
  %2400 = vmatprep.subr.mxu0 0.0
  %2401 = vmatpush1.msra.mxu0 0.0
  %2402 = vmatprep.subr.mxu0 0.0
  %2403 = vmatpush1.msra.mxu0 0.0
  %2404 = vmatprep.subr.mxu0 0.0
  %2405 = vmatpush1.msra.mxu0 0.0
  %2406 = vmatprep.subr.mxu0 0.0
  %2407 = vmatpush1.msra.mxu0 0.0
  %2408 = vmatprep.subr.mxu0 0.0
  %2409 = vmatpush1.msra.mxu0 0.0
  %2410 = vmatprep.subr.mxu0 0.0
  %2411 = vmatpush1.msra.mxu0 0.0
  %2412 = vmatprep.subr.mxu0 0.0
  %2413 = vmatpush1.msra.mxu0 0.0
  %2414 = vmatprep.subr.mxu0 0.0
  %2415 = vmatpush1.msra.mxu0 0.0
  %2416 = vmatprep.subr.mxu0 0.0
  %2417 = vmatpush1.msra.mxu0 0.0
  %2418 = vmatprep.subr.mxu0 0.0
  %2419 = vmatpush1.msra.mxu0 0.0
  %2420 = vmatprep.subr.mxu0 0.0
  %2421 = vmatpush1.msra.mxu0 0.0
  %2422 = vmatprep.subr.mxu0 0.0
  %2423 = vmatpush1.msra.mxu0 0.0
  %2424 = vmatprep.subr.mxu0 0.0
  %2425 = vmatpush1.msra.mxu0 0.0
  %2426 = vmatprep.subr.mxu0 0.0
  %2427 = vmatpush1.msra.mxu0 0.0
  %2428 = vmatprep.subr.mxu0 0.0
  %2429 = vmatpush1.msra.mxu0 0.0
  %2430 = vmatprep.subr.mxu0 0.0
  %2431 = vmatpush1.msra.mxu0 0.0
  %2432 = vmatprep.subr.mxu0 0.0
  %2433 = vmatpush1.msra.mxu0 0.0
  %2434 = vmatprep.subr.mxu0 0.0
  %2435 = vmatpush1.msra.mxu0 0.0
  %2436 = vmatprep.subr.mxu0 0.0
  %2437 = vmatpush1.msra.mxu0 0.0
  %2438 = vmatprep.subr.mxu0 0.0
  %2439 = vmatpush1.msra.mxu0 0.0
  %2440 = vmatprep.subr.mxu0 0.0
  %2441 = vmatpush1.msra.mxu0 0.0
  %2442 = vmatprep.subr.mxu0 0.0
  %2443 = vmatpush1.msra.mxu0 0.0
  %2444 = vmatprep.mubr.f32.mxu0 0.0
  %2445 = vmatmul.mubr.f32.gmra.mrb[0].mxu0 %v2378
  %v2446 = vpop.f32.mrb[0].mxu0
  %v2447 = vadd.f32 0.0, %v2446
  %v2448 = vpop.f32.mrb[0].mxu0
  %2449 = vdwg.mxu0
  %2450 = vrot.lane.b32.xlu0 %v1945, 104
  %v2451 = vpop.permute.xlu0 %2450
  %2452 = vrot.lane.b32.xlu0 %v1945, 72
  %v2453 = vpop.permute.xlu0 %2452
  %v2454 = vsel %vm126, %v2451, 0
  %v2456 = vsel %vm126, %v2453, 0
  %2458 = vmatprep.subr.mxu0 0.0
  %2459 = vmatpush1.xpose.msra.mxu0 %v2456
  %2460 = vmatprep.subr.mxu0 0.0
  %2461 = vmatpush1.xpose.msra.mxu0 0.0
  %2462 = vmatprep.subr.mxu0 0.0
  %2463 = vmatpush1.xpose.msra.mxu0 0.0
  %2464 = vmatprep.subr.mxu0 0.0
  %2465 = vmatpush1.xpose.msra.mxu0 0.0
  %2466 = vmatprep.subr.mxu0 0.0
  %2467 = vmatpush1.xpose.msra.mxu0 0.0
  %2468 = vmatprep.subr.mxu0 0.0
  %2469 = vmatpush1.xpose.msra.mxu0 0.0
  %2470 = vmatprep.subr.mxu0 0.0
  %2471 = vmatpush1.xpose.msra.mxu0 0.0
  %2472 = vmatprep.subr.mxu0 0.0
  %2473 = vmatpush1.xpose.msra.mxu0 0.0
  %2474 = vmatprep.subr.mxu0 0.0
  %2475 = vmatpush1.xpose.msra.mxu0 0.0
  %2476 = vmatprep.subr.mxu0 0.0
  %2477 = vmatpush1.xpose.msra.mxu0 0.0
  %2478 = vmatprep.subr.mxu0 0.0
  %2479 = vmatpush1.xpose.msra.mxu0 0.0
  %2480 = vmatprep.subr.mxu0 0.0
  %2481 = vmatpush1.xpose.msra.mxu0 0.0
  %2482 = vmatprep.subr.mxu0 0.0
  %2483 = vmatpush1.xpose.msra.mxu0 0.0
  %2484 = vmatprep.subr.mxu0 0.0
  %2485 = vmatpush1.xpose.msra.mxu0 0.0
  %2486 = vmatprep.subr.mxu0 0.0
  %2487 = vmatpush1.xpose.msra.mxu0 0.0
  %2488 = vmatprep.subr.mxu0 0.0
  %2489 = vmatpush1.xpose.msra.mxu0 0.0
  %2490 = vmatprep.subr.mxu0 0.0
  %2491 = vmatpush1.xpose.msra.mxu0 0.0
  %2492 = vmatprep.subr.mxu0 0.0
  %2493 = vmatpush1.xpose.msra.mxu0 0.0
  %2494 = vmatprep.subr.mxu0 0.0
  %2495 = vmatpush1.xpose.msra.mxu0 0.0
  %2496 = vmatprep.subr.mxu0 0.0
  %2497 = vmatpush1.xpose.msra.mxu0 0.0
  %2498 = vmatprep.subr.mxu0 0.0
  %2499 = vmatpush1.xpose.msra.mxu0 0.0
  %2500 = vmatprep.subr.mxu0 0.0
  %2501 = vmatpush1.xpose.msra.mxu0 0.0
  %2502 = vmatprep.subr.mxu0 0.0
  %2503 = vmatpush1.xpose.msra.mxu0 0.0
  %2504 = vmatprep.subr.mxu0 0.0
  %2505 = vmatpush1.xpose.msra.mxu0 0.0
  %2506 = vmatprep.subr.mxu0 0.0
  %2507 = vmatpush1.xpose.msra.mxu0 0.0
  %2508 = vmatprep.subr.mxu0 0.0
  %2509 = vmatpush1.xpose.msra.mxu0 0.0
  %2510 = vmatprep.subr.mxu0 0.0
  %2511 = vmatpush1.xpose.msra.mxu0 0.0
  %2512 = vmatprep.subr.mxu0 0.0
  %2513 = vmatpush1.xpose.msra.mxu0 0.0
  %2514 = vmatprep.subr.mxu0 0.0
  %2515 = vmatpush1.xpose.msra.mxu0 0.0
  %2516 = vmatprep.subr.mxu0 0.0
  %2517 = vmatpush1.xpose.msra.mxu0 0.0
  %2518 = vmatprep.subr.mxu0 0.0
  %2519 = vmatpush1.xpose.msra.mxu0 0.0
  %2520 = vmatprep.subr.mxu0 0.0
  %2521 = vmatpush1.xpose.msra.mxu0 0.0
  %2522 = vmatprep.mubr.f32.mxu0 0.0
  %2523 = vmatmul.mubr.f32.gmra.mrb[0].mxu0 %v2454
  %v2524 = vpop.f32.mrb[0].mxu0
  %v2525 = vadd.f32 0.0, %v2524
  %v2526 = vpop.f32.mrb[0].mxu0
  %2527 = vdwg.mxu0
  %v2528 = vmul.f32 %v2525, 0.35355338
  %v2529 = vsel %vm126, %v2528, -inf
  %2530 = vmax.xlane.f32.xlu0 %v2529
  %v2531 = vpop.xlane.xlu0 %2530
  %v2532 = vsub.f32 %v2528, %v2531
  %v2533 = vmul.f32 %v2532, 1.442695
  %v2534 = vpow.pop %v2533
  %v2535 = vsel %vm126, %v2534, 0.0
  %2536 = vadd.xlane.f32.xlu0 %v2535
  %v2537 = vpop.xlane.xlu0 %2536
  %v2538 = vrcp.pop %v2537
  %v2539 = vmul.f32 %v2534, %v2538
  %2540 = vrot.lane.b32.xlu0 %v1945, 40
  %v2541 = vpop.permute.xlu0 %2540
  %v2544 = vsel %vm126, %v2539, 0
  %2546 = vmatprep.subr.mxu0 0.0
  %2547 = vmatpush1.msra.mxu0 %v2541
  %2548 = vmatprep.subr.mxu0 0.0
  %2549 = vmatpush1.msra.mxu0 0.0
  %2550 = vmatprep.subr.mxu0 0.0
  %2551 = vmatpush1.msra.mxu0 0.0
  %2552 = vmatprep.subr.mxu0 0.0
  %2553 = vmatpush1.msra.mxu0 0.0
  %2554 = vmatprep.subr.mxu0 0.0
  %2555 = vmatpush1.msra.mxu0 0.0
  %2556 = vmatprep.subr.mxu0 0.0
  %2557 = vmatpush1.msra.mxu0 0.0
  %2558 = vmatprep.subr.mxu0 0.0
  %2559 = vmatpush1.msra.mxu0 0.0
  %2560 = vmatprep.subr.mxu0 0.0
  %2561 = vmatpush1.msra.mxu0 0.0
  %2562 = vmatprep.subr.mxu0 0.0
  %2563 = vmatpush1.msra.mxu0 0.0
  %2564 = vmatprep.subr.mxu0 0.0
  %2565 = vmatpush1.msra.mxu0 0.0
  %2566 = vmatprep.subr.mxu0 0.0
  %2567 = vmatpush1.msra.mxu0 0.0
  %2568 = vmatprep.subr.mxu0 0.0
  %2569 = vmatpush1.msra.mxu0 0.0
  %2570 = vmatprep.subr.mxu0 0.0
  %2571 = vmatpush1.msra.mxu0 0.0
  %2572 = vmatprep.subr.mxu0 0.0
  %2573 = vmatpush1.msra.mxu0 0.0
  %2574 = vmatprep.subr.mxu0 0.0
  %2575 = vmatpush1.msra.mxu0 0.0
  %2576 = vmatprep.subr.mxu0 0.0
  %2577 = vmatpush1.msra.mxu0 0.0
  %2578 = vmatprep.subr.mxu0 0.0
  %2579 = vmatpush1.msra.mxu0 0.0
  %2580 = vmatprep.subr.mxu0 0.0
  %2581 = vmatpush1.msra.mxu0 0.0
  %2582 = vmatprep.subr.mxu0 0.0
  %2583 = vmatpush1.msra.mxu0 0.0
  %2584 = vmatprep.subr.mxu0 0.0
  %2585 = vmatpush1.msra.mxu0 0.0
  %2586 = vmatprep.subr.mxu0 0.0
  %2587 = vmatpush1.msra.mxu0 0.0
  %2588 = vmatprep.subr.mxu0 0.0
  %2589 = vmatpush1.msra.mxu0 0.0
  %2590 = vmatprep.subr.mxu0 0.0
  %2591 = vmatpush1.msra.mxu0 0.0
  %2592 = vmatprep.subr.mxu0 0.0
  %2593 = vmatpush1.msra.mxu0 0.0
  %2594 = vmatprep.subr.mxu0 0.0
  %2595 = vmatpush1.msra.mxu0 0.0
  %2596 = vmatprep.subr.mxu0 0.0
  %2597 = vmatpush1.msra.mxu0 0.0
  %2598 = vmatprep.subr.mxu0 0.0
  %2599 = vmatpush1.msra.mxu0 0.0
  %2600 = vmatprep.subr.mxu0 0.0
  %2601 = vmatpush1.msra.mxu0 0.0
  %2602 = vmatprep.subr.mxu0 0.0
  %2603 = vmatpush1.msra.mxu0 0.0
  %2604 = vmatprep.subr.mxu0 0.0
  %2605 = vmatpush1.msra.mxu0 0.0
  %2606 = vmatprep.subr.mxu0 0.0
  %2607 = vmatpush1.msra.mxu0 0.0
  %2608 = vmatprep.subr.mxu0 0.0
  %2609 = vmatpush1.msra.mxu0 0.0
  %2610 = vmatprep.mubr.f32.mxu0 0.0
  %2611 = vmatmul.mubr.f32.gmra.mrb[0].mxu0 %v2544
  %v2612 = vpop.f32.mrb[0].mxu0
  %v2613 = vadd.f32 0.0, %v2612
  %v2614 = vpop.f32.mrb[0].mxu0
  %2615 = vdwg.mxu0
  %2617 = vrot.lane.b32.xlu0 %v2281, 8
  %v2618 = vpop.permute.xlu0 %2617
  %2621 = vrot.lane.b32.xlu0 %v2447, 16
  %v2622 = vpop.permute.xlu0 %2621
  %2625 = vrot.lane.b32.xlu0 %v2613, 24
  %v2626 = vpop.permute.xlu0 %2625
  %v2628 = vsel %vm126, %v2115, %v2618
  %v2629 = vsel %vm800, %v2628, %v2622
  %v2630 = vsel %vm802, %v2629, %v2626
  %2632 = vrot.lane.b32.xlu0 %v1950, 96
  %v2633 = vpop.permute.xlu0 %2632
  %v2634 = vsel %vm126, %v1950, 0
  %v2636 = vsel %vm126, %v2633, 0
  %2638 = vmatprep.subr.mxu0 0.0
  %2639 = vmatpush1.xpose.msra.mxu0 %v2636
  %2640 = vmatprep.subr.mxu0 0.0
  %2641 = vmatpush1.xpose.msra.mxu0 0.0
  %2642 = vmatprep.subr.mxu0 0.0
  %2643 = vmatpush1.xpose.msra.mxu0 0.0
  %2644 = vmatprep.subr.mxu0 0.0
  %2645 = vmatpush1.xpose.msra.mxu0 0.0
  %2646 = vmatprep.subr.mxu0 0.0
  %2647 = vmatpush1.xpose.msra.mxu0 0.0
  %2648 = vmatprep.subr.mxu0 0.0
  %2649 = vmatpush1.xpose.msra.mxu0 0.0
  %2650 = vmatprep.subr.mxu0 0.0
  %2651 = vmatpush1.xpose.msra.mxu0 0.0
  %2652 = vmatprep.subr.mxu0 0.0
  %2653 = vmatpush1.xpose.msra.mxu0 0.0
  %2654 = vmatprep.subr.mxu0 0.0
  %2655 = vmatpush1.xpose.msra.mxu0 0.0
  %2656 = vmatprep.subr.mxu0 0.0
  %2657 = vmatpush1.xpose.msra.mxu0 0.0
  %2658 = vmatprep.subr.mxu0 0.0
  %2659 = vmatpush1.xpose.msra.mxu0 0.0
  %2660 = vmatprep.subr.mxu0 0.0
  %2661 = vmatpush1.xpose.msra.mxu0 0.0
  %2662 = vmatprep.subr.mxu0 0.0
  %2663 = vmatpush1.xpose.msra.mxu0 0.0
  %2664 = vmatprep.subr.mxu0 0.0
  %2665 = vmatpush1.xpose.msra.mxu0 0.0
  %2666 = vmatprep.subr.mxu0 0.0
  %2667 = vmatpush1.xpose.msra.mxu0 0.0
  %2668 = vmatprep.subr.mxu0 0.0
  %2669 = vmatpush1.xpose.msra.mxu0 0.0
  %2670 = vmatprep.subr.mxu0 0.0
  %2671 = vmatpush1.xpose.msra.mxu0 0.0
  %2672 = vmatprep.subr.mxu0 0.0
  %2673 = vmatpush1.xpose.msra.mxu0 0.0
  %2674 = vmatprep.subr.mxu0 0.0
  %2675 = vmatpush1.xpose.msra.mxu0 0.0
  %2676 = vmatprep.subr.mxu0 0.0
  %2677 = vmatpush1.xpose.msra.mxu0 0.0
  %2678 = vmatprep.subr.mxu0 0.0
  %2679 = vmatpush1.xpose.msra.mxu0 0.0
  %2680 = vmatprep.subr.mxu0 0.0
  %2681 = vmatpush1.xpose.msra.mxu0 0.0
  %2682 = vmatprep.subr.mxu0 0.0
  %2683 = vmatpush1.xpose.msra.mxu0 0.0
  %2684 = vmatprep.subr.mxu0 0.0
  %2685 = vmatpush1.xpose.msra.mxu0 0.0
  %2686 = vmatprep.subr.mxu0 0.0
  %2687 = vmatpush1.xpose.msra.mxu0 0.0
  %2688 = vmatprep.subr.mxu0 0.0
  %2689 = vmatpush1.xpose.msra.mxu0 0.0
  %2690 = vmatprep.subr.mxu0 0.0
  %2691 = vmatpush1.xpose.msra.mxu0 0.0
  %2692 = vmatprep.subr.mxu0 0.0
  %2693 = vmatpush1.xpose.msra.mxu0 0.0
  %2694 = vmatprep.subr.mxu0 0.0
  %2695 = vmatpush1.xpose.msra.mxu0 0.0
  %2696 = vmatprep.subr.mxu0 0.0
  %2697 = vmatpush1.xpose.msra.mxu0 0.0
  %2698 = vmatprep.subr.mxu0 0.0
  %2699 = vmatpush1.xpose.msra.mxu0 0.0
  %2700 = vmatprep.subr.mxu0 0.0
  %2701 = vmatpush1.xpose.msra.mxu0 0.0
  %2702 = vmatprep.mubr.f32.mxu0 0.0
  %2703 = vmatmul.mubr.f32.gmra.mrb[0].mxu0 %v2634
  %v2704 = vpop.f32.mrb[0].mxu0
  %v2705 = vadd.f32 0.0, %v2704
  %v2706 = vpop.f32.mrb[0].mxu0
  %2707 = vdwg.mxu0
  %v2708 = vmul.f32 %v2705, 0.35355338
  %v2709 = vsel %vm126, %v2708, -inf
  %2710 = vmax.xlane.f32.xlu0 %v2709
  %v2711 = vpop.xlane.xlu0 %2710
  %v2712 = vsub.f32 %v2708, %v2711
  %v2713 = vmul.f32 %v2712, 1.442695
  %v2714 = vpow.pop %v2713
  %v2715 = vsel %vm126, %v2714, 0.0
  %2716 = vadd.xlane.f32.xlu0 %v2715
  %v2717 = vpop.xlane.xlu0 %2716
  %v2718 = vrcp.pop %v2717
  %v2719 = vmul.f32 %v2714, %v2718
  %2720 = vrot.lane.b32.xlu0 %v1950, 64
  %v2721 = vpop.permute.xlu0 %2720
  %v2724 = vsel %vm126, %v2719, 0
  %2726 = vmatprep.subr.mxu0 0.0
  %2727 = vmatpush1.msra.mxu0 %v2721
  %2728 = vmatprep.subr.mxu0 0.0
  %2729 = vmatpush1.msra.mxu0 0.0
  %2730 = vmatprep.subr.mxu0 0.0
  %2731 = vmatpush1.msra.mxu0 0.0
  %2732 = vmatprep.subr.mxu0 0.0
  %2733 = vmatpush1.msra.mxu0 0.0
  %2734 = vmatprep.subr.mxu0 0.0
  %2735 = vmatpush1.msra.mxu0 0.0
  %2736 = vmatprep.subr.mxu0 0.0
  %2737 = vmatpush1.msra.mxu0 0.0
  %2738 = vmatprep.subr.mxu0 0.0
  %2739 = vmatpush1.msra.mxu0 0.0
  %2740 = vmatprep.subr.mxu0 0.0
  %2741 = vmatpush1.msra.mxu0 0.0
  %2742 = vmatprep.subr.mxu0 0.0
  %2743 = vmatpush1.msra.mxu0 0.0
  %2744 = vmatprep.subr.mxu0 0.0
  %2745 = vmatpush1.msra.mxu0 0.0
  %2746 = vmatprep.subr.mxu0 0.0
  %2747 = vmatpush1.msra.mxu0 0.0
  %2748 = vmatprep.subr.mxu0 0.0
  %2749 = vmatpush1.msra.mxu0 0.0
  %2750 = vmatprep.subr.mxu0 0.0
  %2751 = vmatpush1.msra.mxu0 0.0
  %2752 = vmatprep.subr.mxu0 0.0
  %2753 = vmatpush1.msra.mxu0 0.0
  %2754 = vmatprep.subr.mxu0 0.0
  %2755 = vmatpush1.msra.mxu0 0.0
  %2756 = vmatprep.subr.mxu0 0.0
  %2757 = vmatpush1.msra.mxu0 0.0
  %2758 = vmatprep.subr.mxu0 0.0
  %2759 = vmatpush1.msra.mxu0 0.0
  %2760 = vmatprep.subr.mxu0 0.0
  %2761 = vmatpush1.msra.mxu0 0.0
  %2762 = vmatprep.subr.mxu0 0.0
  %2763 = vmatpush1.msra.mxu0 0.0
  %2764 = vmatprep.subr.mxu0 0.0
  %2765 = vmatpush1.msra.mxu0 0.0
  %2766 = vmatprep.subr.mxu0 0.0
  %2767 = vmatpush1.msra.mxu0 0.0
  %2768 = vmatprep.subr.mxu0 0.0
  %2769 = vmatpush1.msra.mxu0 0.0
  %2770 = vmatprep.subr.mxu0 0.0
  %2771 = vmatpush1.msra.mxu0 0.0
  %2772 = vmatprep.subr.mxu0 0.0
  %2773 = vmatpush1.msra.mxu0 0.0
  %2774 = vmatprep.subr.mxu0 0.0
  %2775 = vmatpush1.msra.mxu0 0.0
  %2776 = vmatprep.subr.mxu0 0.0
  %2777 = vmatpush1.msra.mxu0 0.0
  %2778 = vmatprep.subr.mxu0 0.0
  %2779 = vmatpush1.msra.mxu0 0.0
  %2780 = vmatprep.subr.mxu0 0.0
  %2781 = vmatpush1.msra.mxu0 0.0
  %2782 = vmatprep.subr.mxu0 0.0
  %2783 = vmatpush1.msra.mxu0 0.0
  %2784 = vmatprep.subr.mxu0 0.0
  %2785 = vmatpush1.msra.mxu0 0.0
  %2786 = vmatprep.subr.mxu0 0.0
  %2787 = vmatpush1.msra.mxu0 0.0
  %2788 = vmatprep.subr.mxu0 0.0
  %2789 = vmatpush1.msra.mxu0 0.0
  %2790 = vmatprep.mubr.f32.mxu0 0.0
  %2791 = vmatmul.mubr.f32.gmra.mrb[0].mxu0 %v2724
  %v2792 = vpop.f32.mrb[0].mxu0
  %v2793 = vadd.f32 0.0, %v2792
  %v2794 = vpop.f32.mrb[0].mxu0
  %2795 = vdwg.mxu0
  %2796 = vrot.lane.b32.xlu0 %v1950, 120
  %v2797 = vpop.permute.xlu0 %2796
  %2798 = vrot.lane.b32.xlu0 %v1950, 88
  %v2799 = vpop.permute.xlu0 %2798
  %v2800 = vsel %vm126, %v2797, 0
  %v2802 = vsel %vm126, %v2799, 0
  %2804 = vmatprep.subr.mxu0 0.0
  %2805 = vmatpush1.xpose.msra.mxu0 %v2802
  %2806 = vmatprep.subr.mxu0 0.0
  %2807 = vmatpush1.xpose.msra.mxu0 0.0
  %2808 = vmatprep.subr.mxu0 0.0
  %2809 = vmatpush1.xpose.msra.mxu0 0.0
  %2810 = vmatprep.subr.mxu0 0.0
  %2811 = vmatpush1.xpose.msra.mxu0 0.0
  %2812 = vmatprep.subr.mxu0 0.0
  %2813 = vmatpush1.xpose.msra.mxu0 0.0
  %2814 = vmatprep.subr.mxu0 0.0
  %2815 = vmatpush1.xpose.msra.mxu0 0.0
  %2816 = vmatprep.subr.mxu0 0.0
  %2817 = vmatpush1.xpose.msra.mxu0 0.0
  %2818 = vmatprep.subr.mxu0 0.0
  %2819 = vmatpush1.xpose.msra.mxu0 0.0
  %2820 = vmatprep.subr.mxu0 0.0
  %2821 = vmatpush1.xpose.msra.mxu0 0.0
  %2822 = vmatprep.subr.mxu0 0.0
  %2823 = vmatpush1.xpose.msra.mxu0 0.0
  %2824 = vmatprep.subr.mxu0 0.0
  %2825 = vmatpush1.xpose.msra.mxu0 0.0
  %2826 = vmatprep.subr.mxu0 0.0
  %2827 = vmatpush1.xpose.msra.mxu0 0.0
  %2828 = vmatprep.subr.mxu0 0.0
  %2829 = vmatpush1.xpose.msra.mxu0 0.0
  %2830 = vmatprep.subr.mxu0 0.0
  %2831 = vmatpush1.xpose.msra.mxu0 0.0
  %2832 = vmatprep.subr.mxu0 0.0
  %2833 = vmatpush1.xpose.msra.mxu0 0.0
  %2834 = vmatprep.subr.mxu0 0.0
  %2835 = vmatpush1.xpose.msra.mxu0 0.0
  %2836 = vmatprep.subr.mxu0 0.0
  %2837 = vmatpush1.xpose.msra.mxu0 0.0
  %2838 = vmatprep.subr.mxu0 0.0
  %2839 = vmatpush1.xpose.msra.mxu0 0.0
  %2840 = vmatprep.subr.mxu0 0.0
  %2841 = vmatpush1.xpose.msra.mxu0 0.0
  %2842 = vmatprep.subr.mxu0 0.0
  %2843 = vmatpush1.xpose.msra.mxu0 0.0
  %2844 = vmatprep.subr.mxu0 0.0
  %2845 = vmatpush1.xpose.msra.mxu0 0.0
  %2846 = vmatprep.subr.mxu0 0.0
  %2847 = vmatpush1.xpose.msra.mxu0 0.0
  %2848 = vmatprep.subr.mxu0 0.0
  %2849 = vmatpush1.xpose.msra.mxu0 0.0
  %2850 = vmatprep.subr.mxu0 0.0
  %2851 = vmatpush1.xpose.msra.mxu0 0.0
  %2852 = vmatprep.subr.mxu0 0.0
  %2853 = vmatpush1.xpose.msra.mxu0 0.0
  %2854 = vmatprep.subr.mxu0 0.0
  %2855 = vmatpush1.xpose.msra.mxu0 0.0
  %2856 = vmatprep.subr.mxu0 0.0
  %2857 = vmatpush1.xpose.msra.mxu0 0.0
  %2858 = vmatprep.subr.mxu0 0.0
  %2859 = vmatpush1.xpose.msra.mxu0 0.0
  %2860 = vmatprep.subr.mxu0 0.0
  %2861 = vmatpush1.xpose.msra.mxu0 0.0
  %2862 = vmatprep.subr.mxu0 0.0
  %2863 = vmatpush1.xpose.msra.mxu0 0.0
  %2864 = vmatprep.subr.mxu0 0.0
  %2865 = vmatpush1.xpose.msra.mxu0 0.0
  %2866 = vmatprep.subr.mxu0 0.0
  %2867 = vmatpush1.xpose.msra.mxu0 0.0
  %2868 = vmatprep.mubr.f32.mxu0 0.0
  %2869 = vmatmul.mubr.f32.gmra.mrb[0].mxu0 %v2800
  %v2870 = vpop.f32.mrb[0].mxu0
  %v2871 = vadd.f32 0.0, %v2870
  %v2872 = vpop.f32.mrb[0].mxu0
  %2873 = vdwg.mxu0
  %v2874 = vmul.f32 %v2871, 0.35355338
  %v2875 = vsel %vm126, %v2874, -inf
  %2876 = vmax.xlane.f32.xlu0 %v2875
  %v2877 = vpop.xlane.xlu0 %2876
  %v2878 = vsub.f32 %v2874, %v2877
  %v2879 = vmul.f32 %v2878, 1.442695
  %v2880 = vpow.pop %v2879
  %v2881 = vsel %vm126, %v2880, 0.0
  %2882 = vadd.xlane.f32.xlu0 %v2881
  %v2883 = vpop.xlane.xlu0 %2882
  %v2884 = vrcp.pop %v2883
  %v2885 = vmul.f32 %v2880, %v2884
  %2886 = vrot.lane.b32.xlu0 %v1950, 56
  %v2887 = vpop.permute.xlu0 %2886
  %v2890 = vsel %vm126, %v2885, 0
  %2892 = vmatprep.subr.mxu0 0.0
  %2893 = vmatpush1.msra.mxu0 %v2887
  %2894 = vmatprep.subr.mxu0 0.0
  %2895 = vmatpush1.msra.mxu0 0.0
  %2896 = vmatprep.subr.mxu0 0.0
  %2897 = vmatpush1.msra.mxu0 0.0
  %2898 = vmatprep.subr.mxu0 0.0
  %2899 = vmatpush1.msra.mxu0 0.0
  %2900 = vmatprep.subr.mxu0 0.0
  %2901 = vmatpush1.msra.mxu0 0.0
  %2902 = vmatprep.subr.mxu0 0.0
  %2903 = vmatpush1.msra.mxu0 0.0
  %2904 = vmatprep.subr.mxu0 0.0
  %2905 = vmatpush1.msra.mxu0 0.0
  %2906 = vmatprep.subr.mxu0 0.0
  %2907 = vmatpush1.msra.mxu0 0.0
  %2908 = vmatprep.subr.mxu0 0.0
  %2909 = vmatpush1.msra.mxu0 0.0
  %2910 = vmatprep.subr.mxu0 0.0
  %2911 = vmatpush1.msra.mxu0 0.0
  %2912 = vmatprep.subr.mxu0 0.0
  %2913 = vmatpush1.msra.mxu0 0.0
  %2914 = vmatprep.subr.mxu0 0.0
  %2915 = vmatpush1.msra.mxu0 0.0
  %2916 = vmatprep.subr.mxu0 0.0
  %2917 = vmatpush1.msra.mxu0 0.0
  %2918 = vmatprep.subr.mxu0 0.0
  %2919 = vmatpush1.msra.mxu0 0.0
  %2920 = vmatprep.subr.mxu0 0.0
  %2921 = vmatpush1.msra.mxu0 0.0
  %2922 = vmatprep.subr.mxu0 0.0
  %2923 = vmatpush1.msra.mxu0 0.0
  %2924 = vmatprep.subr.mxu0 0.0
  %2925 = vmatpush1.msra.mxu0 0.0
  %2926 = vmatprep.subr.mxu0 0.0
  %2927 = vmatpush1.msra.mxu0 0.0
  %2928 = vmatprep.subr.mxu0 0.0
  %2929 = vmatpush1.msra.mxu0 0.0
  %2930 = vmatprep.subr.mxu0 0.0
  %2931 = vmatpush1.msra.mxu0 0.0
  %2932 = vmatprep.subr.mxu0 0.0
  %2933 = vmatpush1.msra.mxu0 0.0
  %2934 = vmatprep.subr.mxu0 0.0
  %2935 = vmatpush1.msra.mxu0 0.0
  %2936 = vmatprep.subr.mxu0 0.0
  %2937 = vmatpush1.msra.mxu0 0.0
  %2938 = vmatprep.subr.mxu0 0.0
  %2939 = vmatpush1.msra.mxu0 0.0
  %2940 = vmatprep.subr.mxu0 0.0
  %2941 = vmatpush1.msra.mxu0 0.0
  %2942 = vmatprep.subr.mxu0 0.0
  %2943 = vmatpush1.msra.mxu0 0.0
  %2944 = vmatprep.subr.mxu0 0.0
  %2945 = vmatpush1.msra.mxu0 0.0
  %2946 = vmatprep.subr.mxu0 0.0
  %2947 = vmatpush1.msra.mxu0 0.0
  %2948 = vmatprep.subr.mxu0 0.0
  %2949 = vmatpush1.msra.mxu0 0.0
  %2950 = vmatprep.subr.mxu0 0.0
  %2951 = vmatpush1.msra.mxu0 0.0
  %2952 = vmatprep.subr.mxu0 0.0
  %2953 = vmatpush1.msra.mxu0 0.0
  %2954 = vmatprep.subr.mxu0 0.0
  %2955 = vmatpush1.msra.mxu0 0.0
  %2956 = vmatprep.mubr.f32.mxu0 0.0
  %2957 = vmatmul.mubr.f32.gmra.mrb[0].mxu0 %v2890
  %v2958 = vpop.f32.mrb[0].mxu0
  %v2959 = vadd.f32 0.0, %v2958
  %v2960 = vpop.f32.mrb[0].mxu0
  %2961 = vdwg.mxu0
  %2962 = vrot.lane.b32.xlu0 %v1950, 112
  %v2963 = vpop.permute.xlu0 %2962
  %2964 = vrot.lane.b32.xlu0 %v1950, 80
  %v2965 = vpop.permute.xlu0 %2964
  %v2966 = vsel %vm126, %v2963, 0
  %v2968 = vsel %vm126, %v2965, 0
  %2970 = vmatprep.subr.mxu0 0.0
  %2971 = vmatpush1.xpose.msra.mxu0 %v2968
  %2972 = vmatprep.subr.mxu0 0.0
  %2973 = vmatpush1.xpose.msra.mxu0 0.0
  %2974 = vmatprep.subr.mxu0 0.0
  %2975 = vmatpush1.xpose.msra.mxu0 0.0
  %2976 = vmatprep.subr.mxu0 0.0
  %2977 = vmatpush1.xpose.msra.mxu0 0.0
  %2978 = vmatprep.subr.mxu0 0.0
  %2979 = vmatpush1.xpose.msra.mxu0 0.0
  %2980 = vmatprep.subr.mxu0 0.0
  %2981 = vmatpush1.xpose.msra.mxu0 0.0
  %2982 = vmatprep.subr.mxu0 0.0
  %2983 = vmatpush1.xpose.msra.mxu0 0.0
  %2984 = vmatprep.subr.mxu0 0.0
  %2985 = vmatpush1.xpose.msra.mxu0 0.0
  %2986 = vmatprep.subr.mxu0 0.0
  %2987 = vmatpush1.xpose.msra.mxu0 0.0
  %2988 = vmatprep.subr.mxu0 0.0
  %2989 = vmatpush1.xpose.msra.mxu0 0.0
  %2990 = vmatprep.subr.mxu0 0.0
  %2991 = vmatpush1.xpose.msra.mxu0 0.0
  %2992 = vmatprep.subr.mxu0 0.0
  %2993 = vmatpush1.xpose.msra.mxu0 0.0
  %2994 = vmatprep.subr.mxu0 0.0
  %2995 = vmatpush1.xpose.msra.mxu0 0.0
  %2996 = vmatprep.subr.mxu0 0.0
  %2997 = vmatpush1.xpose.msra.mxu0 0.0
  %2998 = vmatprep.subr.mxu0 0.0
  %2999 = vmatpush1.xpose.msra.mxu0 0.0
  %3000 = vmatprep.subr.mxu0 0.0
  %3001 = vmatpush1.xpose.msra.mxu0 0.0
  %3002 = vmatprep.subr.mxu0 0.0
  %3003 = vmatpush1.xpose.msra.mxu0 0.0
  %3004 = vmatprep.subr.mxu0 0.0
  %3005 = vmatpush1.xpose.msra.mxu0 0.0
  %3006 = vmatprep.subr.mxu0 0.0
  %3007 = vmatpush1.xpose.msra.mxu0 0.0
  %3008 = vmatprep.subr.mxu0 0.0
  %3009 = vmatpush1.xpose.msra.mxu0 0.0
  %3010 = vmatprep.subr.mxu0 0.0
  %3011 = vmatpush1.xpose.msra.mxu0 0.0
  %3012 = vmatprep.subr.mxu0 0.0
  %3013 = vmatpush1.xpose.msra.mxu0 0.0
  %3014 = vmatprep.subr.mxu0 0.0
  %3015 = vmatpush1.xpose.msra.mxu0 0.0
  %3016 = vmatprep.subr.mxu0 0.0
  %3017 = vmatpush1.xpose.msra.mxu0 0.0
  %3018 = vmatprep.subr.mxu0 0.0
  %3019 = vmatpush1.xpose.msra.mxu0 0.0
  %3020 = vmatprep.subr.mxu0 0.0
  %3021 = vmatpush1.xpose.msra.mxu0 0.0
  %3022 = vmatprep.subr.mxu0 0.0
  %3023 = vmatpush1.xpose.msra.mxu0 0.0
  %3024 = vmatprep.subr.mxu0 0.0
  %3025 = vmatpush1.xpose.msra.mxu0 0.0
  %3026 = vmatprep.subr.mxu0 0.0
  %3027 = vmatpush1.xpose.msra.mxu0 0.0
  %3028 = vmatprep.subr.mxu0 0.0
  %3029 = vmatpush1.xpose.msra.mxu0 0.0
  %3030 = vmatprep.subr.mxu0 0.0
  %3031 = vmatpush1.xpose.msra.mxu0 0.0
  %3032 = vmatprep.subr.mxu0 0.0
  %3033 = vmatpush1.xpose.msra.mxu0 0.0
  %3034 = vmatprep.mubr.f32.mxu0 0.0
  %3035 = vmatmul.mubr.f32.gmra.mrb[0].mxu0 %v2966
  %v3036 = vpop.f32.mrb[0].mxu0
  %v3037 = vadd.f32 0.0, %v3036
  %v3038 = vpop.f32.mrb[0].mxu0
  %3039 = vdwg.mxu0
  %v3040 = vmul.f32 %v3037, 0.35355338
  %v3041 = vsel %vm126, %v3040, -inf
  %3042 = vmax.xlane.f32.xlu0 %v3041
  %v3043 = vpop.xlane.xlu0 %3042
  %v3044 = vsub.f32 %v3040, %v3043
  %v3045 = vmul.f32 %v3044, 1.442695
  %v3046 = vpow.pop %v3045
  %v3047 = vsel %vm126, %v3046, 0.0
  %3048 = vadd.xlane.f32.xlu0 %v3047
  %v3049 = vpop.xlane.xlu0 %3048
  %v3050 = vrcp.pop %v3049
  %v3051 = vmul.f32 %v3046, %v3050
  %3052 = vrot.lane.b32.xlu0 %v1950, 48
  %v3053 = vpop.permute.xlu0 %3052
  %v3056 = vsel %vm126, %v3051, 0
  %3058 = vmatprep.subr.mxu0 0.0
  %3059 = vmatpush1.msra.mxu0 %v3053
  %3060 = vmatprep.subr.mxu0 0.0
  %3061 = vmatpush1.msra.mxu0 0.0
  %3062 = vmatprep.subr.mxu0 0.0
  %3063 = vmatpush1.msra.mxu0 0.0
  %3064 = vmatprep.subr.mxu0 0.0
  %3065 = vmatpush1.msra.mxu0 0.0
  %3066 = vmatprep.subr.mxu0 0.0
  %3067 = vmatpush1.msra.mxu0 0.0
  %3068 = vmatprep.subr.mxu0 0.0
  %3069 = vmatpush1.msra.mxu0 0.0
  %3070 = vmatprep.subr.mxu0 0.0
  %3071 = vmatpush1.msra.mxu0 0.0
  %3072 = vmatprep.subr.mxu0 0.0
  %3073 = vmatpush1.msra.mxu0 0.0
  %3074 = vmatprep.subr.mxu0 0.0
  %3075 = vmatpush1.msra.mxu0 0.0
  %3076 = vmatprep.subr.mxu0 0.0
  %3077 = vmatpush1.msra.mxu0 0.0
  %3078 = vmatprep.subr.mxu0 0.0
  %3079 = vmatpush1.msra.mxu0 0.0
  %3080 = vmatprep.subr.mxu0 0.0
  %3081 = vmatpush1.msra.mxu0 0.0
  %3082 = vmatprep.subr.mxu0 0.0
  %3083 = vmatpush1.msra.mxu0 0.0
  %3084 = vmatprep.subr.mxu0 0.0
  %3085 = vmatpush1.msra.mxu0 0.0
  %3086 = vmatprep.subr.mxu0 0.0
  %3087 = vmatpush1.msra.mxu0 0.0
  %3088 = vmatprep.subr.mxu0 0.0
  %3089 = vmatpush1.msra.mxu0 0.0
  %3090 = vmatprep.subr.mxu0 0.0
  %3091 = vmatpush1.msra.mxu0 0.0
  %3092 = vmatprep.subr.mxu0 0.0
  %3093 = vmatpush1.msra.mxu0 0.0
  %3094 = vmatprep.subr.mxu0 0.0
  %3095 = vmatpush1.msra.mxu0 0.0
  %3096 = vmatprep.subr.mxu0 0.0
  %3097 = vmatpush1.msra.mxu0 0.0
  %3098 = vmatprep.subr.mxu0 0.0
  %3099 = vmatpush1.msra.mxu0 0.0
  %3100 = vmatprep.subr.mxu0 0.0
  %3101 = vmatpush1.msra.mxu0 0.0
  %3102 = vmatprep.subr.mxu0 0.0
  %3103 = vmatpush1.msra.mxu0 0.0
  %3104 = vmatprep.subr.mxu0 0.0
  %3105 = vmatpush1.msra.mxu0 0.0
  %3106 = vmatprep.subr.mxu0 0.0
  %3107 = vmatpush1.msra.mxu0 0.0
  %3108 = vmatprep.subr.mxu0 0.0
  %3109 = vmatpush1.msra.mxu0 0.0
  %3110 = vmatprep.subr.mxu0 0.0
  %3111 = vmatpush1.msra.mxu0 0.0
  %3112 = vmatprep.subr.mxu0 0.0
  %3113 = vmatpush1.msra.mxu0 0.0
  %3114 = vmatprep.subr.mxu0 0.0
  %3115 = vmatpush1.msra.mxu0 0.0
  %3116 = vmatprep.subr.mxu0 0.0
  %3117 = vmatpush1.msra.mxu0 0.0
  %3118 = vmatprep.subr.mxu0 0.0
  %3119 = vmatpush1.msra.mxu0 0.0
  %3120 = vmatprep.subr.mxu0 0.0
  %3121 = vmatpush1.msra.mxu0 0.0
  %3122 = vmatprep.mubr.f32.mxu0 0.0
  %3123 = vmatmul.mubr.f32.gmra.mrb[0].mxu0 %v3056
  %v3124 = vpop.f32.mrb[0].mxu0
  %v3125 = vadd.f32 0.0, %v3124
  %v3126 = vpop.f32.mrb[0].mxu0
  %3127 = vdwg.mxu0
  %3128 = vrot.lane.b32.xlu0 %v1950, 104
  %v3129 = vpop.permute.xlu0 %3128
  %3130 = vrot.lane.b32.xlu0 %v1950, 72
  %v3131 = vpop.permute.xlu0 %3130
  %v3132 = vsel %vm126, %v3129, 0
  %v3134 = vsel %vm126, %v3131, 0
  %3136 = vmatprep.subr.mxu0 0.0
  %3137 = vmatpush1.xpose.msra.mxu0 %v3134
  %3138 = vmatprep.subr.mxu0 0.0
  %3139 = vmatpush1.xpose.msra.mxu0 0.0
  %3140 = vmatprep.subr.mxu0 0.0
  %3141 = vmatpush1.xpose.msra.mxu0 0.0
  %3142 = vmatprep.subr.mxu0 0.0
  %3143 = vmatpush1.xpose.msra.mxu0 0.0
  %3144 = vmatprep.subr.mxu0 0.0
  %3145 = vmatpush1.xpose.msra.mxu0 0.0
  %3146 = vmatprep.subr.mxu0 0.0
  %3147 = vmatpush1.xpose.msra.mxu0 0.0
  %3148 = vmatprep.subr.mxu0 0.0
  %3149 = vmatpush1.xpose.msra.mxu0 0.0
  %3150 = vmatprep.subr.mxu0 0.0
  %3151 = vmatpush1.xpose.msra.mxu0 0.0
  %3152 = vmatprep.subr.mxu0 0.0
  %3153 = vmatpush1.xpose.msra.mxu0 0.0
  %3154 = vmatprep.subr.mxu0 0.0
  %3155 = vmatpush1.xpose.msra.mxu0 0.0
  %3156 = vmatprep.subr.mxu0 0.0
  %3157 = vmatpush1.xpose.msra.mxu0 0.0
  %3158 = vmatprep.subr.mxu0 0.0
  %3159 = vmatpush1.xpose.msra.mxu0 0.0
  %3160 = vmatprep.subr.mxu0 0.0
  %3161 = vmatpush1.xpose.msra.mxu0 0.0
  %3162 = vmatprep.subr.mxu0 0.0
  %3163 = vmatpush1.xpose.msra.mxu0 0.0
  %3164 = vmatprep.subr.mxu0 0.0
  %3165 = vmatpush1.xpose.msra.mxu0 0.0
  %3166 = vmatprep.subr.mxu0 0.0
  %3167 = vmatpush1.xpose.msra.mxu0 0.0
  %3168 = vmatprep.subr.mxu0 0.0
  %3169 = vmatpush1.xpose.msra.mxu0 0.0
  %3170 = vmatprep.subr.mxu0 0.0
  %3171 = vmatpush1.xpose.msra.mxu0 0.0
  %3172 = vmatprep.subr.mxu0 0.0
  %3173 = vmatpush1.xpose.msra.mxu0 0.0
  %3174 = vmatprep.subr.mxu0 0.0
  %3175 = vmatpush1.xpose.msra.mxu0 0.0
  %3176 = vmatprep.subr.mxu0 0.0
  %3177 = vmatpush1.xpose.msra.mxu0 0.0
  %3178 = vmatprep.subr.mxu0 0.0
  %3179 = vmatpush1.xpose.msra.mxu0 0.0
  %3180 = vmatprep.subr.mxu0 0.0
  %3181 = vmatpush1.xpose.msra.mxu0 0.0
  %3182 = vmatprep.subr.mxu0 0.0
  %3183 = vmatpush1.xpose.msra.mxu0 0.0
  %3184 = vmatprep.subr.mxu0 0.0
  %3185 = vmatpush1.xpose.msra.mxu0 0.0
  %3186 = vmatprep.subr.mxu0 0.0
  %3187 = vmatpush1.xpose.msra.mxu0 0.0
  %3188 = vmatprep.subr.mxu0 0.0
  %3189 = vmatpush1.xpose.msra.mxu0 0.0
  %3190 = vmatprep.subr.mxu0 0.0
  %3191 = vmatpush1.xpose.msra.mxu0 0.0
  %3192 = vmatprep.subr.mxu0 0.0
  %3193 = vmatpush1.xpose.msra.mxu0 0.0
  %3194 = vmatprep.subr.mxu0 0.0
  %3195 = vmatpush1.xpose.msra.mxu0 0.0
  %3196 = vmatprep.subr.mxu0 0.0
  %3197 = vmatpush1.xpose.msra.mxu0 0.0
  %3198 = vmatprep.subr.mxu0 0.0
  %3199 = vmatpush1.xpose.msra.mxu0 0.0
  %3200 = vmatprep.mubr.f32.mxu0 0.0
  %3201 = vmatmul.mubr.f32.gmra.mrb[0].mxu0 %v3132
  %v3202 = vpop.f32.mrb[0].mxu0
  %v3203 = vadd.f32 0.0, %v3202
  %v3204 = vpop.f32.mrb[0].mxu0
  %3205 = vdwg.mxu0
  %v3206 = vmul.f32 %v3203, 0.35355338
  %v3207 = vsel %vm126, %v3206, -inf
  %3208 = vmax.xlane.f32.xlu0 %v3207
  %v3209 = vpop.xlane.xlu0 %3208
  %v3210 = vsub.f32 %v3206, %v3209
  %v3211 = vmul.f32 %v3210, 1.442695
  %v3212 = vpow.pop %v3211
  %v3213 = vsel %vm126, %v3212, 0.0
  %3214 = vadd.xlane.f32.xlu0 %v3213
  %v3215 = vpop.xlane.xlu0 %3214
  %v3216 = vrcp.pop %v3215
  %v3217 = vmul.f32 %v3212, %v3216
  %3218 = vrot.lane.b32.xlu0 %v1950, 40
  %v3219 = vpop.permute.xlu0 %3218
  %v3222 = vsel %vm126, %v3217, 0
  %3224 = vmatprep.subr.mxu0 0.0
  %3225 = vmatpush1.msra.mxu0 %v3219
  %3226 = vmatprep.subr.mxu0 0.0
  %3227 = vmatpush1.msra.mxu0 0.0
  %3228 = vmatprep.subr.mxu0 0.0
  %3229 = vmatpush1.msra.mxu0 0.0
  %3230 = vmatprep.subr.mxu0 0.0
  %3231 = vmatpush1.msra.mxu0 0.0
  %3232 = vmatprep.subr.mxu0 0.0
  %3233 = vmatpush1.msra.mxu0 0.0
  %3234 = vmatprep.subr.mxu0 0.0
  %3235 = vmatpush1.msra.mxu0 0.0
  %3236 = vmatprep.subr.mxu0 0.0
  %3237 = vmatpush1.msra.mxu0 0.0
  %3238 = vmatprep.subr.mxu0 0.0
  %3239 = vmatpush1.msra.mxu0 0.0
  %3240 = vmatprep.subr.mxu0 0.0
  %3241 = vmatpush1.msra.mxu0 0.0
  %3242 = vmatprep.subr.mxu0 0.0
  %3243 = vmatpush1.msra.mxu0 0.0
  %3244 = vmatprep.subr.mxu0 0.0
  %3245 = vmatpush1.msra.mxu0 0.0
  %3246 = vmatprep.subr.mxu0 0.0
  %3247 = vmatpush1.msra.mxu0 0.0
  %3248 = vmatprep.subr.mxu0 0.0
  %3249 = vmatpush1.msra.mxu0 0.0
  %3250 = vmatprep.subr.mxu0 0.0
  %3251 = vmatpush1.msra.mxu0 0.0
  %3252 = vmatprep.subr.mxu0 0.0
  %3253 = vmatpush1.msra.mxu0 0.0
  %3254 = vmatprep.subr.mxu0 0.0
  %3255 = vmatpush1.msra.mxu0 0.0
  %3256 = vmatprep.subr.mxu0 0.0
  %3257 = vmatpush1.msra.mxu0 0.0
  %3258 = vmatprep.subr.mxu0 0.0
  %3259 = vmatpush1.msra.mxu0 0.0
  %3260 = vmatprep.subr.mxu0 0.0
  %3261 = vmatpush1.msra.mxu0 0.0
  %3262 = vmatprep.subr.mxu0 0.0
  %3263 = vmatpush1.msra.mxu0 0.0
  %3264 = vmatprep.subr.mxu0 0.0
  %3265 = vmatpush1.msra.mxu0 0.0
  %3266 = vmatprep.subr.mxu0 0.0
  %3267 = vmatpush1.msra.mxu0 0.0
  %3268 = vmatprep.subr.mxu0 0.0
  %3269 = vmatpush1.msra.mxu0 0.0
  %3270 = vmatprep.subr.mxu0 0.0
  %3271 = vmatpush1.msra.mxu0 0.0
  %3272 = vmatprep.subr.mxu0 0.0
  %3273 = vmatpush1.msra.mxu0 0.0
  %3274 = vmatprep.subr.mxu0 0.0
  %3275 = vmatpush1.msra.mxu0 0.0
  %3276 = vmatprep.subr.mxu0 0.0
  %3277 = vmatpush1.msra.mxu0 0.0
  %3278 = vmatprep.subr.mxu0 0.0
  %3279 = vmatpush1.msra.mxu0 0.0
  %3280 = vmatprep.subr.mxu0 0.0
  %3281 = vmatpush1.msra.mxu0 0.0
  %3282 = vmatprep.subr.mxu0 0.0
  %3283 = vmatpush1.msra.mxu0 0.0
  %3284 = vmatprep.subr.mxu0 0.0
  %3285 = vmatpush1.msra.mxu0 0.0
  %3286 = vmatprep.subr.mxu0 0.0
  %3287 = vmatpush1.msra.mxu0 0.0
  %3288 = vmatprep.mubr.f32.mxu0 0.0
  %3289 = vmatmul.mubr.f32.gmra.mrb[0].mxu0 %v3222
  %v3290 = vpop.f32.mrb[0].mxu0
  %v3291 = vadd.f32 0.0, %v3290
  %v3292 = vpop.f32.mrb[0].mxu0
  %3293 = vdwg.mxu0
  %3295 = vrot.lane.b32.xlu0 %v2959, 8
  %v3296 = vpop.permute.xlu0 %3295
  %3299 = vrot.lane.b32.xlu0 %v3125, 16
  %v3300 = vpop.permute.xlu0 %3299
  %3303 = vrot.lane.b32.xlu0 %v3291, 24
  %v3304 = vpop.permute.xlu0 %3303
  %v3306 = vsel %vm126, %v2793, %v3296
  %v3307 = vsel %vm800, %v3306, %v3300
  %v3308 = vsel %vm802, %v3307, %v3304
  %v3309 = vlaneseq
  %v3310 = vshrl.u32 %v3309, 7
  %v3311 = vsub.s32 0, %v3310
  %v3312 = vrot.slane %v1861, %v3311
  %3317 = vrot.lane.b32.xlu0 %v1844, 32
  %v3318 = vpop.permute.xlu0 %3317
  %3319 = vrot.lane.b32.xlu0 %v1845, 32
  %v3320 = vpop.permute.xlu0 %3319
  %3321 = vrot.lane.b32.xlu0 %v1846, 32
  %v3322 = vpop.permute.xlu0 %3321
  %3323 = vrot.lane.b32.xlu0 %v1847, 32
  %v3324 = vpop.permute.xlu0 %3323
  %v3330 = vsel %vm41, %v2630, 0
  %v3333 = vsel %vm41, %v3308, 0
  %3335 = vmatprep.subr.mxu0 0.0
  %3336 = vmatpush1.msra.mxu0 %v3318
  %3337 = vmatprep.subr.mxu0 0.0
  %3338 = vmatpush1.msra.mxu0 %v3320
  %3339 = vmatprep.subr.mxu0 0.0
  %3340 = vmatpush1.msra.mxu0 %v3322
  %3341 = vmatprep.subr.mxu0 0.0
  %3342 = vmatpush1.msra.mxu0 %v3324
  %3343 = vmatprep.subr.mxu0 0.0
  %3344 = vmatpush1.msra.mxu0 0.0
  %3345 = vmatprep.subr.mxu0 0.0
  %3346 = vmatpush1.msra.mxu0 0.0
  %3347 = vmatprep.subr.mxu0 0.0
  %3348 = vmatpush1.msra.mxu0 0.0
  %3349 = vmatprep.subr.mxu0 0.0
  %3350 = vmatpush1.msra.mxu0 0.0
  %3351 = vmatprep.subr.mxu0 0.0
  %3352 = vmatpush1.msra.mxu0 0.0
  %3353 = vmatprep.subr.mxu0 0.0
  %3354 = vmatpush1.msra.mxu0 0.0
  %3355 = vmatprep.subr.mxu0 0.0
  %3356 = vmatpush1.msra.mxu0 0.0
  %3357 = vmatprep.subr.mxu0 0.0
  %3358 = vmatpush1.msra.mxu0 0.0
  %3359 = vmatprep.subr.mxu0 0.0
  %3360 = vmatpush1.msra.mxu0 0.0
  %3361 = vmatprep.subr.mxu0 0.0
  %3362 = vmatpush1.msra.mxu0 0.0
  %3363 = vmatprep.subr.mxu0 0.0
  %3364 = vmatpush1.msra.mxu0 0.0
  %3365 = vmatprep.subr.mxu0 0.0
  %3366 = vmatpush1.msra.mxu0 0.0
  %3367 = vmatprep.subr.mxu0 0.0
  %3368 = vmatpush1.msra.mxu0 0.0
  %3369 = vmatprep.subr.mxu0 0.0
  %3370 = vmatpush1.msra.mxu0 0.0
  %3371 = vmatprep.subr.mxu0 0.0
  %3372 = vmatpush1.msra.mxu0 0.0
  %3373 = vmatprep.subr.mxu0 0.0
  %3374 = vmatpush1.msra.mxu0 0.0
  %3375 = vmatprep.subr.mxu0 0.0
  %3376 = vmatpush1.msra.mxu0 0.0
  %3377 = vmatprep.subr.mxu0 0.0
  %3378 = vmatpush1.msra.mxu0 0.0
  %3379 = vmatprep.subr.mxu0 0.0
  %3380 = vmatpush1.msra.mxu0 0.0
  %3381 = vmatprep.subr.mxu0 0.0
  %3382 = vmatpush1.msra.mxu0 0.0
  %3383 = vmatprep.subr.mxu0 0.0
  %3384 = vmatpush1.msra.mxu0 0.0
  %3385 = vmatprep.subr.mxu0 0.0
  %3386 = vmatpush1.msra.mxu0 0.0
  %3387 = vmatprep.subr.mxu0 0.0
  %3388 = vmatpush1.msra.mxu0 0.0
  %3389 = vmatprep.subr.mxu0 0.0
  %3390 = vmatpush1.msra.mxu0 0.0
  %3391 = vmatprep.subr.mxu0 0.0
  %3392 = vmatpush1.msra.mxu0 0.0
  %3393 = vmatprep.subr.mxu0 0.0
  %3394 = vmatpush1.msra.mxu0 0.0
  %3395 = vmatprep.subr.mxu0 0.0
  %3396 = vmatpush1.msra.mxu0 0.0
  %3397 = vmatprep.subr.mxu0 0.0
  %3398 = vmatpush1.msra.mxu0 0.0
  %3399 = vmatprep.mubr.f32.mxu0 0.0
  %3400 = vmatmul.mubr.f32.gmra.mrb[0].mxu0 %v3330
  %v3401 = vpop.f32.mrb[0].mxu0
  %v3402 = vadd.f32 %v3312, %v3401
  %v3403 = vpop.f32.mrb[0].mxu0
  %3404 = vmatprep.mubr.f32.mxu0 0.0
  %3405 = vmatmul.mubr.f32.gmra.mrb[0].mxu0 %v3333
  %v3406 = vpop.f32.mrb[0].mxu0
  %v3407 = vadd.f32 %v3312, %v3406
  %v3408 = vpop.f32.mrb[0].mxu0
  %3409 = vdwg.mxu0
  %v3410 = vadd.f32 %v1842, %v3402
  %v3411 = vadd.f32 %v1843, %v3407
  %v3412 = vsel %vm41, %v3410, 0.0
  %3413 = vadd.xlane.f32.xlu0 %v3412
  %v3414 = vpop.xlane.xlu0 %3413
  %v3415 = vsel %vm41, %v3411, 0.0
  %3416 = vadd.xlane.f32.xlu0 %v3415
  %v3417 = vpop.xlane.xlu0 %3416
  %v3418 = vmul.f32 %v3410, %v3410
  %v3419 = vmul.f32 %v3411, %v3411
  %v3420 = vsel %vm41, %v3418, 0.0
  %3421 = vadd.xlane.f32.xlu0 %v3420
  %v3422 = vpop.xlane.xlu0 %3421
  %v3423 = vsel %vm41, %v3419, 0.0
  %3424 = vadd.xlane.f32.xlu0 %v3423
  %v3425 = vpop.xlane.xlu0 %3424
  %v3426 = vmul.f32 %v3414, 0.03125
  %v3427 = vmul.f32 %v3417, 0.03125
  %v3428 = vmul.f32 %v3422, 0.03125
  %v3429 = vmul.f32 %v3425, 0.03125
  %v3430 = vmul.f32 %v3426, %v3426
  %v3431 = vmul.f32 %v3427, %v3427
  %v3432 = vsub.f32 %v3428, %v3430
  %v3433 = vsub.f32 %v3429, %v3431
  %v3434 = vsub.f32 %v3410, %v3426
  %v3435 = vsub.f32 %v3411, %v3427
  %v3436 = vadd.f32 %v3432, 1e-05
  %v3437 = vadd.f32 %v3433, 1e-05
  %v3438 = vrsqrt.pop %v3436
  %v3439 = vrsqrt.pop %v3437
  %v3440 = vmul.f32 %v3434, %v3438
  %v3441 = vmul.f32 %v3435, %v3439
  %v3442 = vlaneseq
  %v3443 = vshrl.u32 %v3442, 7
  %v3444 = vsub.s32 0, %v3443
  %v3445 = vrot.slane %v1862, %v3444
  %v3446 = vmul.f32 %v3440, %v3445
  %v3447 = vmul.f32 %v3441, %v3445
  %v3448 = vlaneseq
  %v3449 = vshrl.u32 %v3448, 7
  %v3450 = vsub.s32 0, %v3449
  %v3451 = vrot.slane %v1863, %v3450
  %v3452 = vadd.f32 %v3446, %v3451
  %v3453 = vadd.f32 %v3447, %v3451
  %v3454 = vlaneseq
  %v3455 = vshrl.u32 %v3454, 7
  %v3456 = vsub.s32 0, %v3455
  %v3457 = vrot.slane %v1864, %v3456
  %v3459 = vsel %vm41, %v3452, 0
  %v3462 = vsel %vm41, %v3453, 0
  %3464 = vmatprep.subr.mxu0 0.0
  %3465 = vmatpush1.msra.mxu0 %v1848
  %3466 = vmatprep.subr.mxu0 0.0
  %3467 = vmatpush1.msra.mxu0 %v1849
  %3468 = vmatprep.subr.mxu0 0.0
  %3469 = vmatpush1.msra.mxu0 %v1850
  %3470 = vmatprep.subr.mxu0 0.0
  %3471 = vmatpush1.msra.mxu0 %v1851
  %3472 = vmatprep.subr.mxu0 0.0
  %3473 = vmatpush1.msra.mxu0 0.0
  %3474 = vmatprep.subr.mxu0 0.0
  %3475 = vmatpush1.msra.mxu0 0.0
  %3476 = vmatprep.subr.mxu0 0.0
  %3477 = vmatpush1.msra.mxu0 0.0
  %3478 = vmatprep.subr.mxu0 0.0
  %3479 = vmatpush1.msra.mxu0 0.0
  %3480 = vmatprep.subr.mxu0 0.0
  %3481 = vmatpush1.msra.mxu0 0.0
  %3482 = vmatprep.subr.mxu0 0.0
  %3483 = vmatpush1.msra.mxu0 0.0
  %3484 = vmatprep.subr.mxu0 0.0
  %3485 = vmatpush1.msra.mxu0 0.0
  %3486 = vmatprep.subr.mxu0 0.0
  %3487 = vmatpush1.msra.mxu0 0.0
  %3488 = vmatprep.subr.mxu0 0.0
  %3489 = vmatpush1.msra.mxu0 0.0
  %3490 = vmatprep.subr.mxu0 0.0
  %3491 = vmatpush1.msra.mxu0 0.0
  %3492 = vmatprep.subr.mxu0 0.0
  %3493 = vmatpush1.msra.mxu0 0.0
  %3494 = vmatprep.subr.mxu0 0.0
  %3495 = vmatpush1.msra.mxu0 0.0
  %3496 = vmatprep.subr.mxu0 0.0
  %3497 = vmatpush1.msra.mxu0 0.0
  %3498 = vmatprep.subr.mxu0 0.0
  %3499 = vmatpush1.msra.mxu0 0.0
  %3500 = vmatprep.subr.mxu0 0.0
  %3501 = vmatpush1.msra.mxu0 0.0
  %3502 = vmatprep.subr.mxu0 0.0
  %3503 = vmatpush1.msra.mxu0 0.0
  %3504 = vmatprep.subr.mxu0 0.0
  %3505 = vmatpush1.msra.mxu0 0.0
  %3506 = vmatprep.subr.mxu0 0.0
  %3507 = vmatpush1.msra.mxu0 0.0
  %3508 = vmatprep.subr.mxu0 0.0
  %3509 = vmatpush1.msra.mxu0 0.0
  %3510 = vmatprep.subr.mxu0 0.0
  %3511 = vmatpush1.msra.mxu0 0.0
  %3512 = vmatprep.subr.mxu0 0.0
  %3513 = vmatpush1.msra.mxu0 0.0
  %3514 = vmatprep.subr.mxu0 0.0
  %3515 = vmatpush1.msra.mxu0 0.0
  %3516 = vmatprep.subr.mxu0 0.0
  %3517 = vmatpush1.msra.mxu0 0.0
  %3518 = vmatprep.subr.mxu0 0.0
  %3519 = vmatpush1.msra.mxu0 0.0
  %3520 = vmatprep.subr.mxu0 0.0
  %3521 = vmatpush1.msra.mxu0 0.0
  %3522 = vmatprep.subr.mxu0 0.0
  %3523 = vmatpush1.msra.mxu0 0.0
  %3524 = vmatprep.subr.mxu0 0.0
  %3525 = vmatpush1.msra.mxu0 0.0
  %3526 = vmatprep.subr.mxu0 0.0
  %3527 = vmatpush1.msra.mxu0 0.0
  %3528 = vmatprep.mubr.f32.mxu0 0.0
  %3529 = vmatmul.mubr.f32.gmra.mrb[0].mxu0 %v3459
  %v3530 = vpop.f32.mrb[0].mxu0
  %v3531 = vadd.f32 %v3457, %v3530
  %v3532 = vpop.f32.mrb[0].mxu0
  %3533 = vmatprep.mubr.f32.mxu0 0.0
  %3534 = vmatmul.mubr.f32.gmra.mrb[0].mxu0 %v3462
  %v3535 = vpop.f32.mrb[0].mxu0
  %v3536 = vadd.f32 %v3457, %v3535
  %v3537 = vpop.f32.mrb[0].mxu0
  %3538 = vdwg.mxu0
  %v3539 = vmax.f32 %v3531, 0.0
  %v3540 = vmax.f32 %v3536, 0.0
  %v3541 = vlaneseq
  %v3542 = vshrl.u32 %v3541, 7
  %v3543 = vsub.s32 0, %v3542
  %v3544 = vrot.slane %v1865, %v3543
  %v3546 = vsel %vm1718, %v3539, 0
  %v3549 = vsel %vm1718, %v3540, 0
  %3551 = vmatprep.subr.mxu0 0.0
  %3552 = vmatpush1.msra.mxu0 %v1852
  %3553 = vmatprep.subr.mxu0 0.0
  %3554 = vmatpush1.msra.mxu0 %v1853
  %3555 = vmatprep.subr.mxu0 0.0
  %3556 = vmatpush1.msra.mxu0 %v1854
  %3557 = vmatprep.subr.mxu0 0.0
  %3558 = vmatpush1.msra.mxu0 %v1855
  %3559 = vmatprep.subr.mxu0 0.0
  %3560 = vmatpush1.msra.mxu0 %v1856
  %3561 = vmatprep.subr.mxu0 0.0
  %3562 = vmatpush1.msra.mxu0 %v1857
  %3563 = vmatprep.subr.mxu0 0.0
  %3564 = vmatpush1.msra.mxu0 %v1858
  %3565 = vmatprep.subr.mxu0 0.0
  %3566 = vmatpush1.msra.mxu0 %v1859
  %3567 = vmatprep.subr.mxu0 0.0
  %3568 = vmatpush1.msra.mxu0 0.0
  %3569 = vmatprep.subr.mxu0 0.0
  %3570 = vmatpush1.msra.mxu0 0.0
  %3571 = vmatprep.subr.mxu0 0.0
  %3572 = vmatpush1.msra.mxu0 0.0
  %3573 = vmatprep.subr.mxu0 0.0
  %3574 = vmatpush1.msra.mxu0 0.0
  %3575 = vmatprep.subr.mxu0 0.0
  %3576 = vmatpush1.msra.mxu0 0.0
  %3577 = vmatprep.subr.mxu0 0.0
  %3578 = vmatpush1.msra.mxu0 0.0
  %3579 = vmatprep.subr.mxu0 0.0
  %3580 = vmatpush1.msra.mxu0 0.0
  %3581 = vmatprep.subr.mxu0 0.0
  %3582 = vmatpush1.msra.mxu0 0.0
  %3583 = vmatprep.subr.mxu0 0.0
  %3584 = vmatpush1.msra.mxu0 0.0
  %3585 = vmatprep.subr.mxu0 0.0
  %3586 = vmatpush1.msra.mxu0 0.0
  %3587 = vmatprep.subr.mxu0 0.0
  %3588 = vmatpush1.msra.mxu0 0.0
  %3589 = vmatprep.subr.mxu0 0.0
  %3590 = vmatpush1.msra.mxu0 0.0
  %3591 = vmatprep.subr.mxu0 0.0
  %3592 = vmatpush1.msra.mxu0 0.0
  %3593 = vmatprep.subr.mxu0 0.0
  %3594 = vmatpush1.msra.mxu0 0.0
  %3595 = vmatprep.subr.mxu0 0.0
  %3596 = vmatpush1.msra.mxu0 0.0
  %3597 = vmatprep.subr.mxu0 0.0
  %3598 = vmatpush1.msra.mxu0 0.0
  %3599 = vmatprep.subr.mxu0 0.0
  %3600 = vmatpush1.msra.mxu0 0.0
  %3601 = vmatprep.subr.mxu0 0.0
  %3602 = vmatpush1.msra.mxu0 0.0
  %3603 = vmatprep.subr.mxu0 0.0
  %3604 = vmatpush1.msra.mxu0 0.0
  %3605 = vmatprep.subr.mxu0 0.0
  %3606 = vmatpush1.msra.mxu0 0.0
  %3607 = vmatprep.subr.mxu0 0.0
  %3608 = vmatpush1.msra.mxu0 0.0
  %3609 = vmatprep.subr.mxu0 0.0
  %3610 = vmatpush1.msra.mxu0 0.0
  %3611 = vmatprep.subr.mxu0 0.0
  %3612 = vmatpush1.msra.mxu0 0.0
  %3613 = vmatprep.subr.mxu0 0.0
  %3614 = vmatpush1.msra.mxu0 0.0
  %3615 = vmatprep.mubr.f32.mxu0 0.0
  %3616 = vmatmul.mubr.f32.gmra.mrb[0].mxu0 %v3546
  %v3617 = vpop.f32.mrb[0].mxu0
  %v3618 = vadd.f32 %v3544, %v3617
  %v3619 = vpop.f32.mrb[0].mxu0
  %3620 = vmatprep.mubr.f32.mxu0 0.0
  %3621 = vmatmul.mubr.f32.gmra.mrb[0].mxu0 %v3549
  %v3622 = vpop.f32.mrb[0].mxu0
  %v3623 = vadd.f32 %v3544, %v3622
  %v3624 = vpop.f32.mrb[0].mxu0
  %3625 = vdwg.mxu0
  %v3626 = vadd.f32 %v3452, %v3618
  %v3627 = vadd.f32 %v3453, %v3623
  %v3628 = vsel %vm41, %v3626, 0.0
  %3629 = vadd.xlane.f32.xlu0 %v3628
  %v3630 = vpop.xlane.xlu0 %3629
  %v3631 = vsel %vm41, %v3627, 0.0
  %3632 = vadd.xlane.f32.xlu0 %v3631
  %v3633 = vpop.xlane.xlu0 %3632
  %v3634 = vmul.f32 %v3626, %v3626
  %v3635 = vmul.f32 %v3627, %v3627
  %v3636 = vsel %vm41, %v3634, 0.0
  %3637 = vadd.xlane.f32.xlu0 %v3636
  %v3638 = vpop.xlane.xlu0 %3637
  %v3639 = vsel %vm41, %v3635, 0.0
  %3640 = vadd.xlane.f32.xlu0 %v3639
  %v3641 = vpop.xlane.xlu0 %3640
  %v3642 = vmul.f32 %v3630, 0.03125
  %v3643 = vmul.f32 %v3633, 0.03125
  %v3644 = vmul.f32 %v3638, 0.03125
  %v3645 = vmul.f32 %v3641, 0.03125
  %v3646 = vmul.f32 %v3642, %v3642
  %v3647 = vmul.f32 %v3643, %v3643
  %v3648 = vsub.f32 %v3644, %v3646
  %v3649 = vsub.f32 %v3645, %v3647
  %v3650 = vsub.f32 %v3626, %v3642
  %v3651 = vsub.f32 %v3627, %v3643
  %v3652 = vadd.f32 %v3648, 1e-05
  %v3653 = vadd.f32 %v3649, 1e-05
  %v3654 = vrsqrt.pop %v3652
  %v3655 = vrsqrt.pop %v3653
  %v3656 = vmul.f32 %v3650, %v3654
  %v3657 = vmul.f32 %v3651, %v3655
  %v3658 = vlaneseq
  %v3659 = vshrl.u32 %v3658, 7
  %v3660 = vsub.s32 0, %v3659
  %v3661 = vrot.slane %v1866, %v3660
  %v3662 = vmul.f32 %v3656, %v3661
  %v3663 = vmul.f32 %v3657, %v3661
  %v3664 = vlaneseq
  %v3665 = vshrl.u32 %v3664, 7
  %v3666 = vsub.s32 0, %v3665
  %v3667 = vrot.slane %v1867, %v3666
  %v3668 = vadd.f32 %v3662, %v3667
  %v3669 = vadd.f32 %v3663, %v3667
  %v3670 = vld [vmem:[%s1 + $0x110] sm:$0xff]
  %v3671 = vld [vmem:[%s1 + $0x118] sm:$0xff]
  %v3672 = vld [vmem:[%s1 + $0x120] sm:$0xff]
  %v3673 = vld [vmem:[%s1 + $0x128] sm:$0xff]
  %v3674 = vld [vmem:[%s1 + $0x130] sm:$0xff]
  %v3675 = vld [vmem:[%s1 + $0x138] sm:$0xff]
  %v3676 = vld [vmem:[%s1 + $0x140] sm:$0xff]
  %v3677 = vld [vmem:[%s1 + $0x148] sm:$0xff]
  %v3678 = vld [vmem:[%s1 + $0x150] sm:$0x1]
  %v3679 = vld [vmem:[%s1 + $0x151] sm:$0x1]
  %v3680 = vld [vmem:[%s1 + $0x152] sm:$0x1]
  %v3681 = vld [vmem:[%s1 + $0x153] sm:$0x1]
  %v3682 = vld [vmem:[%s1 + $0x154] sm:$0x1]
  %v3683 = vld [vmem:[%s1 + $0x155] sm:$0x1]
  %v3684 = vsel %vm41, %v3668, 0.0
  %3685 = vadd.xlane.f32.xlu0 %v3684
  %v3686 = vpop.xlane.xlu0 %3685
  %v3687 = vsel %vm41, %v3669, 0.0
  %3688 = vadd.xlane.f32.xlu0 %v3687
  %v3689 = vpop.xlane.xlu0 %3688
  %v3690 = vmul.f32 %v3668, %v3668
  %v3691 = vmul.f32 %v3669, %v3669
  %v3692 = vsel %vm41, %v3690, 0.0
  %3693 = vadd.xlane.f32.xlu0 %v3692
  %v3694 = vpop.xlane.xlu0 %3693
  %v3695 = vsel %vm41, %v3691, 0.0
  %3696 = vadd.xlane.f32.xlu0 %v3695
  %v3697 = vpop.xlane.xlu0 %3696
  %v3698 = vmul.f32 %v3686, 0.03125
  %v3699 = vmul.f32 %v3689, 0.03125
  %v3700 = vmul.f32 %v3694, 0.03125
  %v3701 = vmul.f32 %v3697, 0.03125
  %v3702 = vmul.f32 %v3698, %v3698
  %v3703 = vmul.f32 %v3699, %v3699
  %v3704 = vsub.f32 %v3700, %v3702
  %v3705 = vsub.f32 %v3701, %v3703
  %v3706 = vsub.f32 %v3668, %v3698
  %v3707 = vsub.f32 %v3669, %v3699
  %v3708 = vadd.f32 %v3704, 1e-05
  %v3709 = vadd.f32 %v3705, 1e-05
  %v3710 = vrsqrt.pop %v3708
  %v3711 = vrsqrt.pop %v3709
  %v3712 = vmul.f32 %v3706, %v3710
  %v3713 = vmul.f32 %v3707, %v3711
  %v3714 = vlaneseq
  %v3715 = vshrl.u32 %v3714, 7
  %v3716 = vsub.s32 0, %v3715
  %v3717 = vrot.slane %v3678, %v3716
  %v3718 = vmul.f32 %v3712, %v3717
  %v3719 = vmul.f32 %v3713, %v3717
  %v3720 = vlaneseq
  %v3721 = vshrl.u32 %v3720, 7
  %v3722 = vsub.s32 0, %v3721
  %v3723 = vrot.slane %v3679, %v3722
  %v3724 = vadd.f32 %v3718, %v3723
  %v3725 = vadd.f32 %v3719, %v3723
  %v3726 = vsel %vm41, %v3724, 0.0
  %v3727 = vrot.slane %v3726, 4
  %v3728 = vadd.f32 %v3726, %v3727
  %v3729 = vrot.slane %v3728, 2
  %v3730 = vadd.f32 %v3728, %v3729
  %v3731 = vrot.slane %v3730, 1
  %v3732 = vadd.f32 %v3730, %v3731
  %v3733 = vrcp.pop 8.0
  %v3734 = vmul.f32 %v3732, %v3733
  %v3735 = vsel %vm41, %v3725, 0.0
  %v3736 = vrot.slane %v3735, 4
  %v3737 = vadd.f32 %v3735, %v3736
  %v3738 = vrot.slane %v3737, 2
  %v3739 = vadd.f32 %v3737, %v3738
  %v3740 = vrot.slane %v3739, 1
  %v3741 = vadd.f32 %v3739, %v3740
  %v3742 = vmul.f32 %v3741, %v3733
  %vm3743 = vcmask 1040384
  %v3744 = vsel %vm3743, %v3734, %v3742
  %v3745 = vlaneseq
  %v3746 = vshrl.u32 %v3745, 7
  %v3747 = vsub.s32 0, %v3746
  %v3748 = vrot.slane %v3680, %v3747
  %v3750 = vsel %vm41, %v3744, 0
  %3752 = vmatprep.subr.mxu0 0.0
  %3753 = vmatpush1.msra.mxu0 %v3670
  %3754 = vmatprep.subr.mxu0 0.0
  %3755 = vmatpush1.msra.mxu0 %v3671
  %3756 = vmatprep.subr.mxu0 0.0
  %3757 = vmatpush1.msra.mxu0 %v3672
  %3758 = vmatprep.subr.mxu0 0.0
  %3759 = vmatpush1.msra.mxu0 %v3673
  %3760 = vmatprep.subr.mxu0 0.0
  %3761 = vmatpush1.msra.mxu0 0.0
  %3762 = vmatprep.subr.mxu0 0.0
  %3763 = vmatpush1.msra.mxu0 0.0
  %3764 = vmatprep.subr.mxu0 0.0
  %3765 = vmatpush1.msra.mxu0 0.0
  %3766 = vmatprep.subr.mxu0 0.0
  %3767 = vmatpush1.msra.mxu0 0.0
  %3768 = vmatprep.subr.mxu0 0.0
  %3769 = vmatpush1.msra.mxu0 0.0
  %3770 = vmatprep.subr.mxu0 0.0
  %3771 = vmatpush1.msra.mxu0 0.0
  %3772 = vmatprep.subr.mxu0 0.0
  %3773 = vmatpush1.msra.mxu0 0.0
  %3774 = vmatprep.subr.mxu0 0.0
  %3775 = vmatpush1.msra.mxu0 0.0
  %3776 = vmatprep.subr.mxu0 0.0
  %3777 = vmatpush1.msra.mxu0 0.0
  %3778 = vmatprep.subr.mxu0 0.0
  %3779 = vmatpush1.msra.mxu0 0.0
  %3780 = vmatprep.subr.mxu0 0.0
  %3781 = vmatpush1.msra.mxu0 0.0
  %3782 = vmatprep.subr.mxu0 0.0
  %3783 = vmatpush1.msra.mxu0 0.0
  %3784 = vmatprep.subr.mxu0 0.0
  %3785 = vmatpush1.msra.mxu0 0.0
  %3786 = vmatprep.subr.mxu0 0.0
  %3787 = vmatpush1.msra.mxu0 0.0
  %3788 = vmatprep.subr.mxu0 0.0
  %3789 = vmatpush1.msra.mxu0 0.0
  %3790 = vmatprep.subr.mxu0 0.0
  %3791 = vmatpush1.msra.mxu0 0.0
  %3792 = vmatprep.subr.mxu0 0.0
  %3793 = vmatpush1.msra.mxu0 0.0
  %3794 = vmatprep.subr.mxu0 0.0
  %3795 = vmatpush1.msra.mxu0 0.0
  %3796 = vmatprep.subr.mxu0 0.0
  %3797 = vmatpush1.msra.mxu0 0.0
  %3798 = vmatprep.subr.mxu0 0.0
  %3799 = vmatpush1.msra.mxu0 0.0
  %3800 = vmatprep.subr.mxu0 0.0
  %3801 = vmatpush1.msra.mxu0 0.0
  %3802 = vmatprep.subr.mxu0 0.0
  %3803 = vmatpush1.msra.mxu0 0.0
  %3804 = vmatprep.subr.mxu0 0.0
  %3805 = vmatpush1.msra.mxu0 0.0
  %3806 = vmatprep.subr.mxu0 0.0
  %3807 = vmatpush1.msra.mxu0 0.0
  %3808 = vmatprep.subr.mxu0 0.0
  %3809 = vmatpush1.msra.mxu0 0.0
  %3810 = vmatprep.subr.mxu0 0.0
  %3811 = vmatpush1.msra.mxu0 0.0
  %3812 = vmatprep.subr.mxu0 0.0
  %3813 = vmatpush1.msra.mxu0 0.0
  %3814 = vmatprep.subr.mxu0 0.0
  %3815 = vmatpush1.msra.mxu0 0.0
  %3816 = vmatprep.mubr.f32.mxu0 0.0
  %3817 = vmatmul.mubr.f32.gmra.mrb[0].mxu0 %v3750
  %v3818 = vpop.f32.mrb[0].mxu0
  %v3819 = vadd.f32 %v3748, %v3818
  %v3820 = vpop.f32.mrb[0].mxu0
  %3821 = vdwg.mxu0
  %v3822 = vlaneseq
  %v3823 = vshrl.u32 %v3822, 7
  %v3824 = vsub.s32 0, %v3823
  %v3825 = vrot.slane %v3681, %v3824
  %v3826 = vmul.f32 %v3819, %v3825
  %v3827 = vlaneseq
  %v3828 = vshrl.u32 %v3827, 7
  %v3829 = vsub.s32 0, %v3828
  %v3830 = vrot.slane %v3682, %v3829
  %v3831 = vadd.f32 %v3826, %v3830
  %v3832 = vmax.f32 %v3831, 0.0
  %v3833 = vlaneseq
  %v3834 = vshrl.u32 %v3833, 7
  %v3835 = vsub.s32 0, %v3834
  %v3836 = vrot.slane %v3683, %v3835
  %v3838 = vsel %vm41, %v3832, 0
  %3840 = vmatprep.subr.mxu0 0.0
  %3841 = vmatpush1.msra.mxu0 %v3674
  %3842 = vmatprep.subr.mxu0 0.0
  %3843 = vmatpush1.msra.mxu0 %v3675
  %3844 = vmatprep.subr.mxu0 0.0
  %3845 = vmatpush1.msra.mxu0 %v3676
  %3846 = vmatprep.subr.mxu0 0.0
  %3847 = vmatpush1.msra.mxu0 %v3677
  %3848 = vmatprep.subr.mxu0 0.0
  %3849 = vmatpush1.msra.mxu0 0.0
  %3850 = vmatprep.subr.mxu0 0.0
  %3851 = vmatpush1.msra.mxu0 0.0
  %3852 = vmatprep.subr.mxu0 0.0
  %3853 = vmatpush1.msra.mxu0 0.0
  %3854 = vmatprep.subr.mxu0 0.0
  %3855 = vmatpush1.msra.mxu0 0.0
  %3856 = vmatprep.subr.mxu0 0.0
  %3857 = vmatpush1.msra.mxu0 0.0
  %3858 = vmatprep.subr.mxu0 0.0
  %3859 = vmatpush1.msra.mxu0 0.0
  %3860 = vmatprep.subr.mxu0 0.0
  %3861 = vmatpush1.msra.mxu0 0.0
  %3862 = vmatprep.subr.mxu0 0.0
  %3863 = vmatpush1.msra.mxu0 0.0
  %3864 = vmatprep.subr.mxu0 0.0
  %3865 = vmatpush1.msra.mxu0 0.0
  %3866 = vmatprep.subr.mxu0 0.0
  %3867 = vmatpush1.msra.mxu0 0.0
  %3868 = vmatprep.subr.mxu0 0.0
  %3869 = vmatpush1.msra.mxu0 0.0
  %3870 = vmatprep.subr.mxu0 0.0
  %3871 = vmatpush1.msra.mxu0 0.0
  %3872 = vmatprep.subr.mxu0 0.0
  %3873 = vmatpush1.msra.mxu0 0.0
  %3874 = vmatprep.subr.mxu0 0.0
  %3875 = vmatpush1.msra.mxu0 0.0
  %3876 = vmatprep.subr.mxu0 0.0
  %3877 = vmatpush1.msra.mxu0 0.0
  %3878 = vmatprep.subr.mxu0 0.0
  %3879 = vmatpush1.msra.mxu0 0.0
  %3880 = vmatprep.subr.mxu0 0.0
  %3881 = vmatpush1.msra.mxu0 0.0
  %3882 = vmatprep.subr.mxu0 0.0
  %3883 = vmatpush1.msra.mxu0 0.0
  %3884 = vmatprep.subr.mxu0 0.0
  %3885 = vmatpush1.msra.mxu0 0.0
  %3886 = vmatprep.subr.mxu0 0.0
  %3887 = vmatpush1.msra.mxu0 0.0
  %3888 = vmatprep.subr.mxu0 0.0
  %3889 = vmatpush1.msra.mxu0 0.0
  %3890 = vmatprep.subr.mxu0 0.0
  %3891 = vmatpush1.msra.mxu0 0.0
  %3892 = vmatprep.subr.mxu0 0.0
  %3893 = vmatpush1.msra.mxu0 0.0
  %3894 = vmatprep.subr.mxu0 0.0
  %3895 = vmatpush1.msra.mxu0 0.0
  %3896 = vmatprep.subr.mxu0 0.0
  %3897 = vmatpush1.msra.mxu0 0.0
  %3898 = vmatprep.subr.mxu0 0.0
  %3899 = vmatpush1.msra.mxu0 0.0
  %3900 = vmatprep.subr.mxu0 0.0
  %3901 = vmatpush1.msra.mxu0 0.0
  %3902 = vmatprep.subr.mxu0 0.0
  %3903 = vmatpush1.msra.mxu0 0.0
  %3904 = vmatprep.mubr.f32.mxu0 0.0
  %3905 = vmatmul.mubr.f32.gmra.mrb[0].mxu0 %v3838
  %v3906 = vpop.f32.mrb[0].mxu0
  %v3907 = vadd.f32 %v3836, %v3906
  %v3908 = vpop.f32.mrb[0].mxu0
  %3909 = vdwg.mxu0
  %vm3910 = vcmask 58368
  %v3911 = vsel %vm3910, %v3907, -inf
  %3912 = vmax.xlane.f32.xlu0 %v3911
  %v3913 = vpop.xlane.xlu0 %3912
  %v3914 = vsub.f32 %v3907, %v3913
  %v3915 = vmul.f32 %v3914, 1.442695
  %v3916 = vpow.pop %v3915
  %v3917 = vsel %vm3910, %v3916, 0.0
  %3918 = vadd.xlane.f32.xlu0 %v3917
  %v3919 = vpop.xlane.xlu0 %3918
  %v3920 = vlog2.pop %v3919
  %v3921 = vmul.f32 %v3920, 0.6931472
  %v3922 = vsub.f32 %v3914, %v3921
  %3923 = vst [vmem:[%s2] sm:$0xff] 0.0
  %3924 = vst.msk [vmem:[%s2] sm:$0x3] %vm3910, %v3922
  // Predicated region
  $region10: #{transformer_forward.1} parent=0 // pred_check
    _
  $region11: #{transformer_forward.1} parent=0 // pred_check_branch
    %3926 = sbr.rel (0) target = $region13
  $region12: #{transformer_forward.1} parent=0 // pred_region
    _
  $region13: #{transformer_forward.1} parent=0 // pred_fallthru
    _
  // Predicated region
  $region14: #{transformer_forward.1} parent=0 // pred_check
    _
  $region15: #{transformer_forward.1} parent=0 // pred_check_branch
    %3928 = sbr.rel (0) target = $region17
  $region16: #{transformer_forward.1} parent=0 // pred_region
    _
  $region17: #{transformer_forward.1} parent=0 // pred_fallthru
    _

</llo_original>
